<compile_context>
chip_gen: v7x
topology: tpu7x:2x2x1
jax: 0.10.0
libtpu: 0.0.40
codegen_flags: <defaults>
</compile_context>

<pallas_src>
import functools
import numpy as np

import jax
import jax.numpy as jnp
from jax.experimental import pallas as pl
from jax.experimental.pallas import tpu as pltpu

# ----------------------- model hyper-parameters ------------------------------
NUM_WEAPONS = 3
NUM_TARGETS = 4
N_NODES = NUM_WEAPONS * NUM_TARGETS + 1   # 13
HIDDEN_DIM = 32
IN_DIM = 9


# ----------------------------- Pallas kernel ---------------------------------
def _critic_kernel(x_ref, m_ref,
                   w1_ref, b1_ref, w2_ref, b2_ref,
                   w3_ref, b3_ref, w4_ref, b4_ref,
                   o_ref, *, tile_bp, n_nodes):
    # x:    (IN_DIM, n_nodes*tile_bp)   lanes ordered node-major: lane = n*tile + b
    # mask: (1,      n_nodes*tile_bp)   same lane ordering
    # out:  (1,      tile_bp)
    x = x_ref[...]
    h = jnp.dot(w1_ref[...], x, preferred_element_type=jnp.float32) + b1_ref[...]
    h = jnp.maximum(h, 0.0)
    h = jnp.dot(w2_ref[...], h, preferred_element_type=jnp.float32) + b2_ref[...]
    h = jnp.maximum(h, 0.0)
    h = jnp.dot(w3_ref[...], h, preferred_element_type=jnp.float32) + b3_ref[...]
    h = jnp.maximum(h, 0.0)
    v = jnp.dot(w4_ref[...], h, preferred_element_type=jnp.float32) + b4_ref[...]  # (1, 13*T)

    mv = v * m_ref[...]                                   # masked per-node values

    # Mean over the 13 nodes of each (b, p) group: 12 lane-aligned slice adds
    # (tile_bp is always a multiple of 128, so every slice is lane-aligned).
    acc = mv[:, 0:tile_bp]
    for n in range(1, n_nodes):
        acc = acc + mv[:, n * tile_bp:(n + 1) * tile_bp]
    o_ref[...] = acc * np.float32(1.0 / n_nodes)


# ------------------------------ host wrappers ---------------------------------
def _choose_tile(bp, cap=1024):
    """Pad bp to a multiple of 128 and pick a lane-aligned tile (<= cap).
    Prefers >=2 grid steps so the 'parallel' axis can shard across v7x's 2 TCs."""
    bp_pad = ((max(bp, 1) + 127) // 128) * 128
    tile = 128
    for cand in (1024, 512, 256):
        if cand <= cap and bp_pad % cand == 0 and bp_pad // cand >= 2:
            tile = cand
            break
    return tile, bp_pad


def critic_pallas(params, state, mask):
    """state: (bp, N_NODES, IN_DIM) f32; mask: (bp, N_NODES) f32 -> (bp,) f32."""
    bp = state.shape[0]
    tile, bp_pad = _choose_tile(bp)
    num_tiles = bp_pad // tile
    pad = bp_pad - bp
    if pad:
        state = jnp.pad(state, ((0, pad), (0, 0), (0, 0)))
        mask = jnp.pad(mask, ((0, pad), (0, 0)))

    # Lane-dense, node-major layout: lane index within tile i is n*tile + b.
    xs = state.reshape(num_tiles, tile, N_NODES, IN_DIM).transpose(3, 0, 2, 1)
    xs = xs.reshape(IN_DIM, num_tiles * N_NODES * tile)
    ms = mask.reshape(num_tiles, tile, N_NODES).transpose(0, 2, 1)
    ms = ms.reshape(1, num_tiles * N_NODES * tile)

    # Transposed weights (out_feat, in_feat) and column biases (out_feat, 1).
    w1t = params["w1"].T
    w2t = params["w2"].T
    w3t = params["w3"].T
    w4t = params["w4"].T
    b1c = params["b1"].reshape(-1, 1)
    b2c = params["b2"].reshape(-1, 1)
    b3c = params["b3"].reshape(-1, 1)
    b4c = params["b4"].reshape(-1, 1)

    kernel = functools.partial(_critic_kernel, tile_bp=tile, n_nodes=N_NODES)

    def _resident(arr):
        # full-array block, same block index every grid step -> DMA'd once
        return pl.BlockSpec(arr.shape, lambda i: (0, 0))

    out = pl.pallas_call(
        kernel,
        out_shape=jax.ShapeDtypeStruct((1, bp_pad), jnp.float32),
        grid=(num_tiles,),
        in_specs=[
            pl.BlockSpec((IN_DIM, N_NODES * tile), lambda i: (0, i)),
            pl.BlockSpec((1, N_NODES * tile), lambda i: (0, i)),
            _resident(w1t), _resident(b1c),
            _resident(w2t), _resident(b2c),
            _resident(w3t), _resident(b3c),
            _resident(w4t), _resident(b4c),
        ],
        out_specs=pl.BlockSpec((1, tile), lambda i: (0, i)),
        compiler_params=pltpu.CompilerParams(
            dimension_semantics=("parallel",),      # shards grid across v7x's 2 TCs
            vmem_limit_bytes=32 * 1024 * 1024),
    )(xs, ms, w1t, b1c, w2t, b2c, w3t, b3c, w4t, b4c)

    return out.reshape(bp_pad)[:bp]


def critic_forward(params, state, mask):
    """Mirrors Critic.forward: handles both the 2-D and the batched branch."""
    state = jnp.asarray(state, jnp.float32)
    mask = jnp.asarray(mask, jnp.float32)
    if state.ndim == 2:
        out = critic_pallas(params,
                            state.reshape(1, N_NODES, IN_DIM),
                            mask.reshape(1, N_NODES))
        return out.reshape(())                   # scalar, like torch.mean(..., -1)
    lead = state.shape[:-2]
    bp = int(np.prod(lead))
    out = critic_pallas(params,
                        state.reshape(bp, N_NODES, IN_DIM),
                        mask.reshape(bp, N_NODES))
    return out.reshape(lead)


# ------------------------- params & pure-JAX reference ------------------------
def init_params(key):
    def lin(k, din, dout, scale=0.1):
        kw, kb = jax.random.split(k)
        w = scale * jax.random.normal(kw, (din, dout), jnp.float32)
        b = scale * jax.random.normal(kb, (1, dout), jnp.float32)
        return w, b
    k1, k2, k3, k4 = jax.random.split(key, 4)
    w1, b1 = lin(k1, IN_DIM, 2 * HIDDEN_DIM)
    w2, b2 = lin(k2, 2 * HIDDEN_DIM, HIDDEN_DIM)
    w3, b3 = lin(k3, HIDDEN_DIM, HIDDEN_DIM)
    w4, b4 = lin(k4, HIDDEN_DIM, 1)
    return dict(w1=w1, b1=b1, w2=w2, b2=b2, w3=w3, b3=b3, w4=w4, b4=b4)


def critic_ref(params, state, mask):
    h = jnp.maximum(state @ params["w1"] + params["b1"][0], 0.0)
    h = jnp.maximum(h @ params["w2"] + params["b2"][0], 0.0)
    h = jnp.maximum(h @ params["w3"] + params["b3"][0], 0.0)
    v = (h @ params["w4"] + params["b4"][0])[..., 0]
    return jnp.mean(v * mask.reshape(v.shape), axis=-1)


# ---------------------------------------------------------------------------
if __name__ == "__main__":
    key = jax.random.PRNGKey(0)
    ks, km = jax.random.split(key)

    B, P = 2, 2
    state = jax.random.normal(ks, (B, P, N_NODES, IN_DIM), jnp.float32)
    mask = (jax.random.uniform(km, (B, P, N_NODES)) > 0.3).astype(jnp.float32)

    params = init_params(jax.random.PRNGKey(42))
    ref = critic_ref(params, state, mask)

    # batched branch
    out = critic_forward(params, state, mask)
    out = jax.block_until_ready(out)
    assert out.shape == (B, P)
    assert bool(jnp.all(jnp.isfinite(out)))
    assert np.allclose(np.asarray(out), np.asarray(ref), rtol=1e-5, atol=1e-5)

    # 2-D branch (single problem instance -> scalar)
    out2d = critic_forward(params, state[0, 0], mask[0, 0])
    out2d = jax.block_until_ready(out2d)
    assert out2d.shape == ()
    assert np.allclose(np.asarray(out2d), np.asarray(ref[0, 0]), rtol=1e-5, atol=1e-5)

    print("KERNEL_OK")
</pallas_src>

<mosaic_0001>
module attributes {stable_mosaic.version = 11 : i64} {
  func.func @_critic_kernel(%arg0: i32, %arg1: memref<9x1664xf32, #tpu.memory_space<vmem>>, %arg2: memref<1x1664xf32, #tpu.memory_space<vmem>>, %arg3: memref<64x9xf32, #tpu.memory_space<vmem>>, %arg4: memref<64x1xf32, #tpu.memory_space<vmem>>, %arg5: memref<32x64xf32, #tpu.memory_space<vmem>>, %arg6: memref<32x1xf32, #tpu.memory_space<vmem>>, %arg7: memref<32x32xf32, #tpu.memory_space<vmem>>, %arg8: memref<32x1xf32, #tpu.memory_space<vmem>>, %arg9: memref<1x32xf32, #tpu.memory_space<vmem>>, %arg10: memref<1x1xf32, #tpu.memory_space<vmem>>, %arg11: memref<1x128xf32, #tpu.memory_space<vmem>>) attributes {dimension_semantics = [#tpu.dimension_semantics<parallel>], iteration_bounds = array<i64: 1>, scalar_prefetch = 0 : i64, scratch_operands = 0 : i64, tpu.core_type = #tpu.core_type<tc>, window_params = [{transform_indices = @transform_0, window_bounds = array<i64: 9, 1664>}, {transform_indices = @transform_1, window_bounds = array<i64: 1, 1664>}, {pipeline_mode = #tpu.pipeline_mode<synchronous>, transform_indices = @transform_2, window_bounds = array<i64: 64, 9>}, {pipeline_mode = #tpu.pipeline_mode<synchronous>, transform_indices = @transform_3, window_bounds = array<i64: 64, 1>}, {pipeline_mode = #tpu.pipeline_mode<synchronous>, transform_indices = @transform_4, window_bounds = array<i64: 32, 64>}, {pipeline_mode = #tpu.pipeline_mode<synchronous>, transform_indices = @transform_5, window_bounds = array<i64: 32, 1>}, {pipeline_mode = #tpu.pipeline_mode<synchronous>, transform_indices = @transform_6, window_bounds = array<i64: 32, 32>}, {pipeline_mode = #tpu.pipeline_mode<synchronous>, transform_indices = @transform_7, window_bounds = array<i64: 32, 1>}, {pipeline_mode = #tpu.pipeline_mode<synchronous>, transform_indices = @transform_8, window_bounds = array<i64: 1, 32>}, {pipeline_mode = #tpu.pipeline_mode<synchronous>, transform_indices = @transform_9, window_bounds = array<i64: 1, 1>}, {transform_indices = @transform_10, window_bounds = array<i64: 1, 128>}]} {
    %c0 = arith.constant 0 : index
    %c0_0 = arith.constant 0 : index
    %0 = vector.load %arg1[%c0, %c0_0] : memref<9x1664xf32, #tpu.memory_space<vmem>>, vector<9x1664xf32>
    %c0_1 = arith.constant 0 : index
    %c0_2 = arith.constant 0 : index
    %1 = vector.load %arg3[%c0_1, %c0_2] : memref<64x9xf32, #tpu.memory_space<vmem>>, vector<64x9xf32>
    %cst = arith.constant dense<0.000000e+00> : vector<64x1664xf32>
    %2 = tpu.matmul %1, %0, %cst {dimension_numbers = #tpu.dot_dimension_numbers<[1], [0], [0], [1], [0, 0, 1, 1], [], []>} : vector<64x9xf32>, vector<9x1664xf32>, vector<64x1664xf32> -> vector<64x1664xf32>
    %c0_3 = arith.constant 0 : index
    %c0_4 = arith.constant 0 : index
    %3 = vector.load %arg4[%c0_3, %c0_4] : memref<64x1xf32, #tpu.memory_space<vmem>>, vector<64x1xf32>
    %4 = vector.broadcast %3 : vector<64x1xf32> to vector<64x1664xf32>
    %5 = arith.addf %2, %4 : vector<64x1664xf32>
    %cst_5 = arith.constant 0.000000e+00 : f32
    %6 = vector.broadcast %cst_5 : f32 to vector<64x1664xf32>
    %7 = arith.maximumf %5, %6 : vector<64x1664xf32>
    %c0_6 = arith.constant 0 : index
    %c0_7 = arith.constant 0 : index
    %8 = vector.load %arg5[%c0_6, %c0_7] : memref<32x64xf32, #tpu.memory_space<vmem>>, vector<32x64xf32>
    %cst_8 = arith.constant dense<0.000000e+00> : vector<32x1664xf32>
    %9 = tpu.matmul %8, %7, %cst_8 {dimension_numbers = #tpu.dot_dimension_numbers<[1], [0], [0], [1], [0, 0, 1, 1], [], []>} : vector<32x64xf32>, vector<64x1664xf32>, vector<32x1664xf32> -> vector<32x1664xf32>
    %c0_9 = arith.constant 0 : index
    %c0_10 = arith.constant 0 : index
    %10 = vector.load %arg6[%c0_9, %c0_10] : memref<32x1xf32, #tpu.memory_space<vmem>>, vector<32x1xf32>
    %11 = vector.broadcast %10 : vector<32x1xf32> to vector<32x1664xf32>
    %12 = arith.addf %9, %11 : vector<32x1664xf32>
    %cst_11 = arith.constant 0.000000e+00 : f32
    %13 = vector.broadcast %cst_11 : f32 to vector<32x1664xf32>
    %14 = arith.maximumf %12, %13 : vector<32x1664xf32>
    %c0_12 = arith.constant 0 : index
    %c0_13 = arith.constant 0 : index
    %15 = vector.load %arg7[%c0_12, %c0_13] : memref<32x32xf32, #tpu.memory_space<vmem>>, vector<32x32xf32>
    %cst_14 = arith.constant dense<0.000000e+00> : vector<32x1664xf32>
    %16 = tpu.matmul %15, %14, %cst_14 {dimension_numbers = #tpu.dot_dimension_numbers<[1], [0], [0], [1], [0, 0, 1, 1], [], []>} : vector<32x32xf32>, vector<32x1664xf32>, vector<32x1664xf32> -> vector<32x1664xf32>
    %c0_15 = arith.constant 0 : index
    %c0_16 = arith.constant 0 : index
    %17 = vector.load %arg8[%c0_15, %c0_16] : memref<32x1xf32, #tpu.memory_space<vmem>>, vector<32x1xf32>
    %18 = vector.broadcast %17 : vector<32x1xf32> to vector<32x1664xf32>
    %19 = arith.addf %16, %18 : vector<32x1664xf32>
    %cst_17 = arith.constant 0.000000e+00 : f32
    %20 = vector.broadcast %cst_17 : f32 to vector<32x1664xf32>
    %21 = arith.maximumf %19, %20 : vector<32x1664xf32>
    %c0_18 = arith.constant 0 : index
    %c0_19 = arith.constant 0 : index
    %22 = vector.load %arg9[%c0_18, %c0_19] : memref<1x32xf32, #tpu.memory_space<vmem>>, vector<1x32xf32>
    %cst_20 = arith.constant dense<0.000000e+00> : vector<1x1664xf32>
    %23 = tpu.matmul %22, %21, %cst_20 {dimension_numbers = #tpu.dot_dimension_numbers<[1], [0], [0], [1], [0, 0, 1, 1], [], []>} : vector<1x32xf32>, vector<32x1664xf32>, vector<1x1664xf32> -> vector<1x1664xf32>
    %c0_21 = arith.constant 0 : index
    %c0_22 = arith.constant 0 : index
    %24 = vector.load %arg10[%c0_21, %c0_22] : memref<1x1xf32, #tpu.memory_space<vmem>>, vector<1x1xf32>
    %25 = vector.broadcast %24 : vector<1x1xf32> to vector<1x1664xf32>
    %26 = arith.addf %23, %25 : vector<1x1664xf32>
    %c0_23 = arith.constant 0 : index
    %c0_24 = arith.constant 0 : index
    %27 = vector.load %arg2[%c0_23, %c0_24] : memref<1x1664xf32, #tpu.memory_space<vmem>>, vector<1x1664xf32>
    %28 = arith.mulf %26, %27 : vector<1x1664xf32>
    %29 = vector.extract_strided_slice %28 {offsets = [0, 0], sizes = [1, 128], strides = [1, 1]} : vector<1x1664xf32> to vector<1x128xf32>
    %30 = vector.extract_strided_slice %28 {offsets = [0, 128], sizes = [1, 128], strides = [1, 1]} : vector<1x1664xf32> to vector<1x128xf32>
    %31 = arith.addf %29, %30 : vector<1x128xf32>
    %32 = vector.extract_strided_slice %28 {offsets = [0, 256], sizes = [1, 128], strides = [1, 1]} : vector<1x1664xf32> to vector<1x128xf32>
    %33 = arith.addf %31, %32 : vector<1x128xf32>
    %34 = vector.extract_strided_slice %28 {offsets = [0, 384], sizes = [1, 128], strides = [1, 1]} : vector<1x1664xf32> to vector<1x128xf32>
    %35 = arith.addf %33, %34 : vector<1x128xf32>
    %36 = vector.extract_strided_slice %28 {offsets = [0, 512], sizes = [1, 128], strides = [1, 1]} : vector<1x1664xf32> to vector<1x128xf32>
    %37 = arith.addf %35, %36 : vector<1x128xf32>
    %38 = vector.extract_strided_slice %28 {offsets = [0, 640], sizes = [1, 128], strides = [1, 1]} : vector<1x1664xf32> to vector<1x128xf32>
    %39 = arith.addf %37, %38 : vector<1x128xf32>
    %40 = vector.extract_strided_slice %28 {offsets = [0, 768], sizes = [1, 128], strides = [1, 1]} : vector<1x1664xf32> to vector<1x128xf32>
    %41 = arith.addf %39, %40 : vector<1x128xf32>
    %42 = vector.extract_strided_slice %28 {offsets = [0, 896], sizes = [1, 128], strides = [1, 1]} : vector<1x1664xf32> to vector<1x128xf32>
    %43 = arith.addf %41, %42 : vector<1x128xf32>
    %44 = vector.extract_strided_slice %28 {offsets = [0, 1024], sizes = [1, 128], strides = [1, 1]} : vector<1x1664xf32> to vector<1x128xf32>
    %45 = arith.addf %43, %44 : vector<1x128xf32>
    %46 = vector.extract_strided_slice %28 {offsets = [0, 1152], sizes = [1, 128], strides = [1, 1]} : vector<1x1664xf32> to vector<1x128xf32>
    %47 = arith.addf %45, %46 : vector<1x128xf32>
    %48 = vector.extract_strided_slice %28 {offsets = [0, 1280], sizes = [1, 128], strides = [1, 1]} : vector<1x1664xf32> to vector<1x128xf32>
    %49 = arith.addf %47, %48 : vector<1x128xf32>
    %50 = vector.extract_strided_slice %28 {offsets = [0, 1408], sizes = [1, 128], strides = [1, 1]} : vector<1x1664xf32> to vector<1x128xf32>
    %51 = arith.addf %49, %50 : vector<1x128xf32>
    %52 = vector.extract_strided_slice %28 {offsets = [0, 1536], sizes = [1, 128], strides = [1, 1]} : vector<1x1664xf32> to vector<1x128xf32>
    %53 = arith.addf %51, %52 : vector<1x128xf32>
    %cst_25 = arith.constant 0.0769230798 : f32
    %54 = vector.broadcast %cst_25 : f32 to vector<1x128xf32>
    %55 = arith.mulf %53, %54 : vector<1x128xf32>
    %c0_26 = arith.constant 0 : index
    %c0_27 = arith.constant 0 : index
    %56 = vector.load %arg11[%c0_26, %c0_27] : memref<1x128xf32, #tpu.memory_space<vmem>>, vector<1x128xf32>
    tpu.vector_store %arg11[%c0_26, %c0_27], %55 {strides = array<i32>} : memref<1x128xf32, #tpu.memory_space<vmem>>, vector<1x128xf32>,
    return
  }
  func.func @transform_0(%arg0: i32) -> (i32, i32) {
    %c0_i32 = arith.constant 0 : i32
    %c0_i32_0 = arith.constant 0 : i32
    return %c0_i32, %arg0 : i32, i32
  }
  func.func @transform_1(%arg0: i32) -> (i32, i32) {
    %c0_i32 = arith.constant 0 : i32
    %c0_i32_0 = arith.constant 0 : i32
    return %c0_i32, %arg0 : i32, i32
  }
  func.func @transform_2(%arg0: i32) -> (i32, i32) {
    %c0_i32 = arith.constant 0 : i32
    %c0_i32_0 = arith.constant 0 : i32
    %c0_i32_1 = arith.constant 0 : i32
    return %c0_i32, %c0_i32_0 : i32, i32
  }
  func.func @transform_3(%arg0: i32) -> (i32, i32) {
    %c0_i32 = arith.constant 0 : i32
    %c0_i32_0 = arith.constant 0 : i32
    %c0_i32_1 = arith.constant 0 : i32
    return %c0_i32, %c0_i32_0 : i32, i32
  }
  func.func @transform_4(%arg0: i32) -> (i32, i32) {
    %c0_i32 = arith.constant 0 : i32
    %c0_i32_0 = arith.constant 0 : i32
    %c0_i32_1 = arith.constant 0 : i32
    return %c0_i32, %c0_i32_0 : i32, i32
  }
  func.func @transform_5(%arg0: i32) -> (i32, i32) {
    %c0_i32 = arith.constant 0 : i32
    %c0_i32_0 = arith.constant 0 : i32
    %c0_i32_1 = arith.constant 0 : i32
    return %c0_i32, %c0_i32_0 : i32, i32
  }
  func.func @transform_6(%arg0: i32) -> (i32, i32) {
    %c0_i32 = arith.constant 0 : i32
    %c0_i32_0 = arith.constant 0 : i32
    %c0_i32_1 = arith.constant 0 : i32
    return %c0_i32, %c0_i32_0 : i32, i32
  }
  func.func @transform_7(%arg0: i32) -> (i32, i32) {
    %c0_i32 = arith.constant 0 : i32
    %c0_i32_0 = arith.constant 0 : i32
    %c0_i32_1 = arith.constant 0 : i32
    return %c0_i32, %c0_i32_0 : i32, i32
  }
  func.func @transform_8(%arg0: i32) -> (i32, i32) {
    %c0_i32 = arith.constant 0 : i32
    %c0_i32_0 = arith.constant 0 : i32
    %c0_i32_1 = arith.constant 0 : i32
    return %c0_i32, %c0_i32_0 : i32, i32
  }
  func.func @transform_9(%arg0: i32) -> (i32, i32) {
    %c0_i32 = arith.constant 0 : i32
    %c0_i32_0 = arith.constant 0 : i32
    %c0_i32_1 = arith.constant 0 : i32
    return %c0_i32, %c0_i32_0 : i32, i32
  }
  func.func @transform_10(%arg0: i32) -> (i32, i32) {
    %c0_i32 = arith.constant 0 : i32
    %c0_i32_0 = arith.constant 0 : i32
    return %c0_i32, %arg0 : i32, i32
  }
}

</mosaic_0001>

<llo_original>
// kernel: tpu_custom_call.1
$region0: #{tpu_custom_call.1}
  #allocation0 [shape = 'u32[]', space=smem, size = 0x4, offset = 0x4, fixed_abs, tag = 'smem constant byte address 0x4 - core index']
  #allocation1 [shape = 'u32[144,128]{1,0:T(1,128)}', space=vmem, size = 0x12000, scoped, tag = 'internal scratch']
  #allocation2 [shape = 'f32[1,1]{1,0:T(1,128)S(1)}', space=vmem, size = 0x200, scoped, tag = 'scoped memory for tpu_custom_call.1']
  %s0 = inlined_call_operand.vmem [shape: f32[9,1664], index: 0, kind: input, shape index: {}]
  %s1 = inlined_call_operand.hbm [shape: f32[1,1664], index: 1, kind: input, shape index: {}]
  %s2 = inlined_call_operand.vmem [shape: f32[64,9], index: 2, kind: input, shape index: {}]
  %s3 = inlined_call_operand.vmem [shape: f32[64,1], index: 3, kind: input, shape index: {}]
  %s4 = inlined_call_operand.hbm [shape: f32[32,64], index: 4, kind: input, shape index: {}]
  %s5 = inlined_call_operand.vmem [shape: f32[32,1], index: 5, kind: input, shape index: {}]
  %s6 = inlined_call_operand.hbm [shape: f32[32,32], index: 6, kind: input, shape index: {}]
  %s7 = inlined_call_operand.vmem [shape: f32[32,1], index: 7, kind: input, shape index: {}]
  %s8 = inlined_call_operand.vmem [shape: f32[1,32], index: 8, kind: input, shape index: {}]
  %s9 = inlined_call_operand.<no memory space> [shape: f32[1,1], index: 9, kind: input, shape index: {}]
  %s10 = inlined_call_operand.hbm [shape: f32[1,128], index: 10, kind: output, shape index: {}]
  %s11 = sld [smem:[#allocation0]]
  $region62: #{tpu_custom_call.1} parent=0
    _
  %s13 = ssub.s32 1, %s11
  %s14 = scalar_select 0, %s13, %s11
  %v15 = vstv %s9
  %16 = vst [vmem:[#allocation2] sm:$0x1] %v15
  $region1: #{tpu_custom_call.1} parent=0
    #allocation3 [shape = 'u8[6656]{0}', space=vmem, size = 0x1c00, scoped, tag = 'input window, operand 1, single buffered']
    #allocation4 [shape = 's32[1]{0}', space=sflag, size = 0x4, scoped, tag = 'scoped memory for tpu_custom_call.1']
    #allocation5 [shape = 's32[1]{0}', space=sflag, size = 0x4, scoped, tag = 'scoped memory for tpu_custom_call.1']
    #allocation6 [shape = 'u8[16384]{0}', space=vmem, size = 0x4000, scoped, tag = 'input window, operand 4, single buffered']
    #allocation7 [shape = 's32[1]{0}', space=sflag, size = 0x4, scoped, tag = 'scoped memory for tpu_custom_call.1']
    #allocation8 [shape = 'u8[16384]{0}', space=vmem, size = 0x4000, scoped, tag = 'input window, operand 6, single buffered']
    #allocation9 [shape = 'u8[512]{0}', space=vmem, size = 0x400, scoped, tag = 'output window, operand 0, single buffered']
    %17 = vsyncpa [#allocation4], 0
    %18 = vsyncpa [#allocation7], 0
    %19 = vsyncpa [#allocation5], 0
    // Predicated region
    $region2: #{tpu_custom_call.1} parent=1 // pred_check
      _
    $region3: #{tpu_custom_call.1} parent=1 // pred_check_branch
      %21 = sbr.rel (0) target = $region5
    $region4: #{tpu_custom_call.1} parent=1 // pred_region
      _
    $region5: #{tpu_custom_call.1} parent=1 // pred_fallthru
      _
    // Predicated region
    $region6: #{tpu_custom_call.1} parent=1 // pred_check
      _
    $region7: #{tpu_custom_call.1} parent=1 // pred_check_branch
      %23 = sbr.rel (0) target = $region9
    $region8: #{tpu_custom_call.1} parent=1 // pred_region
      %s25 = ssub.s32 208, 208
      %26 = vsyncadd [#allocation4], %s25
      %s28 = sshll.u32 [#allocation3], 4
      %s29 = int_to_ptr.vmem [resolvable:$true] %s28
      %31 = dma.hbm_to_vmem [thread:$0]  %s1, 208, %s29, [#allocation4]
    $region9: #{tpu_custom_call.1} parent=1 // pred_fallthru
      _
    // Predicated region
    $region10: #{tpu_custom_call.1} parent=1 // pred_check
      _
    $region11: #{tpu_custom_call.1} parent=1 // pred_check_branch
      %33 = sbr.rel (0) target = $region13
    $region12: #{tpu_custom_call.1} parent=1 // pred_region
      _
    $region13: #{tpu_custom_call.1} parent=1 // pred_fallthru
      _
    // Predicated region
    $region14: #{tpu_custom_call.1} parent=1 // pred_check
      _
    $region15: #{tpu_custom_call.1} parent=1 // pred_check_branch
      %35 = sbr.rel (0) target = $region17
    $region16: #{tpu_custom_call.1} parent=1 // pred_region
      _
    $region17: #{tpu_custom_call.1} parent=1 // pred_fallthru
      _
    // Predicated region
    $region18: #{tpu_custom_call.1} parent=1 // pred_check
      _
    $region19: #{tpu_custom_call.1} parent=1 // pred_check_branch
      %37 = sbr.rel (0) target = $region21
    $region20: #{tpu_custom_call.1} parent=1 // pred_region
      %s39 = ssub.s32 512, 512
      %40 = vsyncadd [#allocation7], %s39
      %s41 = sshll.u32 [#allocation6], 4
      %s42 = int_to_ptr.vmem [resolvable:$true] %s41
      %47 = dma.hbm_to_vmem [thread:$0]  %s4, 512, %s42, [#allocation7], 128, 128, 8
    $region21: #{tpu_custom_call.1} parent=1 // pred_fallthru
      _
    // Predicated region
    $region22: #{tpu_custom_call.1} parent=1 // pred_check
      _
    $region23: #{tpu_custom_call.1} parent=1 // pred_check_branch
      %49 = sbr.rel (0) target = $region25
    $region24: #{tpu_custom_call.1} parent=1 // pred_region
      _
    $region25: #{tpu_custom_call.1} parent=1 // pred_fallthru
      _
    // Predicated region
    $region26: #{tpu_custom_call.1} parent=1 // pred_check
      _
    $region27: #{tpu_custom_call.1} parent=1 // pred_check_branch
      %51 = sbr.rel (0) target = $region29
    $region28: #{tpu_custom_call.1} parent=1 // pred_region
      %s53 = ssub.s32 512, 512
      %54 = vsyncadd [#allocation7], %s53
      %s55 = sshll.u32 [#allocation8], 4
      %s56 = int_to_ptr.vmem [resolvable:$true] %s55
      %61 = dma.hbm_to_vmem [thread:$0]  %s6, 512, %s56, [#allocation7], 128, 128, 8
    $region29: #{tpu_custom_call.1} parent=1 // pred_fallthru
      _
    // Predicated region
    $region30: #{tpu_custom_call.1} parent=1 // pred_check
      _
    $region31: #{tpu_custom_call.1} parent=1 // pred_check_branch
      %63 = sbr.rel (0) target = $region33
    $region32: #{tpu_custom_call.1} parent=1 // pred_region
      _
    $region33: #{tpu_custom_call.1} parent=1 // pred_fallthru
      _
    // Predicated region
    $region34: #{tpu_custom_call.1} parent=1 // pred_check
      _
    $region35: #{tpu_custom_call.1} parent=1 // pred_check_branch
      %65 = sbr.rel (0) target = $region37
    $region36: #{tpu_custom_call.1} parent=1 // pred_region
      _
    $region37: #{tpu_custom_call.1} parent=1 // pred_fallthru
      _
    // Predicated region
    $region38: #{tpu_custom_call.1} parent=1 // pred_check
      _
    $region39: #{tpu_custom_call.1} parent=1 // pred_check_branch
      %67 = sbr.rel (0) target = $region41
    $region40: #{tpu_custom_call.1} parent=1 // pred_region
      _
    $region41: #{tpu_custom_call.1} parent=1 // pred_fallthru
      _
    // Predicated region
    $region42: #{tpu_custom_call.1} parent=1 // pred_check
      _
    $region43: #{tpu_custom_call.1} parent=1 // pred_check_branch
      %69 = sbr.rel (0) target = $region45
    $region44: #{tpu_custom_call.1} parent=1 // pred_region
      %70 = dma.done [#allocation4], 208
    $region45: #{tpu_custom_call.1} parent=1 // pred_fallthru
      _
    // Predicated region
    $region46: #{tpu_custom_call.1} parent=1 // pred_check
      _
    $region47: #{tpu_custom_call.1} parent=1 // pred_check_branch
      %72 = sbr.rel (0) target = $region49
    $region48: #{tpu_custom_call.1} parent=1 // pred_region
      %73 = dma.done [#allocation7], 512
    $region49: #{tpu_custom_call.1} parent=1 // pred_fallthru
      _
    // Predicated region
    $region50: #{tpu_custom_call.1} parent=1 // pred_check
      _
    $region51: #{tpu_custom_call.1} parent=1 // pred_check_branch
      %75 = sbr.rel (0) target = $region53
    $region52: #{tpu_custom_call.1} parent=1 // pred_region
      %76 = dma.done [#allocation7], 512
    $region53: #{tpu_custom_call.1} parent=1 // pred_fallthru
      _
    %v77 = vld [vmem:[%s0] sm:$0xff]
    %v78 = vld [vmem:[%s0 + $0x8] sm:$0xff]
    %v79 = vld [vmem:[%s0 + $0x10] sm:$0xff]
    %v80 = vld [vmem:[%s0 + $0x18] sm:$0xff]
    %v81 = vld [vmem:[%s0 + $0x20] sm:$0xff]
    %v82 = vld [vmem:[%s0 + $0x28] sm:$0xff]
    %v83 = vld [vmem:[%s0 + $0x30] sm:$0xff]
    %v84 = vld [vmem:[%s0 + $0x38] sm:$0xff]
    %v85 = vld [vmem:[%s0 + $0x40] sm:$0xff]
    %v86 = vld [vmem:[%s0 + $0x48] sm:$0xff]
    %v87 = vld [vmem:[%s0 + $0x50] sm:$0xff]
    %v88 = vld [vmem:[%s0 + $0x58] sm:$0xff]
    %v89 = vld [vmem:[%s0 + $0x60] sm:$0xff]
    %v90 = vld [vmem:[%s0 + $0x68] sm:$0x1]
    %v91 = vld [vmem:[%s0 + $0x70] sm:$0x1]
    %v92 = vld [vmem:[%s0 + $0x78] sm:$0x1]
    %v93 = vld [vmem:[%s0 + $0x80] sm:$0x1]
    %v94 = vld [vmem:[%s0 + $0x88] sm:$0x1]
    %v95 = vld [vmem:[%s0 + $0x90] sm:$0x1]
    %v96 = vld [vmem:[%s0 + $0x98] sm:$0x1]
    %v97 = vld [vmem:[%s0 + $0xa0] sm:$0x1]
    %v98 = vld [vmem:[%s0 + $0xa8] sm:$0x1]
    %v99 = vld [vmem:[%s0 + $0xb0] sm:$0x1]
    %v100 = vld [vmem:[%s0 + $0xb8] sm:$0x1]
    %v101 = vld [vmem:[%s0 + $0xc0] sm:$0x1]
    %v102 = vld [vmem:[%s0 + $0xc8] sm:$0x1]
    %v103 = vld [vmem:[%s2] sm:$0xff]
    %v104 = vld [vmem:[%s2 + $0x8] sm:$0xff]
    %v105 = vld [vmem:[%s2 + $0x10] sm:$0xff]
    %v106 = vld [vmem:[%s2 + $0x18] sm:$0xff]
    %v107 = vld [vmem:[%s2 + $0x20] sm:$0xff]
    %v108 = vld [vmem:[%s2 + $0x28] sm:$0xff]
    %v109 = vld [vmem:[%s2 + $0x30] sm:$0xff]
    %v110 = vld [vmem:[%s2 + $0x38] sm:$0xff]
    %v111 = vld [vmem:[%s3] sm:$0xff]
    %v112 = vld [vmem:[%s3 + $0x8] sm:$0xff]
    %v113 = vld [vmem:[%s3 + $0x10] sm:$0xff]
    %v114 = vld [vmem:[%s3 + $0x18] sm:$0xff]
    %v115 = vld [vmem:[%s3 + $0x20] sm:$0xff]
    %v116 = vld [vmem:[%s3 + $0x28] sm:$0xff]
    %v117 = vld [vmem:[%s3 + $0x30] sm:$0xff]
    %v118 = vld [vmem:[%s3 + $0x38] sm:$0xff]
    %120 = vset.pattern.permute.xlu0 0
    %121 = vperm.xlu0 %120, %v111
    %v122 = vpop.permute.xlu0 %121
    %125 = vset.pattern.permute.xlu0 0
    %126 = vperm.xlu0 %125, %v112
    %v127 = vpop.permute.xlu0 %126
    %130 = vset.pattern.permute.xlu0 0
    %131 = vperm.xlu0 %130, %v113
    %v132 = vpop.permute.xlu0 %131
    %135 = vset.pattern.permute.xlu0 0
    %136 = vperm.xlu0 %135, %v114
    %v137 = vpop.permute.xlu0 %136
    %140 = vset.pattern.permute.xlu0 0
    %141 = vperm.xlu0 %140, %v115
    %v142 = vpop.permute.xlu0 %141
    %145 = vset.pattern.permute.xlu0 0
    %146 = vperm.xlu0 %145, %v116
    %v147 = vpop.permute.xlu0 %146
    %150 = vset.pattern.permute.xlu0 0
    %151 = vperm.xlu0 %150, %v117
    %v152 = vpop.permute.xlu0 %151
    %155 = vset.pattern.permute.xlu0 0
    %156 = vperm.xlu0 %155, %v118
    %v157 = vpop.permute.xlu0 %156
    %vm159 = vcmask 72704
    %v161 = vsel %vm159, %v103, 0
    %v164 = vsel %vm159, %v104, 0
    %v167 = vsel %vm159, %v105, 0
    %v170 = vsel %vm159, %v106, 0
    %v173 = vsel %vm159, %v107, 0
    %v176 = vsel %vm159, %v108, 0
    %v179 = vsel %vm159, %v109, 0
    %v182 = vsel %vm159, %v110, 0
    %vm184 = vcmask 1040384
    %v186 = vsel %vm184, %v90, 0
    %v189 = vsel %vm184, %v91, 0
    %v192 = vsel %vm184, %v92, 0
    %v195 = vsel %vm184, %v93, 0
    %v198 = vsel %vm184, %v94, 0
    %v201 = vsel %vm184, %v95, 0
    %v204 = vsel %vm184, %v96, 0
    %v207 = vsel %vm184, %v97, 0
    %v210 = vsel %vm184, %v98, 0
    %v213 = vsel %vm184, %v99, 0
    %v216 = vsel %vm184, %v100, 0
    %v219 = vsel %vm184, %v101, 0
    %v222 = vsel %vm184, %v102, 0
    %224 = vmatprep.subr.mxu0 %v78
    %225 = vmatpush1.msra.mxu0 %v77
    %226 = vmatprep.subr.mxu0 %v189
    %227 = vmatpush1.msra.mxu0 %v186
    %228 = vmatprep.subr.mxu0 0.0
    %229 = vmatpush1.msra.mxu0 0.0
    %230 = vmatprep.subr.mxu0 0.0
    %231 = vmatpush1.msra.mxu0 0.0
    %232 = vmatprep.subr.mxu0 0.0
    %233 = vmatpush1.msra.mxu0 0.0
    %234 = vmatprep.subr.mxu0 0.0
    %235 = vmatpush1.msra.mxu0 0.0
    %236 = vmatprep.subr.mxu0 0.0
    %237 = vmatpush1.msra.mxu0 0.0
    %238 = vmatprep.subr.mxu0 0.0
    %239 = vmatpush1.msra.mxu0 0.0
    %240 = vmatprep.subr.mxu0 0.0
    %241 = vmatpush1.msra.mxu0 0.0
    %242 = vmatprep.subr.mxu0 0.0
    %243 = vmatpush1.msra.mxu0 0.0
    %244 = vmatprep.subr.mxu0 0.0
    %245 = vmatpush1.msra.mxu0 0.0
    %246 = vmatprep.subr.mxu0 0.0
    %247 = vmatpush1.msra.mxu0 0.0
    %248 = vmatprep.subr.mxu0 0.0
    %249 = vmatpush1.msra.mxu0 0.0
    %250 = vmatprep.subr.mxu0 0.0
    %251 = vmatpush1.msra.mxu0 0.0
    %252 = vmatprep.subr.mxu0 0.0
    %253 = vmatpush1.msra.mxu0 0.0
    %254 = vmatprep.subr.mxu0 0.0
    %255 = vmatpush1.msra.mxu0 0.0
    %256 = vmatprep.subr.mxu0 0.0
    %257 = vmatpush1.msra.mxu0 0.0
    %258 = vmatprep.subr.mxu0 0.0
    %259 = vmatpush1.msra.mxu0 0.0
    %260 = vmatprep.subr.mxu0 0.0
    %261 = vmatpush1.msra.mxu0 0.0
    %262 = vmatprep.subr.mxu0 0.0
    %263 = vmatpush1.msra.mxu0 0.0
    %264 = vmatprep.subr.mxu0 0.0
    %265 = vmatpush1.msra.mxu0 0.0
    %266 = vmatprep.subr.mxu0 0.0
    %267 = vmatpush1.msra.mxu0 0.0
    %268 = vmatprep.subr.mxu0 0.0
    %269 = vmatpush1.msra.mxu0 0.0
    %270 = vmatprep.subr.mxu0 0.0
    %271 = vmatpush1.msra.mxu0 0.0
    %272 = vmatprep.subr.mxu0 0.0
    %273 = vmatpush1.msra.mxu0 0.0
    %274 = vmatprep.subr.mxu0 0.0
    %275 = vmatpush1.msra.mxu0 0.0
    %276 = vmatprep.subr.mxu0 0.0
    %277 = vmatpush1.msra.mxu0 0.0
    %278 = vmatprep.subr.mxu0 0.0
    %279 = vmatpush1.msra.mxu0 0.0
    %280 = vmatprep.subr.mxu0 0.0
    %281 = vmatpush1.msra.mxu0 0.0
    %282 = vmatprep.subr.mxu0 0.0
    %283 = vmatpush1.msra.mxu0 0.0
    %284 = vmatprep.subr.mxu0 0.0
    %285 = vmatpush1.msra.mxu0 0.0
    %286 = vmatprep.subr.mxu0 0.0
    %287 = vmatpush1.msra.mxu0 0.0
    %288 = vmatprep.mubr.f32.mxu0 0.0
    %289 = vmatmul.mubr.f32.gmra.mrb[0].mxu0 %v161
    %v290 = vpop.f32.mrb[0].mxu0
    %v291 = vadd.f32 %v122, %v290
    %v292 = vpop.f32.mrb[0].mxu0
    %v293 = vadd.f32 %v122, %v292
    %294 = vmatprep.mubr.f32.mxu0 0.0
    %295 = vmatmul.mubr.f32.gmra.mrb[0].mxu0 %v164
    %v296 = vpop.f32.mrb[0].mxu0
    %v297 = vadd.f32 %v127, %v296
    %v298 = vpop.f32.mrb[0].mxu0
    %v299 = vadd.f32 %v127, %v298
    %300 = vmatprep.mubr.f32.mxu0 0.0
    %301 = vmatmul.mubr.f32.gmra.mrb[0].mxu0 %v167
    %v302 = vpop.f32.mrb[0].mxu0
    %v303 = vadd.f32 %v132, %v302
    %v304 = vpop.f32.mrb[0].mxu0
    %v305 = vadd.f32 %v132, %v304
    %306 = vmatprep.mubr.f32.mxu0 0.0
    %307 = vmatmul.mubr.f32.gmra.mrb[0].mxu0 %v170
    %v308 = vpop.f32.mrb[0].mxu0
    %v309 = vadd.f32 %v137, %v308
    %v310 = vpop.f32.mrb[0].mxu0
    %v311 = vadd.f32 %v137, %v310
    %312 = vmatprep.mubr.f32.mxu0 0.0
    %313 = vmatmul.mubr.f32.gmra.mrb[0].mxu0 %v173
    %v314 = vpop.f32.mrb[0].mxu0
    %v315 = vadd.f32 %v142, %v314
    %v316 = vpop.f32.mrb[0].mxu0
    %v317 = vadd.f32 %v142, %v316
    %318 = vmatprep.mubr.f32.mxu0 0.0
    %319 = vmatmul.mubr.f32.gmra.mrb[0].mxu0 %v176
    %v320 = vpop.f32.mrb[0].mxu0
    %v321 = vadd.f32 %v147, %v320
    %v322 = vpop.f32.mrb[0].mxu0
    %v323 = vadd.f32 %v147, %v322
    %324 = vmatprep.mubr.f32.mxu0 0.0
    %325 = vmatmul.mubr.f32.gmra.mrb[0].mxu0 %v179
    %v326 = vpop.f32.mrb[0].mxu0
    %v327 = vadd.f32 %v152, %v326
    %v328 = vpop.f32.mrb[0].mxu0
    %v329 = vadd.f32 %v152, %v328
    %330 = vmatprep.mubr.f32.mxu0 0.0
    %331 = vmatmul.mubr.f32.gmra.mrb[0].mxu0 %v182
    %v332 = vpop.f32.mrb[0].mxu0
    %v333 = vadd.f32 %v157, %v332
    %v334 = vpop.f32.mrb[0].mxu0
    %v335 = vadd.f32 %v157, %v334
    %336 = vdwg.mxu0
    %337 = vmatprep.subr.mxu0 %v80
    %338 = vmatpush1.msra.mxu0 %v79
    %339 = vmatprep.subr.mxu0 %v195
    %340 = vmatpush1.msra.mxu0 %v192
    %341 = vmatprep.subr.mxu0 0.0
    %342 = vmatpush1.msra.mxu0 0.0
    %343 = vmatprep.subr.mxu0 0.0
    %344 = vmatpush1.msra.mxu0 0.0
    %345 = vmatprep.subr.mxu0 0.0
    %346 = vmatpush1.msra.mxu0 0.0
    %347 = vmatprep.subr.mxu0 0.0
    %348 = vmatpush1.msra.mxu0 0.0
    %349 = vmatprep.subr.mxu0 0.0
    %350 = vmatpush1.msra.mxu0 0.0
    %351 = vmatprep.subr.mxu0 0.0
    %352 = vmatpush1.msra.mxu0 0.0
    %353 = vmatprep.subr.mxu0 0.0
    %354 = vmatpush1.msra.mxu0 0.0
    %355 = vmatprep.subr.mxu0 0.0
    %356 = vmatpush1.msra.mxu0 0.0
    %357 = vmatprep.subr.mxu0 0.0
    %358 = vmatpush1.msra.mxu0 0.0
    %359 = vmatprep.subr.mxu0 0.0
    %360 = vmatpush1.msra.mxu0 0.0
    %361 = vmatprep.subr.mxu0 0.0
    %362 = vmatpush1.msra.mxu0 0.0
    %363 = vmatprep.subr.mxu0 0.0
    %364 = vmatpush1.msra.mxu0 0.0
    %365 = vmatprep.subr.mxu0 0.0
    %366 = vmatpush1.msra.mxu0 0.0
    %367 = vmatprep.subr.mxu0 0.0
    %368 = vmatpush1.msra.mxu0 0.0
    %369 = vmatprep.subr.mxu0 0.0
    %370 = vmatpush1.msra.mxu0 0.0
    %371 = vmatprep.subr.mxu0 0.0
    %372 = vmatpush1.msra.mxu0 0.0
    %373 = vmatprep.subr.mxu0 0.0
    %374 = vmatpush1.msra.mxu0 0.0
    %375 = vmatprep.subr.mxu0 0.0
    %376 = vmatpush1.msra.mxu0 0.0
    %377 = vmatprep.subr.mxu0 0.0
    %378 = vmatpush1.msra.mxu0 0.0
    %379 = vmatprep.subr.mxu0 0.0
    %380 = vmatpush1.msra.mxu0 0.0
    %381 = vmatprep.subr.mxu0 0.0
    %382 = vmatpush1.msra.mxu0 0.0
    %383 = vmatprep.subr.mxu0 0.0
    %384 = vmatpush1.msra.mxu0 0.0
    %385 = vmatprep.subr.mxu0 0.0
    %386 = vmatpush1.msra.mxu0 0.0
    %387 = vmatprep.subr.mxu0 0.0
    %388 = vmatpush1.msra.mxu0 0.0
    %389 = vmatprep.subr.mxu0 0.0
    %390 = vmatpush1.msra.mxu0 0.0
    %391 = vmatprep.subr.mxu0 0.0
    %392 = vmatpush1.msra.mxu0 0.0
    %393 = vmatprep.subr.mxu0 0.0
    %394 = vmatpush1.msra.mxu0 0.0
    %395 = vmatprep.subr.mxu0 0.0
    %396 = vmatpush1.msra.mxu0 0.0
    %397 = vmatprep.subr.mxu0 0.0
    %398 = vmatpush1.msra.mxu0 0.0
    %399 = vmatprep.subr.mxu0 0.0
    %400 = vmatpush1.msra.mxu0 0.0
    %401 = vmatprep.mubr.f32.mxu0 0.0
    %402 = vmatmul.mubr.f32.gmra.mrb[0].mxu0 %v161
    %v403 = vpop.f32.mrb[0].mxu0
    %v404 = vadd.f32 %v122, %v403
    %v405 = vpop.f32.mrb[0].mxu0
    %v406 = vadd.f32 %v122, %v405
    %407 = vmatprep.mubr.f32.mxu0 0.0
    %408 = vmatmul.mubr.f32.gmra.mrb[0].mxu0 %v164
    %v409 = vpop.f32.mrb[0].mxu0
    %v410 = vadd.f32 %v127, %v409
    %v411 = vpop.f32.mrb[0].mxu0
    %v412 = vadd.f32 %v127, %v411
    %413 = vmatprep.mubr.f32.mxu0 0.0
    %414 = vmatmul.mubr.f32.gmra.mrb[0].mxu0 %v167
    %v415 = vpop.f32.mrb[0].mxu0
    %v416 = vadd.f32 %v132, %v415
    %v417 = vpop.f32.mrb[0].mxu0
    %v418 = vadd.f32 %v132, %v417
    %419 = vmatprep.mubr.f32.mxu0 0.0
    %420 = vmatmul.mubr.f32.gmra.mrb[0].mxu0 %v170
    %v421 = vpop.f32.mrb[0].mxu0
    %v422 = vadd.f32 %v137, %v421
    %v423 = vpop.f32.mrb[0].mxu0
    %v424 = vadd.f32 %v137, %v423
    %425 = vmatprep.mubr.f32.mxu0 0.0
    %426 = vmatmul.mubr.f32.gmra.mrb[0].mxu0 %v173
    %v427 = vpop.f32.mrb[0].mxu0
    %v428 = vadd.f32 %v142, %v427
    %v429 = vpop.f32.mrb[0].mxu0
    %v430 = vadd.f32 %v142, %v429
    %431 = vmatprep.mubr.f32.mxu0 0.0
    %432 = vmatmul.mubr.f32.gmra.mrb[0].mxu0 %v176
    %v433 = vpop.f32.mrb[0].mxu0
    %v434 = vadd.f32 %v147, %v433
    %v435 = vpop.f32.mrb[0].mxu0
    %v436 = vadd.f32 %v147, %v435
    %437 = vmatprep.mubr.f32.mxu0 0.0
    %438 = vmatmul.mubr.f32.gmra.mrb[0].mxu0 %v179
    %v439 = vpop.f32.mrb[0].mxu0
    %v440 = vadd.f32 %v152, %v439
    %v441 = vpop.f32.mrb[0].mxu0
    %v442 = vadd.f32 %v152, %v441
    %443 = vmatprep.mubr.f32.mxu0 0.0
    %444 = vmatmul.mubr.f32.gmra.mrb[0].mxu0 %v182
    %v445 = vpop.f32.mrb[0].mxu0
    %v446 = vadd.f32 %v157, %v445
    %v447 = vpop.f32.mrb[0].mxu0
    %v448 = vadd.f32 %v157, %v447
    %449 = vdwg.mxu0
    %450 = vmatprep.subr.mxu0 %v82
    %451 = vmatpush1.msra.mxu0 %v81
    %452 = vmatprep.subr.mxu0 %v201
    %453 = vmatpush1.msra.mxu0 %v198
    %454 = vmatprep.subr.mxu0 0.0
    %455 = vmatpush1.msra.mxu0 0.0
    %456 = vmatprep.subr.mxu0 0.0
    %457 = vmatpush1.msra.mxu0 0.0
    %458 = vmatprep.subr.mxu0 0.0
    %459 = vmatpush1.msra.mxu0 0.0
    %460 = vmatprep.subr.mxu0 0.0
    %461 = vmatpush1.msra.mxu0 0.0
    %462 = vmatprep.subr.mxu0 0.0
    %463 = vmatpush1.msra.mxu0 0.0
    %464 = vmatprep.subr.mxu0 0.0
    %465 = vmatpush1.msra.mxu0 0.0
    %466 = vmatprep.subr.mxu0 0.0
    %467 = vmatpush1.msra.mxu0 0.0
    %468 = vmatprep.subr.mxu0 0.0
    %469 = vmatpush1.msra.mxu0 0.0
    %470 = vmatprep.subr.mxu0 0.0
    %471 = vmatpush1.msra.mxu0 0.0
    %472 = vmatprep.subr.mxu0 0.0
    %473 = vmatpush1.msra.mxu0 0.0
    %474 = vmatprep.subr.mxu0 0.0
    %475 = vmatpush1.msra.mxu0 0.0
    %476 = vmatprep.subr.mxu0 0.0
    %477 = vmatpush1.msra.mxu0 0.0
    %478 = vmatprep.subr.mxu0 0.0
    %479 = vmatpush1.msra.mxu0 0.0
    %480 = vmatprep.subr.mxu0 0.0
    %481 = vmatpush1.msra.mxu0 0.0
    %482 = vmatprep.subr.mxu0 0.0
    %483 = vmatpush1.msra.mxu0 0.0
    %484 = vmatprep.subr.mxu0 0.0
    %485 = vmatpush1.msra.mxu0 0.0
    %486 = vmatprep.subr.mxu0 0.0
    %487 = vmatpush1.msra.mxu0 0.0
    %488 = vmatprep.subr.mxu0 0.0
    %489 = vmatpush1.msra.mxu0 0.0
    %490 = vmatprep.subr.mxu0 0.0
    %491 = vmatpush1.msra.mxu0 0.0
    %492 = vmatprep.subr.mxu0 0.0
    %493 = vmatpush1.msra.mxu0 0.0
    %494 = vmatprep.subr.mxu0 0.0
    %495 = vmatpush1.msra.mxu0 0.0
    %496 = vmatprep.subr.mxu0 0.0
    %497 = vmatpush1.msra.mxu0 0.0
    %498 = vmatprep.subr.mxu0 0.0
    %499 = vmatpush1.msra.mxu0 0.0
    %500 = vmatprep.subr.mxu0 0.0
    %501 = vmatpush1.msra.mxu0 0.0
    %502 = vmatprep.subr.mxu0 0.0
    %503 = vmatpush1.msra.mxu0 0.0
    %504 = vmatprep.subr.mxu0 0.0
    %505 = vmatpush1.msra.mxu0 0.0
    %506 = vmatprep.subr.mxu0 0.0
    %507 = vmatpush1.msra.mxu0 0.0
    %508 = vmatprep.subr.mxu0 0.0
    %509 = vmatpush1.msra.mxu0 0.0
    %510 = vmatprep.subr.mxu0 0.0
    %511 = vmatpush1.msra.mxu0 0.0
    %512 = vmatprep.subr.mxu0 0.0
    %513 = vmatpush1.msra.mxu0 0.0
    %514 = vmatprep.mubr.f32.mxu0 0.0
    %515 = vmatmul.mubr.f32.gmra.mrb[0].mxu0 %v161
    %v516 = vpop.f32.mrb[0].mxu0
    %v517 = vadd.f32 %v122, %v516
    %v518 = vpop.f32.mrb[0].mxu0
    %v519 = vadd.f32 %v122, %v518
    %520 = vmatprep.mubr.f32.mxu0 0.0
    %521 = vmatmul.mubr.f32.gmra.mrb[0].mxu0 %v164
    %v522 = vpop.f32.mrb[0].mxu0
    %v523 = vadd.f32 %v127, %v522
    %v524 = vpop.f32.mrb[0].mxu0
    %v525 = vadd.f32 %v127, %v524
    %526 = vmatprep.mubr.f32.mxu0 0.0
    %527 = vmatmul.mubr.f32.gmra.mrb[0].mxu0 %v167
    %v528 = vpop.f32.mrb[0].mxu0
    %v529 = vadd.f32 %v132, %v528
    %v530 = vpop.f32.mrb[0].mxu0
    %v531 = vadd.f32 %v132, %v530
    %532 = vmatprep.mubr.f32.mxu0 0.0
    %533 = vmatmul.mubr.f32.gmra.mrb[0].mxu0 %v170
    %v534 = vpop.f32.mrb[0].mxu0
    %v535 = vadd.f32 %v137, %v534
    %v536 = vpop.f32.mrb[0].mxu0
    %v537 = vadd.f32 %v137, %v536
    %538 = vmatprep.mubr.f32.mxu0 0.0
    %539 = vmatmul.mubr.f32.gmra.mrb[0].mxu0 %v173
    %v540 = vpop.f32.mrb[0].mxu0
    %v541 = vadd.f32 %v142, %v540
    %v542 = vpop.f32.mrb[0].mxu0
    %v543 = vadd.f32 %v142, %v542
    %544 = vmatprep.mubr.f32.mxu0 0.0
    %545 = vmatmul.mubr.f32.gmra.mrb[0].mxu0 %v176
    %v546 = vpop.f32.mrb[0].mxu0
    %v547 = vadd.f32 %v147, %v546
    %v548 = vpop.f32.mrb[0].mxu0
    %v549 = vadd.f32 %v147, %v548
    %550 = vmatprep.mubr.f32.mxu0 0.0
    %551 = vmatmul.mubr.f32.gmra.mrb[0].mxu0 %v179
    %v552 = vpop.f32.mrb[0].mxu0
    %v553 = vadd.f32 %v152, %v552
    %v554 = vpop.f32.mrb[0].mxu0
    %v555 = vadd.f32 %v152, %v554
    %556 = vmatprep.mubr.f32.mxu0 0.0
    %557 = vmatmul.mubr.f32.gmra.mrb[0].mxu0 %v182
    %v558 = vpop.f32.mrb[0].mxu0
    %v559 = vadd.f32 %v157, %v558
    %v560 = vpop.f32.mrb[0].mxu0
    %v561 = vadd.f32 %v157, %v560
    %562 = vdwg.mxu0
    %563 = vmatprep.subr.mxu0 %v84
    %564 = vmatpush1.msra.mxu0 %v83
    %565 = vmatprep.subr.mxu0 %v207
    %566 = vmatpush1.msra.mxu0 %v204
    %567 = vmatprep.subr.mxu0 0.0
    %568 = vmatpush1.msra.mxu0 0.0
    %569 = vmatprep.subr.mxu0 0.0
    %570 = vmatpush1.msra.mxu0 0.0
    %571 = vmatprep.subr.mxu0 0.0
    %572 = vmatpush1.msra.mxu0 0.0
    %573 = vmatprep.subr.mxu0 0.0
    %574 = vmatpush1.msra.mxu0 0.0
    %575 = vmatprep.subr.mxu0 0.0
    %576 = vmatpush1.msra.mxu0 0.0
    %577 = vmatprep.subr.mxu0 0.0
    %578 = vmatpush1.msra.mxu0 0.0
    %579 = vmatprep.subr.mxu0 0.0
    %580 = vmatpush1.msra.mxu0 0.0
    %581 = vmatprep.subr.mxu0 0.0
    %582 = vmatpush1.msra.mxu0 0.0
    %583 = vmatprep.subr.mxu0 0.0
    %584 = vmatpush1.msra.mxu0 0.0
    %585 = vmatprep.subr.mxu0 0.0
    %586 = vmatpush1.msra.mxu0 0.0
    %587 = vmatprep.subr.mxu0 0.0
    %588 = vmatpush1.msra.mxu0 0.0
    %589 = vmatprep.subr.mxu0 0.0
    %590 = vmatpush1.msra.mxu0 0.0
    %591 = vmatprep.subr.mxu0 0.0
    %592 = vmatpush1.msra.mxu0 0.0
    %593 = vmatprep.subr.mxu0 0.0
    %594 = vmatpush1.msra.mxu0 0.0
    %595 = vmatprep.subr.mxu0 0.0
    %596 = vmatpush1.msra.mxu0 0.0
    %597 = vmatprep.subr.mxu0 0.0
    %598 = vmatpush1.msra.mxu0 0.0
    %599 = vmatprep.subr.mxu0 0.0
    %600 = vmatpush1.msra.mxu0 0.0
    %601 = vmatprep.subr.mxu0 0.0
    %602 = vmatpush1.msra.mxu0 0.0
    %603 = vmatprep.subr.mxu0 0.0
    %604 = vmatpush1.msra.mxu0 0.0
    %605 = vmatprep.subr.mxu0 0.0
    %606 = vmatpush1.msra.mxu0 0.0
    %607 = vmatprep.subr.mxu0 0.0
    %608 = vmatpush1.msra.mxu0 0.0
    %609 = vmatprep.subr.mxu0 0.0
    %610 = vmatpush1.msra.mxu0 0.0
    %611 = vmatprep.subr.mxu0 0.0
    %612 = vmatpush1.msra.mxu0 0.0
    %613 = vmatprep.subr.mxu0 0.0
    %614 = vmatpush1.msra.mxu0 0.0
    %615 = vmatprep.subr.mxu0 0.0
    %616 = vmatpush1.msra.mxu0 0.0
    %617 = vmatprep.subr.mxu0 0.0
    %618 = vmatpush1.msra.mxu0 0.0
    %619 = vmatprep.subr.mxu0 0.0
    %620 = vmatpush1.msra.mxu0 0.0
    %621 = vmatprep.subr.mxu0 0.0
    %622 = vmatpush1.msra.mxu0 0.0
    %623 = vmatprep.subr.mxu0 0.0
    %624 = vmatpush1.msra.mxu0 0.0
    %625 = vmatprep.subr.mxu0 0.0
    %626 = vmatpush1.msra.mxu0 0.0
    %627 = vmatprep.mubr.f32.mxu0 0.0
    %628 = vmatmul.mubr.f32.gmra.mrb[0].mxu0 %v161
    %v629 = vpop.f32.mrb[0].mxu0
    %v630 = vadd.f32 %v122, %v629
    %v631 = vpop.f32.mrb[0].mxu0
    %v632 = vadd.f32 %v122, %v631
    %633 = vmatprep.mubr.f32.mxu0 0.0
    %634 = vmatmul.mubr.f32.gmra.mrb[0].mxu0 %v164
    %v635 = vpop.f32.mrb[0].mxu0
    %v636 = vadd.f32 %v127, %v635
    %v637 = vpop.f32.mrb[0].mxu0
    %v638 = vadd.f32 %v127, %v637
    %639 = vmatprep.mubr.f32.mxu0 0.0
    %640 = vmatmul.mubr.f32.gmra.mrb[0].mxu0 %v167
    %v641 = vpop.f32.mrb[0].mxu0
    %v642 = vadd.f32 %v132, %v641
    %v643 = vpop.f32.mrb[0].mxu0
    %v644 = vadd.f32 %v132, %v643
    %645 = vmatprep.mubr.f32.mxu0 0.0
    %646 = vmatmul.mubr.f32.gmra.mrb[0].mxu0 %v170
    %v647 = vpop.f32.mrb[0].mxu0
    %v648 = vadd.f32 %v137, %v647
    %v649 = vpop.f32.mrb[0].mxu0
    %v650 = vadd.f32 %v137, %v649
    %651 = vmatprep.mubr.f32.mxu0 0.0
    %652 = vmatmul.mubr.f32.gmra.mrb[0].mxu0 %v173
    %v653 = vpop.f32.mrb[0].mxu0
    %v654 = vadd.f32 %v142, %v653
    %v655 = vpop.f32.mrb[0].mxu0
    %v656 = vadd.f32 %v142, %v655
    %657 = vmatprep.mubr.f32.mxu0 0.0
    %658 = vmatmul.mubr.f32.gmra.mrb[0].mxu0 %v176
    %v659 = vpop.f32.mrb[0].mxu0
    %v660 = vadd.f32 %v147, %v659
    %v661 = vpop.f32.mrb[0].mxu0
    %v662 = vadd.f32 %v147, %v661
    %663 = vmatprep.mubr.f32.mxu0 0.0
    %664 = vmatmul.mubr.f32.gmra.mrb[0].mxu0 %v179
    %v665 = vpop.f32.mrb[0].mxu0
    %v666 = vadd.f32 %v152, %v665
    %v667 = vpop.f32.mrb[0].mxu0
    %v668 = vadd.f32 %v152, %v667
    %669 = vmatprep.mubr.f32.mxu0 0.0
    %670 = vmatmul.mubr.f32.gmra.mrb[0].mxu0 %v182
    %v671 = vpop.f32.mrb[0].mxu0
    %v672 = vadd.f32 %v157, %v671
    %v673 = vpop.f32.mrb[0].mxu0
    %v674 = vadd.f32 %v157, %v673
    %675 = vdwg.mxu0
    %676 = vmatprep.subr.mxu0 %v86
    %677 = vmatpush1.msra.mxu0 %v85
    %678 = vmatprep.subr.mxu0 %v213
    %679 = vmatpush1.msra.mxu0 %v210
    %680 = vmatprep.subr.mxu0 0.0
    %681 = vmatpush1.msra.mxu0 0.0
    %682 = vmatprep.subr.mxu0 0.0
    %683 = vmatpush1.msra.mxu0 0.0
    %684 = vmatprep.subr.mxu0 0.0
    %685 = vmatpush1.msra.mxu0 0.0
    %686 = vmatprep.subr.mxu0 0.0
    %687 = vmatpush1.msra.mxu0 0.0
    %688 = vmatprep.subr.mxu0 0.0
    %689 = vmatpush1.msra.mxu0 0.0
    %690 = vmatprep.subr.mxu0 0.0
    %691 = vmatpush1.msra.mxu0 0.0
    %692 = vmatprep.subr.mxu0 0.0
    %693 = vmatpush1.msra.mxu0 0.0
    %694 = vmatprep.subr.mxu0 0.0
    %695 = vmatpush1.msra.mxu0 0.0
    %696 = vmatprep.subr.mxu0 0.0
    %697 = vmatpush1.msra.mxu0 0.0
    %698 = vmatprep.subr.mxu0 0.0
    %699 = vmatpush1.msra.mxu0 0.0
    %700 = vmatprep.subr.mxu0 0.0
    %701 = vmatpush1.msra.mxu0 0.0
    %702 = vmatprep.subr.mxu0 0.0
    %703 = vmatpush1.msra.mxu0 0.0
    %704 = vmatprep.subr.mxu0 0.0
    %705 = vmatpush1.msra.mxu0 0.0
    %706 = vmatprep.subr.mxu0 0.0
    %707 = vmatpush1.msra.mxu0 0.0
    %708 = vmatprep.subr.mxu0 0.0
    %709 = vmatpush1.msra.mxu0 0.0
    %710 = vmatprep.subr.mxu0 0.0
    %711 = vmatpush1.msra.mxu0 0.0
    %712 = vmatprep.subr.mxu0 0.0
    %713 = vmatpush1.msra.mxu0 0.0
    %714 = vmatprep.subr.mxu0 0.0
    %715 = vmatpush1.msra.mxu0 0.0
    %716 = vmatprep.subr.mxu0 0.0
    %717 = vmatpush1.msra.mxu0 0.0
    %718 = vmatprep.subr.mxu0 0.0
    %719 = vmatpush1.msra.mxu0 0.0
    %720 = vmatprep.subr.mxu0 0.0
    %721 = vmatpush1.msra.mxu0 0.0
    %722 = vmatprep.subr.mxu0 0.0
    %723 = vmatpush1.msra.mxu0 0.0
    %724 = vmatprep.subr.mxu0 0.0
    %725 = vmatpush1.msra.mxu0 0.0
    %726 = vmatprep.subr.mxu0 0.0
    %727 = vmatpush1.msra.mxu0 0.0
    %728 = vmatprep.subr.mxu0 0.0
    %729 = vmatpush1.msra.mxu0 0.0
    %730 = vmatprep.subr.mxu0 0.0
    %731 = vmatpush1.msra.mxu0 0.0
    %732 = vmatprep.subr.mxu0 0.0
    %733 = vmatpush1.msra.mxu0 0.0
    %734 = vmatprep.subr.mxu0 0.0
    %735 = vmatpush1.msra.mxu0 0.0
    %736 = vmatprep.subr.mxu0 0.0
    %737 = vmatpush1.msra.mxu0 0.0
    %738 = vmatprep.subr.mxu0 0.0
    %739 = vmatpush1.msra.mxu0 0.0
    %740 = vmatprep.mubr.f32.mxu0 0.0
    %741 = vmatmul.mubr.f32.gmra.mrb[0].mxu0 %v161
    %v742 = vpop.f32.mrb[0].mxu0
    %v743 = vadd.f32 %v122, %v742
    %v744 = vpop.f32.mrb[0].mxu0
    %v745 = vadd.f32 %v122, %v744
    %746 = vmatprep.mubr.f32.mxu0 0.0
    %747 = vmatmul.mubr.f32.gmra.mrb[0].mxu0 %v164
    %v748 = vpop.f32.mrb[0].mxu0
    %v749 = vadd.f32 %v127, %v748
    %v750 = vpop.f32.mrb[0].mxu0
    %v751 = vadd.f32 %v127, %v750
    %752 = vmatprep.mubr.f32.mxu0 0.0
    %753 = vmatmul.mubr.f32.gmra.mrb[0].mxu0 %v167
    %v754 = vpop.f32.mrb[0].mxu0
    %v755 = vadd.f32 %v132, %v754
    %v756 = vpop.f32.mrb[0].mxu0
    %v757 = vadd.f32 %v132, %v756
    %758 = vmatprep.mubr.f32.mxu0 0.0
    %759 = vmatmul.mubr.f32.gmra.mrb[0].mxu0 %v170
    %v760 = vpop.f32.mrb[0].mxu0
    %v761 = vadd.f32 %v137, %v760
    %v762 = vpop.f32.mrb[0].mxu0
    %v763 = vadd.f32 %v137, %v762
    %764 = vmatprep.mubr.f32.mxu0 0.0
    %765 = vmatmul.mubr.f32.gmra.mrb[0].mxu0 %v173
    %v766 = vpop.f32.mrb[0].mxu0
    %v767 = vadd.f32 %v142, %v766
    %v768 = vpop.f32.mrb[0].mxu0
    %v769 = vadd.f32 %v142, %v768
    %770 = vmatprep.mubr.f32.mxu0 0.0
    %771 = vmatmul.mubr.f32.gmra.mrb[0].mxu0 %v176
    %v772 = vpop.f32.mrb[0].mxu0
    %v773 = vadd.f32 %v147, %v772
    %v774 = vpop.f32.mrb[0].mxu0
    %v775 = vadd.f32 %v147, %v774
    %776 = vmatprep.mubr.f32.mxu0 0.0
    %777 = vmatmul.mubr.f32.gmra.mrb[0].mxu0 %v179
    %v778 = vpop.f32.mrb[0].mxu0
    %v779 = vadd.f32 %v152, %v778
    %v780 = vpop.f32.mrb[0].mxu0
    %v781 = vadd.f32 %v152, %v780
    %782 = vmatprep.mubr.f32.mxu0 0.0
    %783 = vmatmul.mubr.f32.gmra.mrb[0].mxu0 %v182
    %v784 = vpop.f32.mrb[0].mxu0
    %v785 = vadd.f32 %v157, %v784
    %v786 = vpop.f32.mrb[0].mxu0
    %v787 = vadd.f32 %v157, %v786
    %788 = vdwg.mxu0
    %789 = vmatprep.subr.mxu0 %v88
    %790 = vmatpush1.msra.mxu0 %v87
    %791 = vmatprep.subr.mxu0 %v219
    %792 = vmatpush1.msra.mxu0 %v216
    %793 = vmatprep.subr.mxu0 0.0
    %794 = vmatpush1.msra.mxu0 0.0
    %795 = vmatprep.subr.mxu0 0.0
    %796 = vmatpush1.msra.mxu0 0.0
    %797 = vmatprep.subr.mxu0 0.0
    %798 = vmatpush1.msra.mxu0 0.0
    %799 = vmatprep.subr.mxu0 0.0
    %800 = vmatpush1.msra.mxu0 0.0
    %801 = vmatprep.subr.mxu0 0.0
    %802 = vmatpush1.msra.mxu0 0.0
    %803 = vmatprep.subr.mxu0 0.0
    %804 = vmatpush1.msra.mxu0 0.0
    %805 = vmatprep.subr.mxu0 0.0
    %806 = vmatpush1.msra.mxu0 0.0
    %807 = vmatprep.subr.mxu0 0.0
    %808 = vmatpush1.msra.mxu0 0.0
    %809 = vmatprep.subr.mxu0 0.0
    %810 = vmatpush1.msra.mxu0 0.0
    %811 = vmatprep.subr.mxu0 0.0
    %812 = vmatpush1.msra.mxu0 0.0
    %813 = vmatprep.subr.mxu0 0.0
    %814 = vmatpush1.msra.mxu0 0.0
    %815 = vmatprep.subr.mxu0 0.0
    %816 = vmatpush1.msra.mxu0 0.0
    %817 = vmatprep.subr.mxu0 0.0
    %818 = vmatpush1.msra.mxu0 0.0
    %819 = vmatprep.subr.mxu0 0.0
    %820 = vmatpush1.msra.mxu0 0.0
    %821 = vmatprep.subr.mxu0 0.0
    %822 = vmatpush1.msra.mxu0 0.0
    %823 = vmatprep.subr.mxu0 0.0
    %824 = vmatpush1.msra.mxu0 0.0
    %825 = vmatprep.subr.mxu0 0.0
    %826 = vmatpush1.msra.mxu0 0.0
    %827 = vmatprep.subr.mxu0 0.0
    %828 = vmatpush1.msra.mxu0 0.0
    %829 = vmatprep.subr.mxu0 0.0
    %830 = vmatpush1.msra.mxu0 0.0
    %831 = vmatprep.subr.mxu0 0.0
    %832 = vmatpush1.msra.mxu0 0.0
    %833 = vmatprep.subr.mxu0 0.0
    %834 = vmatpush1.msra.mxu0 0.0
    %835 = vmatprep.subr.mxu0 0.0
    %836 = vmatpush1.msra.mxu0 0.0
    %837 = vmatprep.subr.mxu0 0.0
    %838 = vmatpush1.msra.mxu0 0.0
    %839 = vmatprep.subr.mxu0 0.0
    %840 = vmatpush1.msra.mxu0 0.0
    %841 = vmatprep.subr.mxu0 0.0
    %842 = vmatpush1.msra.mxu0 0.0
    %843 = vmatprep.subr.mxu0 0.0
    %844 = vmatpush1.msra.mxu0 0.0
    %845 = vmatprep.subr.mxu0 0.0
    %846 = vmatpush1.msra.mxu0 0.0
    %847 = vmatprep.subr.mxu0 0.0
    %848 = vmatpush1.msra.mxu0 0.0
    %849 = vmatprep.subr.mxu0 0.0
    %850 = vmatpush1.msra.mxu0 0.0
    %851 = vmatprep.subr.mxu0 0.0
    %852 = vmatpush1.msra.mxu0 0.0
    %853 = vmatprep.mubr.f32.mxu0 0.0
    %854 = vmatmul.mubr.f32.gmra.mrb[0].mxu0 %v161
    %v855 = vpop.f32.mrb[0].mxu0
    %v856 = vadd.f32 %v122, %v855
    %v857 = vpop.f32.mrb[0].mxu0
    %v858 = vadd.f32 %v122, %v857
    %859 = vmatprep.mubr.f32.mxu0 0.0
    %860 = vmatmul.mubr.f32.gmra.mrb[0].mxu0 %v164
    %v861 = vpop.f32.mrb[0].mxu0
    %v862 = vadd.f32 %v127, %v861
    %v863 = vpop.f32.mrb[0].mxu0
    %v864 = vadd.f32 %v127, %v863
    %865 = vmatprep.mubr.f32.mxu0 0.0
    %866 = vmatmul.mubr.f32.gmra.mrb[0].mxu0 %v167
    %v867 = vpop.f32.mrb[0].mxu0
    %v868 = vadd.f32 %v132, %v867
    %v869 = vpop.f32.mrb[0].mxu0
    %v870 = vadd.f32 %v132, %v869
    %871 = vmatprep.mubr.f32.mxu0 0.0
    %872 = vmatmul.mubr.f32.gmra.mrb[0].mxu0 %v170
    %v873 = vpop.f32.mrb[0].mxu0
    %v874 = vadd.f32 %v137, %v873
    %v875 = vpop.f32.mrb[0].mxu0
    %v876 = vadd.f32 %v137, %v875
    %877 = vmatprep.mubr.f32.mxu0 0.0
    %878 = vmatmul.mubr.f32.gmra.mrb[0].mxu0 %v173
    %v879 = vpop.f32.mrb[0].mxu0
    %v880 = vadd.f32 %v142, %v879
    %v881 = vpop.f32.mrb[0].mxu0
    %v882 = vadd.f32 %v142, %v881
    %883 = vmatprep.mubr.f32.mxu0 0.0
    %884 = vmatmul.mubr.f32.gmra.mrb[0].mxu0 %v176
    %v885 = vpop.f32.mrb[0].mxu0
    %v886 = vadd.f32 %v147, %v885
    %v887 = vpop.f32.mrb[0].mxu0
    %v888 = vadd.f32 %v147, %v887
    %889 = vmatprep.mubr.f32.mxu0 0.0
    %890 = vmatmul.mubr.f32.gmra.mrb[0].mxu0 %v179
    %v891 = vpop.f32.mrb[0].mxu0
    %v892 = vadd.f32 %v152, %v891
    %v893 = vpop.f32.mrb[0].mxu0
    %v894 = vadd.f32 %v152, %v893
    %895 = vmatprep.mubr.f32.mxu0 0.0
    %896 = vmatmul.mubr.f32.gmra.mrb[0].mxu0 %v182
    %v897 = vpop.f32.mrb[0].mxu0
    %v898 = vadd.f32 %v157, %v897
    %v899 = vpop.f32.mrb[0].mxu0
    %v900 = vadd.f32 %v157, %v899
    %901 = vdwg.mxu0
    %902 = vmatprep.subr.mxu0 0.0
    %903 = vmatpush1.msra.mxu0 %v89
    %904 = vmatprep.subr.mxu0 0.0
    %905 = vmatpush1.msra.mxu0 %v222
    %906 = vmatprep.subr.mxu0 0.0
    %907 = vmatpush1.msra.mxu0 0.0
    %908 = vmatprep.subr.mxu0 0.0
    %909 = vmatpush1.msra.mxu0 0.0
    %910 = vmatprep.subr.mxu0 0.0
    %911 = vmatpush1.msra.mxu0 0.0
    %912 = vmatprep.subr.mxu0 0.0
    %913 = vmatpush1.msra.mxu0 0.0
    %914 = vmatprep.subr.mxu0 0.0
    %915 = vmatpush1.msra.mxu0 0.0
    %916 = vmatprep.subr.mxu0 0.0
    %917 = vmatpush1.msra.mxu0 0.0
    %918 = vmatprep.subr.mxu0 0.0
    %919 = vmatpush1.msra.mxu0 0.0
    %920 = vmatprep.subr.mxu0 0.0
    %921 = vmatpush1.msra.mxu0 0.0
    %922 = vmatprep.subr.mxu0 0.0
    %923 = vmatpush1.msra.mxu0 0.0
    %924 = vmatprep.subr.mxu0 0.0
    %925 = vmatpush1.msra.mxu0 0.0
    %926 = vmatprep.subr.mxu0 0.0
    %927 = vmatpush1.msra.mxu0 0.0
    %928 = vmatprep.subr.mxu0 0.0
    %929 = vmatpush1.msra.mxu0 0.0
    %930 = vmatprep.subr.mxu0 0.0
    %931 = vmatpush1.msra.mxu0 0.0
    %932 = vmatprep.subr.mxu0 0.0
    %933 = vmatpush1.msra.mxu0 0.0
    %934 = vmatprep.subr.mxu0 0.0
    %935 = vmatpush1.msra.mxu0 0.0
    %936 = vmatprep.subr.mxu0 0.0
    %937 = vmatpush1.msra.mxu0 0.0
    %938 = vmatprep.subr.mxu0 0.0
    %939 = vmatpush1.msra.mxu0 0.0
    %940 = vmatprep.subr.mxu0 0.0
    %941 = vmatpush1.msra.mxu0 0.0
    %942 = vmatprep.subr.mxu0 0.0
    %943 = vmatpush1.msra.mxu0 0.0
    %944 = vmatprep.subr.mxu0 0.0
    %945 = vmatpush1.msra.mxu0 0.0
    %946 = vmatprep.subr.mxu0 0.0
    %947 = vmatpush1.msra.mxu0 0.0
    %948 = vmatprep.subr.mxu0 0.0
    %949 = vmatpush1.msra.mxu0 0.0
    %950 = vmatprep.subr.mxu0 0.0
    %951 = vmatpush1.msra.mxu0 0.0
    %952 = vmatprep.subr.mxu0 0.0
    %953 = vmatpush1.msra.mxu0 0.0
    %954 = vmatprep.subr.mxu0 0.0
    %955 = vmatpush1.msra.mxu0 0.0
    %956 = vmatprep.subr.mxu0 0.0
    %957 = vmatpush1.msra.mxu0 0.0
    %958 = vmatprep.subr.mxu0 0.0
    %959 = vmatpush1.msra.mxu0 0.0
    %960 = vmatprep.subr.mxu0 0.0
    %961 = vmatpush1.msra.mxu0 0.0
    %962 = vmatprep.subr.mxu0 0.0
    %963 = vmatpush1.msra.mxu0 0.0
    %964 = vmatprep.subr.mxu0 0.0
    %965 = vmatpush1.msra.mxu0 0.0
    %966 = vmatprep.mubr.f32.mxu0 0.0
    %967 = vmatmul.mubr.f32.gmra.mrb[0].mxu0 %v161
    %v968 = vpop.f32.mrb[0].mxu0
    %v969 = vadd.f32 %v122, %v968
    %v970 = vpop.f32.mrb[0].mxu0
    %971 = vmatprep.mubr.f32.mxu0 0.0
    %972 = vmatmul.mubr.f32.gmra.mrb[0].mxu0 %v164
    %v973 = vpop.f32.mrb[0].mxu0
    %v974 = vadd.f32 %v127, %v973
    %v975 = vpop.f32.mrb[0].mxu0
    %976 = vmatprep.mubr.f32.mxu0 0.0
    %977 = vmatmul.mubr.f32.gmra.mrb[0].mxu0 %v167
    %v978 = vpop.f32.mrb[0].mxu0
    %v979 = vadd.f32 %v132, %v978
    %v980 = vpop.f32.mrb[0].mxu0
    %981 = vmatprep.mubr.f32.mxu0 0.0
    %982 = vmatmul.mubr.f32.gmra.mrb[0].mxu0 %v170
    %v983 = vpop.f32.mrb[0].mxu0
    %v984 = vadd.f32 %v137, %v983
    %v985 = vpop.f32.mrb[0].mxu0
    %986 = vmatprep.mubr.f32.mxu0 0.0
    %987 = vmatmul.mubr.f32.gmra.mrb[0].mxu0 %v173
    %v988 = vpop.f32.mrb[0].mxu0
    %v989 = vadd.f32 %v142, %v988
    %v990 = vpop.f32.mrb[0].mxu0
    %991 = vmatprep.mubr.f32.mxu0 0.0
    %992 = vmatmul.mubr.f32.gmra.mrb[0].mxu0 %v176
    %v993 = vpop.f32.mrb[0].mxu0
    %v994 = vadd.f32 %v147, %v993
    %v995 = vpop.f32.mrb[0].mxu0
    %996 = vmatprep.mubr.f32.mxu0 0.0
    %997 = vmatmul.mubr.f32.gmra.mrb[0].mxu0 %v179
    %v998 = vpop.f32.mrb[0].mxu0
    %v999 = vadd.f32 %v152, %v998
    %v1000 = vpop.f32.mrb[0].mxu0
    %1001 = vmatprep.mubr.f32.mxu0 0.0
    %1002 = vmatmul.mubr.f32.gmra.mrb[0].mxu0 %v182
    %v1003 = vpop.f32.mrb[0].mxu0
    %v1004 = vadd.f32 %v157, %v1003
    %v1005 = vpop.f32.mrb[0].mxu0
    %1006 = vdwg.mxu0
    %v1007 = vmax.f32 %v291, 0.0
    %v1008 = vmax.f32 %v293, 0.0
    %v1009 = vmax.f32 %v404, 0.0
    %v1010 = vmax.f32 %v406, 0.0
    %v1011 = vmax.f32 %v517, 0.0
    %v1012 = vmax.f32 %v519, 0.0
    %v1013 = vmax.f32 %v630, 0.0
    %v1014 = vmax.f32 %v632, 0.0
    %v1015 = vmax.f32 %v743, 0.0
    %v1016 = vmax.f32 %v745, 0.0
    %v1017 = vmax.f32 %v856, 0.0
    %v1018 = vmax.f32 %v858, 0.0
    %v1019 = vmax.f32 %v969, 0.0
    %v1020 = vmax.f32 %v297, 0.0
    %v1021 = vmax.f32 %v299, 0.0
    %v1022 = vmax.f32 %v410, 0.0
    %v1023 = vmax.f32 %v412, 0.0
    %v1024 = vmax.f32 %v523, 0.0
    %v1025 = vmax.f32 %v525, 0.0
    %v1026 = vmax.f32 %v636, 0.0
    %v1027 = vmax.f32 %v638, 0.0
    %v1028 = vmax.f32 %v749, 0.0
    %v1029 = vmax.f32 %v751, 0.0
    %v1030 = vmax.f32 %v862, 0.0
    %v1031 = vmax.f32 %v864, 0.0
    %v1032 = vmax.f32 %v974, 0.0
    %v1033 = vmax.f32 %v303, 0.0
    %v1034 = vmax.f32 %v305, 0.0
    %v1035 = vmax.f32 %v416, 0.0
    %v1036 = vmax.f32 %v418, 0.0
    %v1037 = vmax.f32 %v529, 0.0
    %v1038 = vmax.f32 %v531, 0.0
    %v1039 = vmax.f32 %v642, 0.0
    %v1040 = vmax.f32 %v644, 0.0
    %v1041 = vmax.f32 %v755, 0.0
    %v1042 = vmax.f32 %v757, 0.0
    %v1043 = vmax.f32 %v868, 0.0
    %v1044 = vmax.f32 %v870, 0.0
    %v1045 = vmax.f32 %v979, 0.0
    %v1046 = vmax.f32 %v309, 0.0
    %v1047 = vmax.f32 %v311, 0.0
    %v1048 = vmax.f32 %v422, 0.0
    %v1049 = vmax.f32 %v424, 0.0
    %v1050 = vmax.f32 %v535, 0.0
    %v1051 = vmax.f32 %v537, 0.0
    %v1052 = vmax.f32 %v648, 0.0
    %v1053 = vmax.f32 %v650, 0.0
    %v1054 = vmax.f32 %v761, 0.0
    %v1055 = vmax.f32 %v763, 0.0
    %v1056 = vmax.f32 %v874, 0.0
    %v1057 = vmax.f32 %v876, 0.0
    %v1058 = vmax.f32 %v984, 0.0
    %v1059 = vmax.f32 %v315, 0.0
    %v1060 = vmax.f32 %v317, 0.0
    %v1061 = vmax.f32 %v428, 0.0
    %v1062 = vmax.f32 %v430, 0.0
    %v1063 = vmax.f32 %v541, 0.0
    %v1064 = vmax.f32 %v543, 0.0
    %v1065 = vmax.f32 %v654, 0.0
    %v1066 = vmax.f32 %v656, 0.0
    %v1067 = vmax.f32 %v767, 0.0
    %v1068 = vmax.f32 %v769, 0.0
    %v1069 = vmax.f32 %v880, 0.0
    %v1070 = vmax.f32 %v882, 0.0
    %v1071 = vmax.f32 %v989, 0.0
    %v1072 = vmax.f32 %v321, 0.0
    %v1073 = vmax.f32 %v323, 0.0
    %v1074 = vmax.f32 %v434, 0.0
    %v1075 = vmax.f32 %v436, 0.0
    %v1076 = vmax.f32 %v547, 0.0
    %v1077 = vmax.f32 %v549, 0.0
    %v1078 = vmax.f32 %v660, 0.0
    %v1079 = vmax.f32 %v662, 0.0
    %v1080 = vmax.f32 %v773, 0.0
    %v1081 = vmax.f32 %v775, 0.0
    %v1082 = vmax.f32 %v886, 0.0
    %v1083 = vmax.f32 %v888, 0.0
    %v1084 = vmax.f32 %v994, 0.0
    %v1085 = vmax.f32 %v327, 0.0
    %v1086 = vmax.f32 %v329, 0.0
    %v1087 = vmax.f32 %v440, 0.0
    %v1088 = vmax.f32 %v442, 0.0
    %v1089 = vmax.f32 %v553, 0.0
    %v1090 = vmax.f32 %v555, 0.0
    %v1091 = vmax.f32 %v666, 0.0
    %v1092 = vmax.f32 %v668, 0.0
    %v1093 = vmax.f32 %v779, 0.0
    %v1094 = vmax.f32 %v781, 0.0
    %v1095 = vmax.f32 %v892, 0.0
    %v1096 = vmax.f32 %v894, 0.0
    %v1097 = vmax.f32 %v999, 0.0
    %v1098 = vmax.f32 %v333, 0.0
    %v1099 = vmax.f32 %v335, 0.0
    %v1100 = vmax.f32 %v446, 0.0
    %v1101 = vmax.f32 %v448, 0.0
    %v1102 = vmax.f32 %v559, 0.0
    %v1103 = vmax.f32 %v561, 0.0
    %v1104 = vmax.f32 %v672, 0.0
    %v1105 = vmax.f32 %v674, 0.0
    %v1106 = vmax.f32 %v785, 0.0
    %v1107 = vmax.f32 %v787, 0.0
    %v1108 = vmax.f32 %v898, 0.0
    %v1109 = vmax.f32 %v900, 0.0
    %v1110 = vmax.f32 %v1004, 0.0
    %v1111 = vld [vmem:[#allocation6] sm:$0xff]
    %v1112 = vld [vmem:[#allocation6 + $0x8] sm:$0xff]
    %v1113 = vld [vmem:[#allocation6 + $0x10] sm:$0xff]
    %v1114 = vld [vmem:[#allocation6 + $0x18] sm:$0xff]
    %v1115 = vld [vmem:[%s5] sm:$0xff]
    %v1116 = vld [vmem:[%s5 + $0x8] sm:$0xff]
    %v1117 = vld [vmem:[%s5 + $0x10] sm:$0xff]
    %v1118 = vld [vmem:[%s5 + $0x18] sm:$0xff]
    %1120 = vset.pattern.permute.xlu0 0
    %1121 = vperm.xlu0 %1120, %v1115
    %v1122 = vpop.permute.xlu0 %1121
    %1125 = vset.pattern.permute.xlu0 0
    %1126 = vperm.xlu0 %1125, %v1116
    %v1127 = vpop.permute.xlu0 %1126
    %1130 = vset.pattern.permute.xlu0 0
    %1131 = vperm.xlu0 %1130, %v1117
    %v1132 = vpop.permute.xlu0 %1131
    %1135 = vset.pattern.permute.xlu0 0
    %1136 = vperm.xlu0 %1135, %v1118
    %v1137 = vpop.permute.xlu0 %1136
    %vm1139 = vcmask 523264
    %v1141 = vsel %vm1139, %v1111, 0
    %v1144 = vsel %vm1139, %v1112, 0
    %v1147 = vsel %vm1139, %v1113, 0
    %v1150 = vsel %vm1139, %v1114, 0
    %1152 = vmatprep.subr.mxu0 %v1008
    %1153 = vmatpush1.msra.mxu0 %v1007
    %1154 = vmatprep.subr.mxu0 %v1021
    %1155 = vmatpush1.msra.mxu0 %v1020
    %1156 = vmatprep.subr.mxu0 %v1034
    %1157 = vmatpush1.msra.mxu0 %v1033
    %1158 = vmatprep.subr.mxu0 %v1047
    %1159 = vmatpush1.msra.mxu0 %v1046
    %1160 = vmatprep.subr.mxu0 %v1060
    %1161 = vmatpush1.msra.mxu0 %v1059
    %1162 = vmatprep.subr.mxu0 %v1073
    %1163 = vmatpush1.msra.mxu0 %v1072
    %1164 = vmatprep.subr.mxu0 %v1086
    %1165 = vmatpush1.msra.mxu0 %v1085
    %1166 = vmatprep.subr.mxu0 %v1099
    %1167 = vmatpush1.msra.mxu0 %v1098
    %1168 = vmatprep.subr.mxu0 0.0
    %1169 = vmatpush1.msra.mxu0 0.0
    %1170 = vmatprep.subr.mxu0 0.0
    %1171 = vmatpush1.msra.mxu0 0.0
    %1172 = vmatprep.subr.mxu0 0.0
    %1173 = vmatpush1.msra.mxu0 0.0
    %1174 = vmatprep.subr.mxu0 0.0
    %1175 = vmatpush1.msra.mxu0 0.0
    %1176 = vmatprep.subr.mxu0 0.0
    %1177 = vmatpush1.msra.mxu0 0.0
    %1178 = vmatprep.subr.mxu0 0.0
    %1179 = vmatpush1.msra.mxu0 0.0
    %1180 = vmatprep.subr.mxu0 0.0
    %1181 = vmatpush1.msra.mxu0 0.0
    %1182 = vmatprep.subr.mxu0 0.0
    %1183 = vmatpush1.msra.mxu0 0.0
    %1184 = vmatprep.subr.mxu0 0.0
    %1185 = vmatpush1.msra.mxu0 0.0
    %1186 = vmatprep.subr.mxu0 0.0
    %1187 = vmatpush1.msra.mxu0 0.0
    %1188 = vmatprep.subr.mxu0 0.0
    %1189 = vmatpush1.msra.mxu0 0.0
    %1190 = vmatprep.subr.mxu0 0.0
    %1191 = vmatpush1.msra.mxu0 0.0
    %1192 = vmatprep.subr.mxu0 0.0
    %1193 = vmatpush1.msra.mxu0 0.0
    %1194 = vmatprep.subr.mxu0 0.0
    %1195 = vmatpush1.msra.mxu0 0.0
    %1196 = vmatprep.subr.mxu0 0.0
    %1197 = vmatpush1.msra.mxu0 0.0
    %1198 = vmatprep.subr.mxu0 0.0
    %1199 = vmatpush1.msra.mxu0 0.0
    %1200 = vmatprep.subr.mxu0 0.0
    %1201 = vmatpush1.msra.mxu0 0.0
    %1202 = vmatprep.subr.mxu0 0.0
    %1203 = vmatpush1.msra.mxu0 0.0
    %1204 = vmatprep.subr.mxu0 0.0
    %1205 = vmatpush1.msra.mxu0 0.0
    %1206 = vmatprep.subr.mxu0 0.0
    %1207 = vmatpush1.msra.mxu0 0.0
    %1208 = vmatprep.subr.mxu0 0.0
    %1209 = vmatpush1.msra.mxu0 0.0
    %1210 = vmatprep.subr.mxu0 0.0
    %1211 = vmatpush1.msra.mxu0 0.0
    %1212 = vmatprep.subr.mxu0 0.0
    %1213 = vmatpush1.msra.mxu0 0.0
    %1214 = vmatprep.subr.mxu0 0.0
    %1215 = vmatpush1.msra.mxu0 0.0
    %1216 = vmatprep.mubr.f32.mxu0 0.0
    %1217 = vmatmul.mubr.f32.gmra.mrb[0].mxu0 %v1141
    %v1218 = vpop.f32.mrb[0].mxu0
    %v1219 = vadd.f32 %v1122, %v1218
    %v1220 = vpop.f32.mrb[0].mxu0
    %v1221 = vadd.f32 %v1122, %v1220
    %1222 = vmatprep.mubr.f32.mxu0 0.0
    %1223 = vmatmul.mubr.f32.gmra.mrb[0].mxu0 %v1144
    %v1224 = vpop.f32.mrb[0].mxu0
    %v1225 = vadd.f32 %v1127, %v1224
    %v1226 = vpop.f32.mrb[0].mxu0
    %v1227 = vadd.f32 %v1127, %v1226
    %1228 = vmatprep.mubr.f32.mxu0 0.0
    %1229 = vmatmul.mubr.f32.gmra.mrb[0].mxu0 %v1147
    %v1230 = vpop.f32.mrb[0].mxu0
    %v1231 = vadd.f32 %v1132, %v1230
    %v1232 = vpop.f32.mrb[0].mxu0
    %v1233 = vadd.f32 %v1132, %v1232
    %1234 = vmatprep.mubr.f32.mxu0 0.0
    %1235 = vmatmul.mubr.f32.gmra.mrb[0].mxu0 %v1150
    %v1236 = vpop.f32.mrb[0].mxu0
    %v1237 = vadd.f32 %v1137, %v1236
    %v1238 = vpop.f32.mrb[0].mxu0
    %v1239 = vadd.f32 %v1137, %v1238
    %1240 = vdwg.mxu0
    %1241 = vmatprep.subr.mxu0 %v1010
    %1242 = vmatpush1.msra.mxu0 %v1009
    %1243 = vmatprep.subr.mxu0 %v1023
    %1244 = vmatpush1.msra.mxu0 %v1022
    %1245 = vmatprep.subr.mxu0 %v1036
    %1246 = vmatpush1.msra.mxu0 %v1035
    %1247 = vmatprep.subr.mxu0 %v1049
    %1248 = vmatpush1.msra.mxu0 %v1048
    %1249 = vmatprep.subr.mxu0 %v1062
    %1250 = vmatpush1.msra.mxu0 %v1061
    %1251 = vmatprep.subr.mxu0 %v1075
    %1252 = vmatpush1.msra.mxu0 %v1074
    %1253 = vmatprep.subr.mxu0 %v1088
    %1254 = vmatpush1.msra.mxu0 %v1087
    %1255 = vmatprep.subr.mxu0 %v1101
    %1256 = vmatpush1.msra.mxu0 %v1100
    %1257 = vmatprep.subr.mxu0 0.0
    %1258 = vmatpush1.msra.mxu0 0.0
    %1259 = vmatprep.subr.mxu0 0.0
    %1260 = vmatpush1.msra.mxu0 0.0
    %1261 = vmatprep.subr.mxu0 0.0
    %1262 = vmatpush1.msra.mxu0 0.0
    %1263 = vmatprep.subr.mxu0 0.0
    %1264 = vmatpush1.msra.mxu0 0.0
    %1265 = vmatprep.subr.mxu0 0.0
    %1266 = vmatpush1.msra.mxu0 0.0
    %1267 = vmatprep.subr.mxu0 0.0
    %1268 = vmatpush1.msra.mxu0 0.0
    %1269 = vmatprep.subr.mxu0 0.0
    %1270 = vmatpush1.msra.mxu0 0.0
    %1271 = vmatprep.subr.mxu0 0.0
    %1272 = vmatpush1.msra.mxu0 0.0
    %1273 = vmatprep.subr.mxu0 0.0
    %1274 = vmatpush1.msra.mxu0 0.0
    %1275 = vmatprep.subr.mxu0 0.0
    %1276 = vmatpush1.msra.mxu0 0.0
    %1277 = vmatprep.subr.mxu0 0.0
    %1278 = vmatpush1.msra.mxu0 0.0
    %1279 = vmatprep.subr.mxu0 0.0
    %1280 = vmatpush1.msra.mxu0 0.0
    %1281 = vmatprep.subr.mxu0 0.0
    %1282 = vmatpush1.msra.mxu0 0.0
    %1283 = vmatprep.subr.mxu0 0.0
    %1284 = vmatpush1.msra.mxu0 0.0
    %1285 = vmatprep.subr.mxu0 0.0
    %1286 = vmatpush1.msra.mxu0 0.0
    %1287 = vmatprep.subr.mxu0 0.0
    %1288 = vmatpush1.msra.mxu0 0.0
    %1289 = vmatprep.subr.mxu0 0.0
    %1290 = vmatpush1.msra.mxu0 0.0
    %1291 = vmatprep.subr.mxu0 0.0
    %1292 = vmatpush1.msra.mxu0 0.0
    %1293 = vmatprep.subr.mxu0 0.0
    %1294 = vmatpush1.msra.mxu0 0.0
    %1295 = vmatprep.subr.mxu0 0.0
    %1296 = vmatpush1.msra.mxu0 0.0
    %1297 = vmatprep.subr.mxu0 0.0
    %1298 = vmatpush1.msra.mxu0 0.0
    %1299 = vmatprep.subr.mxu0 0.0
    %1300 = vmatpush1.msra.mxu0 0.0
    %1301 = vmatprep.subr.mxu0 0.0
    %1302 = vmatpush1.msra.mxu0 0.0
    %1303 = vmatprep.subr.mxu0 0.0
    %1304 = vmatpush1.msra.mxu0 0.0
    %1305 = vmatprep.mubr.f32.mxu0 0.0
    %1306 = vmatmul.mubr.f32.gmra.mrb[0].mxu0 %v1141
    %v1307 = vpop.f32.mrb[0].mxu0
    %v1308 = vadd.f32 %v1122, %v1307
    %v1309 = vpop.f32.mrb[0].mxu0
    %v1310 = vadd.f32 %v1122, %v1309
    %1311 = vmatprep.mubr.f32.mxu0 0.0
    %1312 = vmatmul.mubr.f32.gmra.mrb[0].mxu0 %v1144
    %v1313 = vpop.f32.mrb[0].mxu0
    %v1314 = vadd.f32 %v1127, %v1313
    %v1315 = vpop.f32.mrb[0].mxu0
    %v1316 = vadd.f32 %v1127, %v1315
    %1317 = vmatprep.mubr.f32.mxu0 0.0
    %1318 = vmatmul.mubr.f32.gmra.mrb[0].mxu0 %v1147
    %v1319 = vpop.f32.mrb[0].mxu0
    %v1320 = vadd.f32 %v1132, %v1319
    %v1321 = vpop.f32.mrb[0].mxu0
    %v1322 = vadd.f32 %v1132, %v1321
    %1323 = vmatprep.mubr.f32.mxu0 0.0
    %1324 = vmatmul.mubr.f32.gmra.mrb[0].mxu0 %v1150
    %v1325 = vpop.f32.mrb[0].mxu0
    %v1326 = vadd.f32 %v1137, %v1325
    %v1327 = vpop.f32.mrb[0].mxu0
    %v1328 = vadd.f32 %v1137, %v1327
    %1329 = vdwg.mxu0
    %1330 = vmatprep.subr.mxu0 %v1012
    %1331 = vmatpush1.msra.mxu0 %v1011
    %1332 = vmatprep.subr.mxu0 %v1025
    %1333 = vmatpush1.msra.mxu0 %v1024
    %1334 = vmatprep.subr.mxu0 %v1038
    %1335 = vmatpush1.msra.mxu0 %v1037
    %1336 = vmatprep.subr.mxu0 %v1051
    %1337 = vmatpush1.msra.mxu0 %v1050
    %1338 = vmatprep.subr.mxu0 %v1064
    %1339 = vmatpush1.msra.mxu0 %v1063
    %1340 = vmatprep.subr.mxu0 %v1077
    %1341 = vmatpush1.msra.mxu0 %v1076
    %1342 = vmatprep.subr.mxu0 %v1090
    %1343 = vmatpush1.msra.mxu0 %v1089
    %1344 = vmatprep.subr.mxu0 %v1103
    %1345 = vmatpush1.msra.mxu0 %v1102
    %1346 = vmatprep.subr.mxu0 0.0
    %1347 = vmatpush1.msra.mxu0 0.0
    %1348 = vmatprep.subr.mxu0 0.0
    %1349 = vmatpush1.msra.mxu0 0.0
    %1350 = vmatprep.subr.mxu0 0.0
    %1351 = vmatpush1.msra.mxu0 0.0
    %1352 = vmatprep.subr.mxu0 0.0
    %1353 = vmatpush1.msra.mxu0 0.0
    %1354 = vmatprep.subr.mxu0 0.0
    %1355 = vmatpush1.msra.mxu0 0.0
    %1356 = vmatprep.subr.mxu0 0.0
    %1357 = vmatpush1.msra.mxu0 0.0
    %1358 = vmatprep.subr.mxu0 0.0
    %1359 = vmatpush1.msra.mxu0 0.0
    %1360 = vmatprep.subr.mxu0 0.0
    %1361 = vmatpush1.msra.mxu0 0.0
    %1362 = vmatprep.subr.mxu0 0.0
    %1363 = vmatpush1.msra.mxu0 0.0
    %1364 = vmatprep.subr.mxu0 0.0
    %1365 = vmatpush1.msra.mxu0 0.0
    %1366 = vmatprep.subr.mxu0 0.0
    %1367 = vmatpush1.msra.mxu0 0.0
    %1368 = vmatprep.subr.mxu0 0.0
    %1369 = vmatpush1.msra.mxu0 0.0
    %1370 = vmatprep.subr.mxu0 0.0
    %1371 = vmatpush1.msra.mxu0 0.0
    %1372 = vmatprep.subr.mxu0 0.0
    %1373 = vmatpush1.msra.mxu0 0.0
    %1374 = vmatprep.subr.mxu0 0.0
    %1375 = vmatpush1.msra.mxu0 0.0
    %1376 = vmatprep.subr.mxu0 0.0
    %1377 = vmatpush1.msra.mxu0 0.0
    %1378 = vmatprep.subr.mxu0 0.0
    %1379 = vmatpush1.msra.mxu0 0.0
    %1380 = vmatprep.subr.mxu0 0.0
    %1381 = vmatpush1.msra.mxu0 0.0
    %1382 = vmatprep.subr.mxu0 0.0
    %1383 = vmatpush1.msra.mxu0 0.0
    %1384 = vmatprep.subr.mxu0 0.0
    %1385 = vmatpush1.msra.mxu0 0.0
    %1386 = vmatprep.subr.mxu0 0.0
    %1387 = vmatpush1.msra.mxu0 0.0
    %1388 = vmatprep.subr.mxu0 0.0
    %1389 = vmatpush1.msra.mxu0 0.0
    %1390 = vmatprep.subr.mxu0 0.0
    %1391 = vmatpush1.msra.mxu0 0.0
    %1392 = vmatprep.subr.mxu0 0.0
    %1393 = vmatpush1.msra.mxu0 0.0
    %1394 = vmatprep.mubr.f32.mxu0 0.0
    %1395 = vmatmul.mubr.f32.gmra.mrb[0].mxu0 %v1141
    %v1396 = vpop.f32.mrb[0].mxu0
    %v1397 = vadd.f32 %v1122, %v1396
    %v1398 = vpop.f32.mrb[0].mxu0
    %v1399 = vadd.f32 %v1122, %v1398
    %1400 = vmatprep.mubr.f32.mxu0 0.0
    %1401 = vmatmul.mubr.f32.gmra.mrb[0].mxu0 %v1144
    %v1402 = vpop.f32.mrb[0].mxu0
    %v1403 = vadd.f32 %v1127, %v1402
    %v1404 = vpop.f32.mrb[0].mxu0
    %v1405 = vadd.f32 %v1127, %v1404
    %1406 = vmatprep.mubr.f32.mxu0 0.0
    %1407 = vmatmul.mubr.f32.gmra.mrb[0].mxu0 %v1147
    %v1408 = vpop.f32.mrb[0].mxu0
    %v1409 = vadd.f32 %v1132, %v1408
    %v1410 = vpop.f32.mrb[0].mxu0
    %v1411 = vadd.f32 %v1132, %v1410
    %1412 = vmatprep.mubr.f32.mxu0 0.0
    %1413 = vmatmul.mubr.f32.gmra.mrb[0].mxu0 %v1150
    %v1414 = vpop.f32.mrb[0].mxu0
    %v1415 = vadd.f32 %v1137, %v1414
    %v1416 = vpop.f32.mrb[0].mxu0
    %v1417 = vadd.f32 %v1137, %v1416
    %1418 = vdwg.mxu0
    %1419 = vmatprep.subr.mxu0 %v1014
    %1420 = vmatpush1.msra.mxu0 %v1013
    %1421 = vmatprep.subr.mxu0 %v1027
    %1422 = vmatpush1.msra.mxu0 %v1026
    %1423 = vmatprep.subr.mxu0 %v1040
    %1424 = vmatpush1.msra.mxu0 %v1039
    %1425 = vmatprep.subr.mxu0 %v1053
    %1426 = vmatpush1.msra.mxu0 %v1052
    %1427 = vmatprep.subr.mxu0 %v1066
    %1428 = vmatpush1.msra.mxu0 %v1065
    %1429 = vmatprep.subr.mxu0 %v1079
    %1430 = vmatpush1.msra.mxu0 %v1078
    %1431 = vmatprep.subr.mxu0 %v1092
    %1432 = vmatpush1.msra.mxu0 %v1091
    %1433 = vmatprep.subr.mxu0 %v1105
    %1434 = vmatpush1.msra.mxu0 %v1104
    %1435 = vmatprep.subr.mxu0 0.0
    %1436 = vmatpush1.msra.mxu0 0.0
    %1437 = vmatprep.subr.mxu0 0.0
    %1438 = vmatpush1.msra.mxu0 0.0
    %1439 = vmatprep.subr.mxu0 0.0
    %1440 = vmatpush1.msra.mxu0 0.0
    %1441 = vmatprep.subr.mxu0 0.0
    %1442 = vmatpush1.msra.mxu0 0.0
    %1443 = vmatprep.subr.mxu0 0.0
    %1444 = vmatpush1.msra.mxu0 0.0
    %1445 = vmatprep.subr.mxu0 0.0
    %1446 = vmatpush1.msra.mxu0 0.0
    %1447 = vmatprep.subr.mxu0 0.0
    %1448 = vmatpush1.msra.mxu0 0.0
    %1449 = vmatprep.subr.mxu0 0.0
    %1450 = vmatpush1.msra.mxu0 0.0
    %1451 = vmatprep.subr.mxu0 0.0
    %1452 = vmatpush1.msra.mxu0 0.0
    %1453 = vmatprep.subr.mxu0 0.0
    %1454 = vmatpush1.msra.mxu0 0.0
    %1455 = vmatprep.subr.mxu0 0.0
    %1456 = vmatpush1.msra.mxu0 0.0
    %1457 = vmatprep.subr.mxu0 0.0
    %1458 = vmatpush1.msra.mxu0 0.0
    %1459 = vmatprep.subr.mxu0 0.0
    %1460 = vmatpush1.msra.mxu0 0.0
    %1461 = vmatprep.subr.mxu0 0.0
    %1462 = vmatpush1.msra.mxu0 0.0
    %1463 = vmatprep.subr.mxu0 0.0
    %1464 = vmatpush1.msra.mxu0 0.0
    %1465 = vmatprep.subr.mxu0 0.0
    %1466 = vmatpush1.msra.mxu0 0.0
    %1467 = vmatprep.subr.mxu0 0.0
    %1468 = vmatpush1.msra.mxu0 0.0
    %1469 = vmatprep.subr.mxu0 0.0
    %1470 = vmatpush1.msra.mxu0 0.0
    %1471 = vmatprep.subr.mxu0 0.0
    %1472 = vmatpush1.msra.mxu0 0.0
    %1473 = vmatprep.subr.mxu0 0.0
    %1474 = vmatpush1.msra.mxu0 0.0
    %1475 = vmatprep.subr.mxu0 0.0
    %1476 = vmatpush1.msra.mxu0 0.0
    %1477 = vmatprep.subr.mxu0 0.0
    %1478 = vmatpush1.msra.mxu0 0.0
    %1479 = vmatprep.subr.mxu0 0.0
    %1480 = vmatpush1.msra.mxu0 0.0
    %1481 = vmatprep.subr.mxu0 0.0
    %1482 = vmatpush1.msra.mxu0 0.0
    %1483 = vmatprep.mubr.f32.mxu0 0.0
    %1484 = vmatmul.mubr.f32.gmra.mrb[0].mxu0 %v1141
    %v1485 = vpop.f32.mrb[0].mxu0
    %v1486 = vadd.f32 %v1122, %v1485
    %v1487 = vpop.f32.mrb[0].mxu0
    %v1488 = vadd.f32 %v1122, %v1487
    %1489 = vmatprep.mubr.f32.mxu0 0.0
    %1490 = vmatmul.mubr.f32.gmra.mrb[0].mxu0 %v1144
    %v1491 = vpop.f32.mrb[0].mxu0
    %v1492 = vadd.f32 %v1127, %v1491
    %v1493 = vpop.f32.mrb[0].mxu0
    %v1494 = vadd.f32 %v1127, %v1493
    %1495 = vmatprep.mubr.f32.mxu0 0.0
    %1496 = vmatmul.mubr.f32.gmra.mrb[0].mxu0 %v1147
    %v1497 = vpop.f32.mrb[0].mxu0
    %v1498 = vadd.f32 %v1132, %v1497
    %v1499 = vpop.f32.mrb[0].mxu0
    %v1500 = vadd.f32 %v1132, %v1499
    %1501 = vmatprep.mubr.f32.mxu0 0.0
    %1502 = vmatmul.mubr.f32.gmra.mrb[0].mxu0 %v1150
    %v1503 = vpop.f32.mrb[0].mxu0
    %v1504 = vadd.f32 %v1137, %v1503
    %v1505 = vpop.f32.mrb[0].mxu0
    %v1506 = vadd.f32 %v1137, %v1505
    %1507 = vdwg.mxu0
    %1508 = vmatprep.subr.mxu0 %v1016
    %1509 = vmatpush1.msra.mxu0 %v1015
    %1510 = vmatprep.subr.mxu0 %v1029
    %1511 = vmatpush1.msra.mxu0 %v1028
    %1512 = vmatprep.subr.mxu0 %v1042
    %1513 = vmatpush1.msra.mxu0 %v1041
    %1514 = vmatprep.subr.mxu0 %v1055
    %1515 = vmatpush1.msra.mxu0 %v1054
    %1516 = vmatprep.subr.mxu0 %v1068
    %1517 = vmatpush1.msra.mxu0 %v1067
    %1518 = vmatprep.subr.mxu0 %v1081
    %1519 = vmatpush1.msra.mxu0 %v1080
    %1520 = vmatprep.subr.mxu0 %v1094
    %1521 = vmatpush1.msra.mxu0 %v1093
    %1522 = vmatprep.subr.mxu0 %v1107
    %1523 = vmatpush1.msra.mxu0 %v1106
    %1524 = vmatprep.subr.mxu0 0.0
    %1525 = vmatpush1.msra.mxu0 0.0
    %1526 = vmatprep.subr.mxu0 0.0
    %1527 = vmatpush1.msra.mxu0 0.0
    %1528 = vmatprep.subr.mxu0 0.0
    %1529 = vmatpush1.msra.mxu0 0.0
    %1530 = vmatprep.subr.mxu0 0.0
    %1531 = vmatpush1.msra.mxu0 0.0
    %1532 = vmatprep.subr.mxu0 0.0
    %1533 = vmatpush1.msra.mxu0 0.0
    %1534 = vmatprep.subr.mxu0 0.0
    %1535 = vmatpush1.msra.mxu0 0.0
    %1536 = vmatprep.subr.mxu0 0.0
    %1537 = vmatpush1.msra.mxu0 0.0
    %1538 = vmatprep.subr.mxu0 0.0
    %1539 = vmatpush1.msra.mxu0 0.0
    %1540 = vmatprep.subr.mxu0 0.0
    %1541 = vmatpush1.msra.mxu0 0.0
    %1542 = vmatprep.subr.mxu0 0.0
    %1543 = vmatpush1.msra.mxu0 0.0
    %1544 = vmatprep.subr.mxu0 0.0
    %1545 = vmatpush1.msra.mxu0 0.0
    %1546 = vmatprep.subr.mxu0 0.0
    %1547 = vmatpush1.msra.mxu0 0.0
    %1548 = vmatprep.subr.mxu0 0.0
    %1549 = vmatpush1.msra.mxu0 0.0
    %1550 = vmatprep.subr.mxu0 0.0
    %1551 = vmatpush1.msra.mxu0 0.0
    %1552 = vmatprep.subr.mxu0 0.0
    %1553 = vmatpush1.msra.mxu0 0.0
    %1554 = vmatprep.subr.mxu0 0.0
    %1555 = vmatpush1.msra.mxu0 0.0
    %1556 = vmatprep.subr.mxu0 0.0
    %1557 = vmatpush1.msra.mxu0 0.0
    %1558 = vmatprep.subr.mxu0 0.0
    %1559 = vmatpush1.msra.mxu0 0.0
    %1560 = vmatprep.subr.mxu0 0.0
    %1561 = vmatpush1.msra.mxu0 0.0
    %1562 = vmatprep.subr.mxu0 0.0
    %1563 = vmatpush1.msra.mxu0 0.0
    %1564 = vmatprep.subr.mxu0 0.0
    %1565 = vmatpush1.msra.mxu0 0.0
    %1566 = vmatprep.subr.mxu0 0.0
    %1567 = vmatpush1.msra.mxu0 0.0
    %1568 = vmatprep.subr.mxu0 0.0
    %1569 = vmatpush1.msra.mxu0 0.0
    %1570 = vmatprep.subr.mxu0 0.0
    %1571 = vmatpush1.msra.mxu0 0.0
    %1572 = vmatprep.mubr.f32.mxu0 0.0
    %1573 = vmatmul.mubr.f32.gmra.mrb[0].mxu0 %v1141
    %v1574 = vpop.f32.mrb[0].mxu0
    %v1575 = vadd.f32 %v1122, %v1574
    %v1576 = vpop.f32.mrb[0].mxu0
    %v1577 = vadd.f32 %v1122, %v1576
    %1578 = vmatprep.mubr.f32.mxu0 0.0
    %1579 = vmatmul.mubr.f32.gmra.mrb[0].mxu0 %v1144
    %v1580 = vpop.f32.mrb[0].mxu0
    %v1581 = vadd.f32 %v1127, %v1580
    %v1582 = vpop.f32.mrb[0].mxu0
    %v1583 = vadd.f32 %v1127, %v1582
    %1584 = vmatprep.mubr.f32.mxu0 0.0
    %1585 = vmatmul.mubr.f32.gmra.mrb[0].mxu0 %v1147
    %v1586 = vpop.f32.mrb[0].mxu0
    %v1587 = vadd.f32 %v1132, %v1586
    %v1588 = vpop.f32.mrb[0].mxu0
    %v1589 = vadd.f32 %v1132, %v1588
    %1590 = vmatprep.mubr.f32.mxu0 0.0
    %1591 = vmatmul.mubr.f32.gmra.mrb[0].mxu0 %v1150
    %v1592 = vpop.f32.mrb[0].mxu0
    %v1593 = vadd.f32 %v1137, %v1592
    %v1594 = vpop.f32.mrb[0].mxu0
    %v1595 = vadd.f32 %v1137, %v1594
    %1596 = vdwg.mxu0
    %1597 = vmatprep.subr.mxu0 %v1018
    %1598 = vmatpush1.msra.mxu0 %v1017
    %1599 = vmatprep.subr.mxu0 %v1031
    %1600 = vmatpush1.msra.mxu0 %v1030
    %1601 = vmatprep.subr.mxu0 %v1044
    %1602 = vmatpush1.msra.mxu0 %v1043
    %1603 = vmatprep.subr.mxu0 %v1057
    %1604 = vmatpush1.msra.mxu0 %v1056
    %1605 = vmatprep.subr.mxu0 %v1070
    %1606 = vmatpush1.msra.mxu0 %v1069
    %1607 = vmatprep.subr.mxu0 %v1083
    %1608 = vmatpush1.msra.mxu0 %v1082
    %1609 = vmatprep.subr.mxu0 %v1096
    %1610 = vmatpush1.msra.mxu0 %v1095
    %1611 = vmatprep.subr.mxu0 %v1109
    %1612 = vmatpush1.msra.mxu0 %v1108
    %1613 = vmatprep.subr.mxu0 0.0
    %1614 = vmatpush1.msra.mxu0 0.0
    %1615 = vmatprep.subr.mxu0 0.0
    %1616 = vmatpush1.msra.mxu0 0.0
    %1617 = vmatprep.subr.mxu0 0.0
    %1618 = vmatpush1.msra.mxu0 0.0
    %1619 = vmatprep.subr.mxu0 0.0
    %1620 = vmatpush1.msra.mxu0 0.0
    %1621 = vmatprep.subr.mxu0 0.0
    %1622 = vmatpush1.msra.mxu0 0.0
    %1623 = vmatprep.subr.mxu0 0.0
    %1624 = vmatpush1.msra.mxu0 0.0
    %1625 = vmatprep.subr.mxu0 0.0
    %1626 = vmatpush1.msra.mxu0 0.0
    %1627 = vmatprep.subr.mxu0 0.0
    %1628 = vmatpush1.msra.mxu0 0.0
    %1629 = vmatprep.subr.mxu0 0.0
    %1630 = vmatpush1.msra.mxu0 0.0
    %1631 = vmatprep.subr.mxu0 0.0
    %1632 = vmatpush1.msra.mxu0 0.0
    %1633 = vmatprep.subr.mxu0 0.0
    %1634 = vmatpush1.msra.mxu0 0.0
    %1635 = vmatprep.subr.mxu0 0.0
    %1636 = vmatpush1.msra.mxu0 0.0
    %1637 = vmatprep.subr.mxu0 0.0
    %1638 = vmatpush1.msra.mxu0 0.0
    %1639 = vmatprep.subr.mxu0 0.0
    %1640 = vmatpush1.msra.mxu0 0.0
    %1641 = vmatprep.subr.mxu0 0.0
    %1642 = vmatpush1.msra.mxu0 0.0
    %1643 = vmatprep.subr.mxu0 0.0
    %1644 = vmatpush1.msra.mxu0 0.0
    %1645 = vmatprep.subr.mxu0 0.0
    %1646 = vmatpush1.msra.mxu0 0.0
    %1647 = vmatprep.subr.mxu0 0.0
    %1648 = vmatpush1.msra.mxu0 0.0
    %1649 = vmatprep.subr.mxu0 0.0
    %1650 = vmatpush1.msra.mxu0 0.0
    %1651 = vmatprep.subr.mxu0 0.0
    %1652 = vmatpush1.msra.mxu0 0.0
    %1653 = vmatprep.subr.mxu0 0.0
    %1654 = vmatpush1.msra.mxu0 0.0
    %1655 = vmatprep.subr.mxu0 0.0
    %1656 = vmatpush1.msra.mxu0 0.0
    %1657 = vmatprep.subr.mxu0 0.0
    %1658 = vmatpush1.msra.mxu0 0.0
    %1659 = vmatprep.subr.mxu0 0.0
    %1660 = vmatpush1.msra.mxu0 0.0
    %1661 = vmatprep.mubr.f32.mxu0 0.0
    %1662 = vmatmul.mubr.f32.gmra.mrb[0].mxu0 %v1141
    %v1663 = vpop.f32.mrb[0].mxu0
    %v1664 = vadd.f32 %v1122, %v1663
    %v1665 = vpop.f32.mrb[0].mxu0
    %v1666 = vadd.f32 %v1122, %v1665
    %1667 = vmatprep.mubr.f32.mxu0 0.0
    %1668 = vmatmul.mubr.f32.gmra.mrb[0].mxu0 %v1144
    %v1669 = vpop.f32.mrb[0].mxu0
    %v1670 = vadd.f32 %v1127, %v1669
    %v1671 = vpop.f32.mrb[0].mxu0
    %v1672 = vadd.f32 %v1127, %v1671
    %1673 = vmatprep.mubr.f32.mxu0 0.0
    %1674 = vmatmul.mubr.f32.gmra.mrb[0].mxu0 %v1147
    %v1675 = vpop.f32.mrb[0].mxu0
    %v1676 = vadd.f32 %v1132, %v1675
    %v1677 = vpop.f32.mrb[0].mxu0
    %v1678 = vadd.f32 %v1132, %v1677
    %1679 = vmatprep.mubr.f32.mxu0 0.0
    %1680 = vmatmul.mubr.f32.gmra.mrb[0].mxu0 %v1150
    %v1681 = vpop.f32.mrb[0].mxu0
    %v1682 = vadd.f32 %v1137, %v1681
    %v1683 = vpop.f32.mrb[0].mxu0
    %v1684 = vadd.f32 %v1137, %v1683
    %1685 = vdwg.mxu0
    %1686 = vmatprep.subr.mxu0 0.0
    %1687 = vmatpush1.msra.mxu0 %v1019
    %1688 = vmatprep.subr.mxu0 0.0
    %1689 = vmatpush1.msra.mxu0 %v1032
    %1690 = vmatprep.subr.mxu0 0.0
    %1691 = vmatpush1.msra.mxu0 %v1045
    %1692 = vmatprep.subr.mxu0 0.0
    %1693 = vmatpush1.msra.mxu0 %v1058
    %1694 = vmatprep.subr.mxu0 0.0
    %1695 = vmatpush1.msra.mxu0 %v1071
    %1696 = vmatprep.subr.mxu0 0.0
    %1697 = vmatpush1.msra.mxu0 %v1084
    %1698 = vmatprep.subr.mxu0 0.0
    %1699 = vmatpush1.msra.mxu0 %v1097
    %1700 = vmatprep.subr.mxu0 0.0
    %1701 = vmatpush1.msra.mxu0 %v1110
    %1702 = vmatprep.subr.mxu0 0.0
    %1703 = vmatpush1.msra.mxu0 0.0
    %1704 = vmatprep.subr.mxu0 0.0
    %1705 = vmatpush1.msra.mxu0 0.0
    %1706 = vmatprep.subr.mxu0 0.0
    %1707 = vmatpush1.msra.mxu0 0.0
    %1708 = vmatprep.subr.mxu0 0.0
    %1709 = vmatpush1.msra.mxu0 0.0
    %1710 = vmatprep.subr.mxu0 0.0
    %1711 = vmatpush1.msra.mxu0 0.0
    %1712 = vmatprep.subr.mxu0 0.0
    %1713 = vmatpush1.msra.mxu0 0.0
    %1714 = vmatprep.subr.mxu0 0.0
    %1715 = vmatpush1.msra.mxu0 0.0
    %1716 = vmatprep.subr.mxu0 0.0
    %1717 = vmatpush1.msra.mxu0 0.0
    %1718 = vmatprep.subr.mxu0 0.0
    %1719 = vmatpush1.msra.mxu0 0.0
    %1720 = vmatprep.subr.mxu0 0.0
    %1721 = vmatpush1.msra.mxu0 0.0
    %1722 = vmatprep.subr.mxu0 0.0
    %1723 = vmatpush1.msra.mxu0 0.0
    %1724 = vmatprep.subr.mxu0 0.0
    %1725 = vmatpush1.msra.mxu0 0.0
    %1726 = vmatprep.subr.mxu0 0.0
    %1727 = vmatpush1.msra.mxu0 0.0
    %1728 = vmatprep.subr.mxu0 0.0
    %1729 = vmatpush1.msra.mxu0 0.0
    %1730 = vmatprep.subr.mxu0 0.0
    %1731 = vmatpush1.msra.mxu0 0.0
    %1732 = vmatprep.subr.mxu0 0.0
    %1733 = vmatpush1.msra.mxu0 0.0
    %1734 = vmatprep.subr.mxu0 0.0
    %1735 = vmatpush1.msra.mxu0 0.0
    %1736 = vmatprep.subr.mxu0 0.0
    %1737 = vmatpush1.msra.mxu0 0.0
    %1738 = vmatprep.subr.mxu0 0.0
    %1739 = vmatpush1.msra.mxu0 0.0
    %1740 = vmatprep.subr.mxu0 0.0
    %1741 = vmatpush1.msra.mxu0 0.0
    %1742 = vmatprep.subr.mxu0 0.0
    %1743 = vmatpush1.msra.mxu0 0.0
    %1744 = vmatprep.subr.mxu0 0.0
    %1745 = vmatpush1.msra.mxu0 0.0
    %1746 = vmatprep.subr.mxu0 0.0
    %1747 = vmatpush1.msra.mxu0 0.0
    %1748 = vmatprep.subr.mxu0 0.0
    %1749 = vmatpush1.msra.mxu0 0.0
    %1750 = vmatprep.mubr.f32.mxu0 0.0
    %1751 = vmatmul.mubr.f32.gmra.mrb[0].mxu0 %v1141
    %v1752 = vpop.f32.mrb[0].mxu0
    %v1753 = vadd.f32 %v1122, %v1752
    %v1754 = vpop.f32.mrb[0].mxu0
    %1755 = vmatprep.mubr.f32.mxu0 0.0
    %1756 = vmatmul.mubr.f32.gmra.mrb[0].mxu0 %v1144
    %v1757 = vpop.f32.mrb[0].mxu0
    %v1758 = vadd.f32 %v1127, %v1757
    %v1759 = vpop.f32.mrb[0].mxu0
    %1760 = vmatprep.mubr.f32.mxu0 0.0
    %1761 = vmatmul.mubr.f32.gmra.mrb[0].mxu0 %v1147
    %v1762 = vpop.f32.mrb[0].mxu0
    %v1763 = vadd.f32 %v1132, %v1762
    %v1764 = vpop.f32.mrb[0].mxu0
    %1765 = vmatprep.mubr.f32.mxu0 0.0
    %1766 = vmatmul.mubr.f32.gmra.mrb[0].mxu0 %v1150
    %v1767 = vpop.f32.mrb[0].mxu0
    %v1768 = vadd.f32 %v1137, %v1767
    %v1769 = vpop.f32.mrb[0].mxu0
    %1770 = vdwg.mxu0
    %v1771 = vmax.f32 %v1219, 0.0
    %v1772 = vmax.f32 %v1221, 0.0
    %v1773 = vmax.f32 %v1308, 0.0
    %v1774 = vmax.f32 %v1310, 0.0
    %v1775 = vmax.f32 %v1397, 0.0
    %v1776 = vmax.f32 %v1399, 0.0
    %v1777 = vmax.f32 %v1486, 0.0
    %v1778 = vmax.f32 %v1488, 0.0
    %v1779 = vmax.f32 %v1575, 0.0
    %v1780 = vmax.f32 %v1577, 0.0
    %v1781 = vmax.f32 %v1664, 0.0
    %v1782 = vmax.f32 %v1666, 0.0
    %v1783 = vmax.f32 %v1753, 0.0
    %v1784 = vmax.f32 %v1225, 0.0
    %v1785 = vmax.f32 %v1227, 0.0
    %v1786 = vmax.f32 %v1314, 0.0
    %v1787 = vmax.f32 %v1316, 0.0
    %v1788 = vmax.f32 %v1403, 0.0
    %v1789 = vmax.f32 %v1405, 0.0
    %v1790 = vmax.f32 %v1492, 0.0
    %v1791 = vmax.f32 %v1494, 0.0
    %v1792 = vmax.f32 %v1581, 0.0
    %v1793 = vmax.f32 %v1583, 0.0
    %v1794 = vmax.f32 %v1670, 0.0
    %v1795 = vmax.f32 %v1672, 0.0
    %v1796 = vmax.f32 %v1758, 0.0
    %v1797 = vmax.f32 %v1231, 0.0
    %v1798 = vmax.f32 %v1233, 0.0
    %v1799 = vmax.f32 %v1320, 0.0
    %v1800 = vmax.f32 %v1322, 0.0
    %v1801 = vmax.f32 %v1409, 0.0
    %v1802 = vmax.f32 %v1411, 0.0
    %v1803 = vmax.f32 %v1498, 0.0
    %v1804 = vmax.f32 %v1500, 0.0
    %v1805 = vmax.f32 %v1587, 0.0
    %v1806 = vmax.f32 %v1589, 0.0
    %v1807 = vmax.f32 %v1676, 0.0
    %v1808 = vmax.f32 %v1678, 0.0
    %v1809 = vmax.f32 %v1763, 0.0
    %v1810 = vmax.f32 %v1237, 0.0
    %v1811 = vmax.f32 %v1239, 0.0
    %v1812 = vmax.f32 %v1326, 0.0
    %v1813 = vmax.f32 %v1328, 0.0
    %v1814 = vmax.f32 %v1415, 0.0
    %v1815 = vmax.f32 %v1417, 0.0
    %v1816 = vmax.f32 %v1504, 0.0
    %v1817 = vmax.f32 %v1506, 0.0
    %v1818 = vmax.f32 %v1593, 0.0
    %v1819 = vmax.f32 %v1595, 0.0
    %v1820 = vmax.f32 %v1682, 0.0
    %v1821 = vmax.f32 %v1684, 0.0
    %v1822 = vmax.f32 %v1768, 0.0
    %v1823 = vld [vmem:[#allocation8] sm:$0xff]
    %v1824 = vld [vmem:[#allocation8 + $0x8] sm:$0xff]
    %v1825 = vld [vmem:[#allocation8 + $0x10] sm:$0xff]
    %v1826 = vld [vmem:[#allocation8 + $0x18] sm:$0xff]
    %v1827 = vld [vmem:[%s7] sm:$0xff]
    %v1828 = vld [vmem:[%s7 + $0x8] sm:$0xff]
    %v1829 = vld [vmem:[%s7 + $0x10] sm:$0xff]
    %v1830 = vld [vmem:[%s7 + $0x18] sm:$0xff]
    %1832 = vset.pattern.permute.xlu0 0
    %1833 = vperm.xlu0 %1832, %v1827
    %v1834 = vpop.permute.xlu0 %1833
    %1837 = vset.pattern.permute.xlu0 0
    %1838 = vperm.xlu0 %1837, %v1828
    %v1839 = vpop.permute.xlu0 %1838
    %1842 = vset.pattern.permute.xlu0 0
    %1843 = vperm.xlu0 %1842, %v1829
    %v1844 = vpop.permute.xlu0 %1843
    %1847 = vset.pattern.permute.xlu0 0
    %1848 = vperm.xlu0 %1847, %v1830
    %v1849 = vpop.permute.xlu0 %1848
    %vm1851 = vcmask 261120
    %v1853 = vsel %vm1851, %v1823, 0
    %v1856 = vsel %vm1851, %v1824, 0
    %v1859 = vsel %vm1851, %v1825, 0
    %v1862 = vsel %vm1851, %v1826, 0
    %1864 = vmatprep.subr.mxu0 %v1772
    %1865 = vmatpush1.msra.mxu0 %v1771
    %1866 = vmatprep.subr.mxu0 %v1785
    %1867 = vmatpush1.msra.mxu0 %v1784
    %1868 = vmatprep.subr.mxu0 %v1798
    %1869 = vmatpush1.msra.mxu0 %v1797
    %1870 = vmatprep.subr.mxu0 %v1811
    %1871 = vmatpush1.msra.mxu0 %v1810
    %1872 = vmatprep.subr.mxu0 0.0
    %1873 = vmatpush1.msra.mxu0 0.0
    %1874 = vmatprep.subr.mxu0 0.0
    %1875 = vmatpush1.msra.mxu0 0.0
    %1876 = vmatprep.subr.mxu0 0.0
    %1877 = vmatpush1.msra.mxu0 0.0
    %1878 = vmatprep.subr.mxu0 0.0
    %1879 = vmatpush1.msra.mxu0 0.0
    %1880 = vmatprep.subr.mxu0 0.0
    %1881 = vmatpush1.msra.mxu0 0.0
    %1882 = vmatprep.subr.mxu0 0.0
    %1883 = vmatpush1.msra.mxu0 0.0
    %1884 = vmatprep.subr.mxu0 0.0
    %1885 = vmatpush1.msra.mxu0 0.0
    %1886 = vmatprep.subr.mxu0 0.0
    %1887 = vmatpush1.msra.mxu0 0.0
    %1888 = vmatprep.subr.mxu0 0.0
    %1889 = vmatpush1.msra.mxu0 0.0
    %1890 = vmatprep.subr.mxu0 0.0
    %1891 = vmatpush1.msra.mxu0 0.0
    %1892 = vmatprep.subr.mxu0 0.0
    %1893 = vmatpush1.msra.mxu0 0.0
    %1894 = vmatprep.subr.mxu0 0.0
    %1895 = vmatpush1.msra.mxu0 0.0
    %1896 = vmatprep.subr.mxu0 0.0
    %1897 = vmatpush1.msra.mxu0 0.0
    %1898 = vmatprep.subr.mxu0 0.0
    %1899 = vmatpush1.msra.mxu0 0.0
    %1900 = vmatprep.subr.mxu0 0.0
    %1901 = vmatpush1.msra.mxu0 0.0
    %1902 = vmatprep.subr.mxu0 0.0
    %1903 = vmatpush1.msra.mxu0 0.0
    %1904 = vmatprep.subr.mxu0 0.0
    %1905 = vmatpush1.msra.mxu0 0.0
    %1906 = vmatprep.subr.mxu0 0.0
    %1907 = vmatpush1.msra.mxu0 0.0
    %1908 = vmatprep.subr.mxu0 0.0
    %1909 = vmatpush1.msra.mxu0 0.0
    %1910 = vmatprep.subr.mxu0 0.0
    %1911 = vmatpush1.msra.mxu0 0.0
    %1912 = vmatprep.subr.mxu0 0.0
    %1913 = vmatpush1.msra.mxu0 0.0
    %1914 = vmatprep.subr.mxu0 0.0
    %1915 = vmatpush1.msra.mxu0 0.0
    %1916 = vmatprep.subr.mxu0 0.0
    %1917 = vmatpush1.msra.mxu0 0.0
    %1918 = vmatprep.subr.mxu0 0.0
    %1919 = vmatpush1.msra.mxu0 0.0
    %1920 = vmatprep.subr.mxu0 0.0
    %1921 = vmatpush1.msra.mxu0 0.0
    %1922 = vmatprep.subr.mxu0 0.0
    %1923 = vmatpush1.msra.mxu0 0.0
    %1924 = vmatprep.subr.mxu0 0.0
    %1925 = vmatpush1.msra.mxu0 0.0
    %1926 = vmatprep.subr.mxu0 0.0
    %1927 = vmatpush1.msra.mxu0 0.0
    %1928 = vmatprep.mubr.f32.mxu0 0.0
    %1929 = vmatmul.mubr.f32.gmra.mrb[0].mxu0 %v1853
    %v1930 = vpop.f32.mrb[0].mxu0
    %v1931 = vadd.f32 %v1834, %v1930
    %v1932 = vpop.f32.mrb[0].mxu0
    %v1933 = vadd.f32 %v1834, %v1932
    %1934 = vmatprep.mubr.f32.mxu0 0.0
    %1935 = vmatmul.mubr.f32.gmra.mrb[0].mxu0 %v1856
    %v1936 = vpop.f32.mrb[0].mxu0
    %v1937 = vadd.f32 %v1839, %v1936
    %v1938 = vpop.f32.mrb[0].mxu0
    %v1939 = vadd.f32 %v1839, %v1938
    %1940 = vmatprep.mubr.f32.mxu0 0.0
    %1941 = vmatmul.mubr.f32.gmra.mrb[0].mxu0 %v1859
    %v1942 = vpop.f32.mrb[0].mxu0
    %v1943 = vadd.f32 %v1844, %v1942
    %v1944 = vpop.f32.mrb[0].mxu0
    %v1945 = vadd.f32 %v1844, %v1944
    %1946 = vmatprep.mubr.f32.mxu0 0.0
    %1947 = vmatmul.mubr.f32.gmra.mrb[0].mxu0 %v1862
    %v1948 = vpop.f32.mrb[0].mxu0
    %v1949 = vadd.f32 %v1849, %v1948
    %v1950 = vpop.f32.mrb[0].mxu0
    %v1951 = vadd.f32 %v1849, %v1950
    %1952 = vdwg.mxu0
    %1953 = vmatprep.subr.mxu0 %v1774
    %1954 = vmatpush1.msra.mxu0 %v1773
    %1955 = vmatprep.subr.mxu0 %v1787
    %1956 = vmatpush1.msra.mxu0 %v1786
    %1957 = vmatprep.subr.mxu0 %v1800
    %1958 = vmatpush1.msra.mxu0 %v1799
    %1959 = vmatprep.subr.mxu0 %v1813
    %1960 = vmatpush1.msra.mxu0 %v1812
    %1961 = vmatprep.subr.mxu0 0.0
    %1962 = vmatpush1.msra.mxu0 0.0
    %1963 = vmatprep.subr.mxu0 0.0
    %1964 = vmatpush1.msra.mxu0 0.0
    %1965 = vmatprep.subr.mxu0 0.0
    %1966 = vmatpush1.msra.mxu0 0.0
    %1967 = vmatprep.subr.mxu0 0.0
    %1968 = vmatpush1.msra.mxu0 0.0
    %1969 = vmatprep.subr.mxu0 0.0
    %1970 = vmatpush1.msra.mxu0 0.0
    %1971 = vmatprep.subr.mxu0 0.0
    %1972 = vmatpush1.msra.mxu0 0.0
    %1973 = vmatprep.subr.mxu0 0.0
    %1974 = vmatpush1.msra.mxu0 0.0
    %1975 = vmatprep.subr.mxu0 0.0
    %1976 = vmatpush1.msra.mxu0 0.0
    %1977 = vmatprep.subr.mxu0 0.0
    %1978 = vmatpush1.msra.mxu0 0.0
    %1979 = vmatprep.subr.mxu0 0.0
    %1980 = vmatpush1.msra.mxu0 0.0
    %1981 = vmatprep.subr.mxu0 0.0
    %1982 = vmatpush1.msra.mxu0 0.0
    %1983 = vmatprep.subr.mxu0 0.0
    %1984 = vmatpush1.msra.mxu0 0.0
    %1985 = vmatprep.subr.mxu0 0.0
    %1986 = vmatpush1.msra.mxu0 0.0
    %1987 = vmatprep.subr.mxu0 0.0
    %1988 = vmatpush1.msra.mxu0 0.0
    %1989 = vmatprep.subr.mxu0 0.0
    %1990 = vmatpush1.msra.mxu0 0.0
    %1991 = vmatprep.subr.mxu0 0.0
    %1992 = vmatpush1.msra.mxu0 0.0
    %1993 = vmatprep.subr.mxu0 0.0
    %1994 = vmatpush1.msra.mxu0 0.0
    %1995 = vmatprep.subr.mxu0 0.0
    %1996 = vmatpush1.msra.mxu0 0.0
    %1997 = vmatprep.subr.mxu0 0.0
    %1998 = vmatpush1.msra.mxu0 0.0
    %1999 = vmatprep.subr.mxu0 0.0
    %2000 = vmatpush1.msra.mxu0 0.0
    %2001 = vmatprep.subr.mxu0 0.0
    %2002 = vmatpush1.msra.mxu0 0.0
    %2003 = vmatprep.subr.mxu0 0.0
    %2004 = vmatpush1.msra.mxu0 0.0
    %2005 = vmatprep.subr.mxu0 0.0
    %2006 = vmatpush1.msra.mxu0 0.0
    %2007 = vmatprep.subr.mxu0 0.0
    %2008 = vmatpush1.msra.mxu0 0.0
    %2009 = vmatprep.subr.mxu0 0.0
    %2010 = vmatpush1.msra.mxu0 0.0
    %2011 = vmatprep.subr.mxu0 0.0
    %2012 = vmatpush1.msra.mxu0 0.0
    %2013 = vmatprep.subr.mxu0 0.0
    %2014 = vmatpush1.msra.mxu0 0.0
    %2015 = vmatprep.subr.mxu0 0.0
    %2016 = vmatpush1.msra.mxu0 0.0
    %2017 = vmatprep.mubr.f32.mxu0 0.0
    %2018 = vmatmul.mubr.f32.gmra.mrb[0].mxu0 %v1853
    %v2019 = vpop.f32.mrb[0].mxu0
    %v2020 = vadd.f32 %v1834, %v2019
    %v2021 = vpop.f32.mrb[0].mxu0
    %v2022 = vadd.f32 %v1834, %v2021
    %2023 = vmatprep.mubr.f32.mxu0 0.0
    %2024 = vmatmul.mubr.f32.gmra.mrb[0].mxu0 %v1856
    %v2025 = vpop.f32.mrb[0].mxu0
    %v2026 = vadd.f32 %v1839, %v2025
    %v2027 = vpop.f32.mrb[0].mxu0
    %v2028 = vadd.f32 %v1839, %v2027
    %2029 = vmatprep.mubr.f32.mxu0 0.0
    %2030 = vmatmul.mubr.f32.gmra.mrb[0].mxu0 %v1859
    %v2031 = vpop.f32.mrb[0].mxu0
    %v2032 = vadd.f32 %v1844, %v2031
    %v2033 = vpop.f32.mrb[0].mxu0
    %v2034 = vadd.f32 %v1844, %v2033
    %2035 = vmatprep.mubr.f32.mxu0 0.0
    %2036 = vmatmul.mubr.f32.gmra.mrb[0].mxu0 %v1862
    %v2037 = vpop.f32.mrb[0].mxu0
    %v2038 = vadd.f32 %v1849, %v2037
    %v2039 = vpop.f32.mrb[0].mxu0
    %v2040 = vadd.f32 %v1849, %v2039
    %2041 = vdwg.mxu0
    %2042 = vmatprep.subr.mxu0 %v1776
    %2043 = vmatpush1.msra.mxu0 %v1775
    %2044 = vmatprep.subr.mxu0 %v1789
    %2045 = vmatpush1.msra.mxu0 %v1788
    %2046 = vmatprep.subr.mxu0 %v1802
    %2047 = vmatpush1.msra.mxu0 %v1801
    %2048 = vmatprep.subr.mxu0 %v1815
    %2049 = vmatpush1.msra.mxu0 %v1814
    %2050 = vmatprep.subr.mxu0 0.0
    %2051 = vmatpush1.msra.mxu0 0.0
    %2052 = vmatprep.subr.mxu0 0.0
    %2053 = vmatpush1.msra.mxu0 0.0
    %2054 = vmatprep.subr.mxu0 0.0
    %2055 = vmatpush1.msra.mxu0 0.0
    %2056 = vmatprep.subr.mxu0 0.0
    %2057 = vmatpush1.msra.mxu0 0.0
    %2058 = vmatprep.subr.mxu0 0.0
    %2059 = vmatpush1.msra.mxu0 0.0
    %2060 = vmatprep.subr.mxu0 0.0
    %2061 = vmatpush1.msra.mxu0 0.0
    %2062 = vmatprep.subr.mxu0 0.0
    %2063 = vmatpush1.msra.mxu0 0.0
    %2064 = vmatprep.subr.mxu0 0.0
    %2065 = vmatpush1.msra.mxu0 0.0
    %2066 = vmatprep.subr.mxu0 0.0
    %2067 = vmatpush1.msra.mxu0 0.0
    %2068 = vmatprep.subr.mxu0 0.0
    %2069 = vmatpush1.msra.mxu0 0.0
    %2070 = vmatprep.subr.mxu0 0.0
    %2071 = vmatpush1.msra.mxu0 0.0
    %2072 = vmatprep.subr.mxu0 0.0
    %2073 = vmatpush1.msra.mxu0 0.0
    %2074 = vmatprep.subr.mxu0 0.0
    %2075 = vmatpush1.msra.mxu0 0.0
    %2076 = vmatprep.subr.mxu0 0.0
    %2077 = vmatpush1.msra.mxu0 0.0
    %2078 = vmatprep.subr.mxu0 0.0
    %2079 = vmatpush1.msra.mxu0 0.0
    %2080 = vmatprep.subr.mxu0 0.0
    %2081 = vmatpush1.msra.mxu0 0.0
    %2082 = vmatprep.subr.mxu0 0.0
    %2083 = vmatpush1.msra.mxu0 0.0
    %2084 = vmatprep.subr.mxu0 0.0
    %2085 = vmatpush1.msra.mxu0 0.0
    %2086 = vmatprep.subr.mxu0 0.0
    %2087 = vmatpush1.msra.mxu0 0.0
    %2088 = vmatprep.subr.mxu0 0.0
    %2089 = vmatpush1.msra.mxu0 0.0
    %2090 = vmatprep.subr.mxu0 0.0
    %2091 = vmatpush1.msra.mxu0 0.0
    %2092 = vmatprep.subr.mxu0 0.0
    %2093 = vmatpush1.msra.mxu0 0.0
    %2094 = vmatprep.subr.mxu0 0.0
    %2095 = vmatpush1.msra.mxu0 0.0
    %2096 = vmatprep.subr.mxu0 0.0
    %2097 = vmatpush1.msra.mxu0 0.0
    %2098 = vmatprep.subr.mxu0 0.0
    %2099 = vmatpush1.msra.mxu0 0.0
    %2100 = vmatprep.subr.mxu0 0.0
    %2101 = vmatpush1.msra.mxu0 0.0
    %2102 = vmatprep.subr.mxu0 0.0
    %2103 = vmatpush1.msra.mxu0 0.0
    %2104 = vmatprep.subr.mxu0 0.0
    %2105 = vmatpush1.msra.mxu0 0.0
    %2106 = vmatprep.mubr.f32.mxu0 0.0
    %2107 = vmatmul.mubr.f32.gmra.mrb[0].mxu0 %v1853
    %v2108 = vpop.f32.mrb[0].mxu0
    %v2109 = vadd.f32 %v1834, %v2108
    %v2110 = vpop.f32.mrb[0].mxu0
    %v2111 = vadd.f32 %v1834, %v2110
    %2112 = vmatprep.mubr.f32.mxu0 0.0
    %2113 = vmatmul.mubr.f32.gmra.mrb[0].mxu0 %v1856
    %v2114 = vpop.f32.mrb[0].mxu0
    %v2115 = vadd.f32 %v1839, %v2114
    %v2116 = vpop.f32.mrb[0].mxu0
    %v2117 = vadd.f32 %v1839, %v2116
    %2118 = vmatprep.mubr.f32.mxu0 0.0
    %2119 = vmatmul.mubr.f32.gmra.mrb[0].mxu0 %v1859
    %v2120 = vpop.f32.mrb[0].mxu0
    %v2121 = vadd.f32 %v1844, %v2120
    %v2122 = vpop.f32.mrb[0].mxu0
    %v2123 = vadd.f32 %v1844, %v2122
    %2124 = vmatprep.mubr.f32.mxu0 0.0
    %2125 = vmatmul.mubr.f32.gmra.mrb[0].mxu0 %v1862
    %v2126 = vpop.f32.mrb[0].mxu0
    %v2127 = vadd.f32 %v1849, %v2126
    %v2128 = vpop.f32.mrb[0].mxu0
    %v2129 = vadd.f32 %v1849, %v2128
    %2130 = vdwg.mxu0
    %2131 = vmatprep.subr.mxu0 %v1778
    %2132 = vmatpush1.msra.mxu0 %v1777
    %2133 = vmatprep.subr.mxu0 %v1791
    %2134 = vmatpush1.msra.mxu0 %v1790
    %2135 = vmatprep.subr.mxu0 %v1804
    %2136 = vmatpush1.msra.mxu0 %v1803
    %2137 = vmatprep.subr.mxu0 %v1817
    %2138 = vmatpush1.msra.mxu0 %v1816
    %2139 = vmatprep.subr.mxu0 0.0
    %2140 = vmatpush1.msra.mxu0 0.0
    %2141 = vmatprep.subr.mxu0 0.0
    %2142 = vmatpush1.msra.mxu0 0.0
    %2143 = vmatprep.subr.mxu0 0.0
    %2144 = vmatpush1.msra.mxu0 0.0
    %2145 = vmatprep.subr.mxu0 0.0
    %2146 = vmatpush1.msra.mxu0 0.0
    %2147 = vmatprep.subr.mxu0 0.0
    %2148 = vmatpush1.msra.mxu0 0.0
    %2149 = vmatprep.subr.mxu0 0.0
    %2150 = vmatpush1.msra.mxu0 0.0
    %2151 = vmatprep.subr.mxu0 0.0
    %2152 = vmatpush1.msra.mxu0 0.0
    %2153 = vmatprep.subr.mxu0 0.0
    %2154 = vmatpush1.msra.mxu0 0.0
    %2155 = vmatprep.subr.mxu0 0.0
    %2156 = vmatpush1.msra.mxu0 0.0
    %2157 = vmatprep.subr.mxu0 0.0
    %2158 = vmatpush1.msra.mxu0 0.0
    %2159 = vmatprep.subr.mxu0 0.0
    %2160 = vmatpush1.msra.mxu0 0.0
    %2161 = vmatprep.subr.mxu0 0.0
    %2162 = vmatpush1.msra.mxu0 0.0
    %2163 = vmatprep.subr.mxu0 0.0
    %2164 = vmatpush1.msra.mxu0 0.0
    %2165 = vmatprep.subr.mxu0 0.0
    %2166 = vmatpush1.msra.mxu0 0.0
    %2167 = vmatprep.subr.mxu0 0.0
    %2168 = vmatpush1.msra.mxu0 0.0
    %2169 = vmatprep.subr.mxu0 0.0
    %2170 = vmatpush1.msra.mxu0 0.0
    %2171 = vmatprep.subr.mxu0 0.0
    %2172 = vmatpush1.msra.mxu0 0.0
    %2173 = vmatprep.subr.mxu0 0.0
    %2174 = vmatpush1.msra.mxu0 0.0
    %2175 = vmatprep.subr.mxu0 0.0
    %2176 = vmatpush1.msra.mxu0 0.0
    %2177 = vmatprep.subr.mxu0 0.0
    %2178 = vmatpush1.msra.mxu0 0.0
    %2179 = vmatprep.subr.mxu0 0.0
    %2180 = vmatpush1.msra.mxu0 0.0
    %2181 = vmatprep.subr.mxu0 0.0
    %2182 = vmatpush1.msra.mxu0 0.0
    %2183 = vmatprep.subr.mxu0 0.0
    %2184 = vmatpush1.msra.mxu0 0.0
    %2185 = vmatprep.subr.mxu0 0.0
    %2186 = vmatpush1.msra.mxu0 0.0
    %2187 = vmatprep.subr.mxu0 0.0
    %2188 = vmatpush1.msra.mxu0 0.0
    %2189 = vmatprep.subr.mxu0 0.0
    %2190 = vmatpush1.msra.mxu0 0.0
    %2191 = vmatprep.subr.mxu0 0.0
    %2192 = vmatpush1.msra.mxu0 0.0
    %2193 = vmatprep.subr.mxu0 0.0
    %2194 = vmatpush1.msra.mxu0 0.0
    %2195 = vmatprep.mubr.f32.mxu0 0.0
    %2196 = vmatmul.mubr.f32.gmra.mrb[0].mxu0 %v1853
    %v2197 = vpop.f32.mrb[0].mxu0
    %v2198 = vadd.f32 %v1834, %v2197
    %v2199 = vpop.f32.mrb[0].mxu0
    %v2200 = vadd.f32 %v1834, %v2199
    %2201 = vmatprep.mubr.f32.mxu0 0.0
    %2202 = vmatmul.mubr.f32.gmra.mrb[0].mxu0 %v1856
    %v2203 = vpop.f32.mrb[0].mxu0
    %v2204 = vadd.f32 %v1839, %v2203
    %v2205 = vpop.f32.mrb[0].mxu0
    %v2206 = vadd.f32 %v1839, %v2205
    %2207 = vmatprep.mubr.f32.mxu0 0.0
    %2208 = vmatmul.mubr.f32.gmra.mrb[0].mxu0 %v1859
    %v2209 = vpop.f32.mrb[0].mxu0
    %v2210 = vadd.f32 %v1844, %v2209
    %v2211 = vpop.f32.mrb[0].mxu0
    %v2212 = vadd.f32 %v1844, %v2211
    %2213 = vmatprep.mubr.f32.mxu0 0.0
    %2214 = vmatmul.mubr.f32.gmra.mrb[0].mxu0 %v1862
    %v2215 = vpop.f32.mrb[0].mxu0
    %v2216 = vadd.f32 %v1849, %v2215
    %v2217 = vpop.f32.mrb[0].mxu0
    %v2218 = vadd.f32 %v1849, %v2217
    %2219 = vdwg.mxu0
    %2220 = vmatprep.subr.mxu0 %v1780
    %2221 = vmatpush1.msra.mxu0 %v1779
    %2222 = vmatprep.subr.mxu0 %v1793
    %2223 = vmatpush1.msra.mxu0 %v1792
    %2224 = vmatprep.subr.mxu0 %v1806
    %2225 = vmatpush1.msra.mxu0 %v1805
    %2226 = vmatprep.subr.mxu0 %v1819
    %2227 = vmatpush1.msra.mxu0 %v1818
    %2228 = vmatprep.subr.mxu0 0.0
    %2229 = vmatpush1.msra.mxu0 0.0
    %2230 = vmatprep.subr.mxu0 0.0
    %2231 = vmatpush1.msra.mxu0 0.0
    %2232 = vmatprep.subr.mxu0 0.0
    %2233 = vmatpush1.msra.mxu0 0.0
    %2234 = vmatprep.subr.mxu0 0.0
    %2235 = vmatpush1.msra.mxu0 0.0
    %2236 = vmatprep.subr.mxu0 0.0
    %2237 = vmatpush1.msra.mxu0 0.0
    %2238 = vmatprep.subr.mxu0 0.0
    %2239 = vmatpush1.msra.mxu0 0.0
    %2240 = vmatprep.subr.mxu0 0.0
    %2241 = vmatpush1.msra.mxu0 0.0
    %2242 = vmatprep.subr.mxu0 0.0
    %2243 = vmatpush1.msra.mxu0 0.0
    %2244 = vmatprep.subr.mxu0 0.0
    %2245 = vmatpush1.msra.mxu0 0.0
    %2246 = vmatprep.subr.mxu0 0.0
    %2247 = vmatpush1.msra.mxu0 0.0
    %2248 = vmatprep.subr.mxu0 0.0
    %2249 = vmatpush1.msra.mxu0 0.0
    %2250 = vmatprep.subr.mxu0 0.0
    %2251 = vmatpush1.msra.mxu0 0.0
    %2252 = vmatprep.subr.mxu0 0.0
    %2253 = vmatpush1.msra.mxu0 0.0
    %2254 = vmatprep.subr.mxu0 0.0
    %2255 = vmatpush1.msra.mxu0 0.0
    %2256 = vmatprep.subr.mxu0 0.0
    %2257 = vmatpush1.msra.mxu0 0.0
    %2258 = vmatprep.subr.mxu0 0.0
    %2259 = vmatpush1.msra.mxu0 0.0
    %2260 = vmatprep.subr.mxu0 0.0
    %2261 = vmatpush1.msra.mxu0 0.0
    %2262 = vmatprep.subr.mxu0 0.0
    %2263 = vmatpush1.msra.mxu0 0.0
    %2264 = vmatprep.subr.mxu0 0.0
    %2265 = vmatpush1.msra.mxu0 0.0
    %2266 = vmatprep.subr.mxu0 0.0
    %2267 = vmatpush1.msra.mxu0 0.0
    %2268 = vmatprep.subr.mxu0 0.0
    %2269 = vmatpush1.msra.mxu0 0.0
    %2270 = vmatprep.subr.mxu0 0.0
    %2271 = vmatpush1.msra.mxu0 0.0
    %2272 = vmatprep.subr.mxu0 0.0
    %2273 = vmatpush1.msra.mxu0 0.0
    %2274 = vmatprep.subr.mxu0 0.0
    %2275 = vmatpush1.msra.mxu0 0.0
    %2276 = vmatprep.subr.mxu0 0.0
    %2277 = vmatpush1.msra.mxu0 0.0
    %2278 = vmatprep.subr.mxu0 0.0
    %2279 = vmatpush1.msra.mxu0 0.0
    %2280 = vmatprep.subr.mxu0 0.0
    %2281 = vmatpush1.msra.mxu0 0.0
    %2282 = vmatprep.subr.mxu0 0.0
    %2283 = vmatpush1.msra.mxu0 0.0
    %2284 = vmatprep.mubr.f32.mxu0 0.0
    %2285 = vmatmul.mubr.f32.gmra.mrb[0].mxu0 %v1853
    %v2286 = vpop.f32.mrb[0].mxu0
    %v2287 = vadd.f32 %v1834, %v2286
    %v2288 = vpop.f32.mrb[0].mxu0
    %v2289 = vadd.f32 %v1834, %v2288
    %2290 = vmatprep.mubr.f32.mxu0 0.0
    %2291 = vmatmul.mubr.f32.gmra.mrb[0].mxu0 %v1856
    %v2292 = vpop.f32.mrb[0].mxu0
    %v2293 = vadd.f32 %v1839, %v2292
    %v2294 = vpop.f32.mrb[0].mxu0
    %v2295 = vadd.f32 %v1839, %v2294
    %2296 = vmatprep.mubr.f32.mxu0 0.0
    %2297 = vmatmul.mubr.f32.gmra.mrb[0].mxu0 %v1859
    %v2298 = vpop.f32.mrb[0].mxu0
    %v2299 = vadd.f32 %v1844, %v2298
    %v2300 = vpop.f32.mrb[0].mxu0
    %v2301 = vadd.f32 %v1844, %v2300
    %2302 = vmatprep.mubr.f32.mxu0 0.0
    %2303 = vmatmul.mubr.f32.gmra.mrb[0].mxu0 %v1862
    %v2304 = vpop.f32.mrb[0].mxu0
    %v2305 = vadd.f32 %v1849, %v2304
    %v2306 = vpop.f32.mrb[0].mxu0
    %v2307 = vadd.f32 %v1849, %v2306
    %2308 = vdwg.mxu0
    %2309 = vmatprep.subr.mxu0 %v1782
    %2310 = vmatpush1.msra.mxu0 %v1781
    %2311 = vmatprep.subr.mxu0 %v1795
    %2312 = vmatpush1.msra.mxu0 %v1794
    %2313 = vmatprep.subr.mxu0 %v1808
    %2314 = vmatpush1.msra.mxu0 %v1807
    %2315 = vmatprep.subr.mxu0 %v1821
    %2316 = vmatpush1.msra.mxu0 %v1820
    %2317 = vmatprep.subr.mxu0 0.0
    %2318 = vmatpush1.msra.mxu0 0.0
    %2319 = vmatprep.subr.mxu0 0.0
    %2320 = vmatpush1.msra.mxu0 0.0
    %2321 = vmatprep.subr.mxu0 0.0
    %2322 = vmatpush1.msra.mxu0 0.0
    %2323 = vmatprep.subr.mxu0 0.0
    %2324 = vmatpush1.msra.mxu0 0.0
    %2325 = vmatprep.subr.mxu0 0.0
    %2326 = vmatpush1.msra.mxu0 0.0
    %2327 = vmatprep.subr.mxu0 0.0
    %2328 = vmatpush1.msra.mxu0 0.0
    %2329 = vmatprep.subr.mxu0 0.0
    %2330 = vmatpush1.msra.mxu0 0.0
    %2331 = vmatprep.subr.mxu0 0.0
    %2332 = vmatpush1.msra.mxu0 0.0
    %2333 = vmatprep.subr.mxu0 0.0
    %2334 = vmatpush1.msra.mxu0 0.0
    %2335 = vmatprep.subr.mxu0 0.0
    %2336 = vmatpush1.msra.mxu0 0.0
    %2337 = vmatprep.subr.mxu0 0.0
    %2338 = vmatpush1.msra.mxu0 0.0
    %2339 = vmatprep.subr.mxu0 0.0
    %2340 = vmatpush1.msra.mxu0 0.0
    %2341 = vmatprep.subr.mxu0 0.0
    %2342 = vmatpush1.msra.mxu0 0.0
    %2343 = vmatprep.subr.mxu0 0.0
    %2344 = vmatpush1.msra.mxu0 0.0
    %2345 = vmatprep.subr.mxu0 0.0
    %2346 = vmatpush1.msra.mxu0 0.0
    %2347 = vmatprep.subr.mxu0 0.0
    %2348 = vmatpush1.msra.mxu0 0.0
    %2349 = vmatprep.subr.mxu0 0.0
    %2350 = vmatpush1.msra.mxu0 0.0
    %2351 = vmatprep.subr.mxu0 0.0
    %2352 = vmatpush1.msra.mxu0 0.0
    %2353 = vmatprep.subr.mxu0 0.0
    %2354 = vmatpush1.msra.mxu0 0.0
    %2355 = vmatprep.subr.mxu0 0.0
    %2356 = vmatpush1.msra.mxu0 0.0
    %2357 = vmatprep.subr.mxu0 0.0
    %2358 = vmatpush1.msra.mxu0 0.0
    %2359 = vmatprep.subr.mxu0 0.0
    %2360 = vmatpush1.msra.mxu0 0.0
    %2361 = vmatprep.subr.mxu0 0.0
    %2362 = vmatpush1.msra.mxu0 0.0
    %2363 = vmatprep.subr.mxu0 0.0
    %2364 = vmatpush1.msra.mxu0 0.0
    %2365 = vmatprep.subr.mxu0 0.0
    %2366 = vmatpush1.msra.mxu0 0.0
    %2367 = vmatprep.subr.mxu0 0.0
    %2368 = vmatpush1.msra.mxu0 0.0
    %2369 = vmatprep.subr.mxu0 0.0
    %2370 = vmatpush1.msra.mxu0 0.0
    %2371 = vmatprep.subr.mxu0 0.0
    %2372 = vmatpush1.msra.mxu0 0.0
    %2373 = vmatprep.mubr.f32.mxu0 0.0
    %2374 = vmatmul.mubr.f32.gmra.mrb[0].mxu0 %v1853
    %v2375 = vpop.f32.mrb[0].mxu0
    %v2376 = vadd.f32 %v1834, %v2375
    %v2377 = vpop.f32.mrb[0].mxu0
    %v2378 = vadd.f32 %v1834, %v2377
    %2379 = vmatprep.mubr.f32.mxu0 0.0
    %2380 = vmatmul.mubr.f32.gmra.mrb[0].mxu0 %v1856
    %v2381 = vpop.f32.mrb[0].mxu0
    %v2382 = vadd.f32 %v1839, %v2381
    %v2383 = vpop.f32.mrb[0].mxu0
    %v2384 = vadd.f32 %v1839, %v2383
    %2385 = vmatprep.mubr.f32.mxu0 0.0
    %2386 = vmatmul.mubr.f32.gmra.mrb[0].mxu0 %v1859
    %v2387 = vpop.f32.mrb[0].mxu0
    %v2388 = vadd.f32 %v1844, %v2387
    %v2389 = vpop.f32.mrb[0].mxu0
    %v2390 = vadd.f32 %v1844, %v2389
    %2391 = vmatprep.mubr.f32.mxu0 0.0
    %2392 = vmatmul.mubr.f32.gmra.mrb[0].mxu0 %v1862
    %v2393 = vpop.f32.mrb[0].mxu0
    %v2394 = vadd.f32 %v1849, %v2393
    %v2395 = vpop.f32.mrb[0].mxu0
    %v2396 = vadd.f32 %v1849, %v2395
    %2397 = vdwg.mxu0
    %2398 = vmatprep.subr.mxu0 0.0
    %2399 = vmatpush1.msra.mxu0 %v1783
    %2400 = vmatprep.subr.mxu0 0.0
    %2401 = vmatpush1.msra.mxu0 %v1796
    %2402 = vmatprep.subr.mxu0 0.0
    %2403 = vmatpush1.msra.mxu0 %v1809
    %2404 = vmatprep.subr.mxu0 0.0
    %2405 = vmatpush1.msra.mxu0 %v1822
    %2406 = vmatprep.subr.mxu0 0.0
    %2407 = vmatpush1.msra.mxu0 0.0
    %2408 = vmatprep.subr.mxu0 0.0
    %2409 = vmatpush1.msra.mxu0 0.0
    %2410 = vmatprep.subr.mxu0 0.0
    %2411 = vmatpush1.msra.mxu0 0.0
    %2412 = vmatprep.subr.mxu0 0.0
    %2413 = vmatpush1.msra.mxu0 0.0
    %2414 = vmatprep.subr.mxu0 0.0
    %2415 = vmatpush1.msra.mxu0 0.0
    %2416 = vmatprep.subr.mxu0 0.0
    %2417 = vmatpush1.msra.mxu0 0.0
    %2418 = vmatprep.subr.mxu0 0.0
    %2419 = vmatpush1.msra.mxu0 0.0
    %2420 = vmatprep.subr.mxu0 0.0
    %2421 = vmatpush1.msra.mxu0 0.0
    %2422 = vmatprep.subr.mxu0 0.0
    %2423 = vmatpush1.msra.mxu0 0.0
    %2424 = vmatprep.subr.mxu0 0.0
    %2425 = vmatpush1.msra.mxu0 0.0
    %2426 = vmatprep.subr.mxu0 0.0
    %2427 = vmatpush1.msra.mxu0 0.0
    %2428 = vmatprep.subr.mxu0 0.0
    %2429 = vmatpush1.msra.mxu0 0.0
    %2430 = vmatprep.subr.mxu0 0.0
    %2431 = vmatpush1.msra.mxu0 0.0
    %2432 = vmatprep.subr.mxu0 0.0
    %2433 = vmatpush1.msra.mxu0 0.0
    %2434 = vmatprep.subr.mxu0 0.0
    %2435 = vmatpush1.msra.mxu0 0.0
    %2436 = vmatprep.subr.mxu0 0.0
    %2437 = vmatpush1.msra.mxu0 0.0
    %2438 = vmatprep.subr.mxu0 0.0
    %2439 = vmatpush1.msra.mxu0 0.0
    %2440 = vmatprep.subr.mxu0 0.0
    %2441 = vmatpush1.msra.mxu0 0.0
    %2442 = vmatprep.subr.mxu0 0.0
    %2443 = vmatpush1.msra.mxu0 0.0
    %2444 = vmatprep.subr.mxu0 0.0
    %2445 = vmatpush1.msra.mxu0 0.0
    %2446 = vmatprep.subr.mxu0 0.0
    %2447 = vmatpush1.msra.mxu0 0.0
    %2448 = vmatprep.subr.mxu0 0.0
    %2449 = vmatpush1.msra.mxu0 0.0
    %2450 = vmatprep.subr.mxu0 0.0
    %2451 = vmatpush1.msra.mxu0 0.0
    %2452 = vmatprep.subr.mxu0 0.0
    %2453 = vmatpush1.msra.mxu0 0.0
    %2454 = vmatprep.subr.mxu0 0.0
    %2455 = vmatpush1.msra.mxu0 0.0
    %2456 = vmatprep.subr.mxu0 0.0
    %2457 = vmatpush1.msra.mxu0 0.0
    %2458 = vmatprep.subr.mxu0 0.0
    %2459 = vmatpush1.msra.mxu0 0.0
    %2460 = vmatprep.subr.mxu0 0.0
    %2461 = vmatpush1.msra.mxu0 0.0
    %2462 = vmatprep.mubr.f32.mxu0 0.0
    %2463 = vmatmul.mubr.f32.gmra.mrb[0].mxu0 %v1853
    %v2464 = vpop.f32.mrb[0].mxu0
    %v2465 = vadd.f32 %v1834, %v2464
    %v2466 = vpop.f32.mrb[0].mxu0
    %2467 = vmatprep.mubr.f32.mxu0 0.0
    %2468 = vmatmul.mubr.f32.gmra.mrb[0].mxu0 %v1856
    %v2469 = vpop.f32.mrb[0].mxu0
    %v2470 = vadd.f32 %v1839, %v2469
    %v2471 = vpop.f32.mrb[0].mxu0
    %2472 = vmatprep.mubr.f32.mxu0 0.0
    %2473 = vmatmul.mubr.f32.gmra.mrb[0].mxu0 %v1859
    %v2474 = vpop.f32.mrb[0].mxu0
    %v2475 = vadd.f32 %v1844, %v2474
    %v2476 = vpop.f32.mrb[0].mxu0
    %2477 = vmatprep.mubr.f32.mxu0 0.0
    %2478 = vmatmul.mubr.f32.gmra.mrb[0].mxu0 %v1862
    %v2479 = vpop.f32.mrb[0].mxu0
    %v2480 = vadd.f32 %v1849, %v2479
    %v2481 = vpop.f32.mrb[0].mxu0
    %2482 = vdwg.mxu0
    %v2483 = vmax.f32 %v1931, 0.0
    %v2484 = vmax.f32 %v1933, 0.0
    %v2485 = vmax.f32 %v2020, 0.0
    %v2486 = vmax.f32 %v2022, 0.0
    %v2487 = vmax.f32 %v2109, 0.0
    %v2488 = vmax.f32 %v2111, 0.0
    %v2489 = vmax.f32 %v2198, 0.0
    %v2490 = vmax.f32 %v2200, 0.0
    %v2491 = vmax.f32 %v2287, 0.0
    %v2492 = vmax.f32 %v2289, 0.0
    %v2493 = vmax.f32 %v2376, 0.0
    %v2494 = vmax.f32 %v2378, 0.0
    %v2495 = vmax.f32 %v2465, 0.0
    %v2496 = vmax.f32 %v1937, 0.0
    %v2497 = vmax.f32 %v1939, 0.0
    %v2498 = vmax.f32 %v2026, 0.0
    %v2499 = vmax.f32 %v2028, 0.0
    %v2500 = vmax.f32 %v2115, 0.0
    %v2501 = vmax.f32 %v2117, 0.0
    %v2502 = vmax.f32 %v2204, 0.0
    %v2503 = vmax.f32 %v2206, 0.0
    %v2504 = vmax.f32 %v2293, 0.0
    %v2505 = vmax.f32 %v2295, 0.0
    %v2506 = vmax.f32 %v2382, 0.0
    %v2507 = vmax.f32 %v2384, 0.0
    %v2508 = vmax.f32 %v2470, 0.0
    %v2509 = vmax.f32 %v1943, 0.0
    %v2510 = vmax.f32 %v1945, 0.0
    %v2511 = vmax.f32 %v2032, 0.0
    %v2512 = vmax.f32 %v2034, 0.0
    %v2513 = vmax.f32 %v2121, 0.0
    %v2514 = vmax.f32 %v2123, 0.0
    %v2515 = vmax.f32 %v2210, 0.0
    %v2516 = vmax.f32 %v2212, 0.0
    %v2517 = vmax.f32 %v2299, 0.0
    %v2518 = vmax.f32 %v2301, 0.0
    %v2519 = vmax.f32 %v2388, 0.0
    %v2520 = vmax.f32 %v2390, 0.0
    %v2521 = vmax.f32 %v2475, 0.0
    %v2522 = vmax.f32 %v1949, 0.0
    %v2523 = vmax.f32 %v1951, 0.0
    %v2524 = vmax.f32 %v2038, 0.0
    %v2525 = vmax.f32 %v2040, 0.0
    %v2526 = vmax.f32 %v2127, 0.0
    %v2527 = vmax.f32 %v2129, 0.0
    %v2528 = vmax.f32 %v2216, 0.0
    %v2529 = vmax.f32 %v2218, 0.0
    %v2530 = vmax.f32 %v2305, 0.0
    %v2531 = vmax.f32 %v2307, 0.0
    %v2532 = vmax.f32 %v2394, 0.0
    %v2533 = vmax.f32 %v2396, 0.0
    %v2534 = vmax.f32 %v2480, 0.0
    %v2535 = vld [vmem:[%s8] sm:$0x1]
    %v2536 = vld [vmem:[#allocation2] sm:$0x1]
    %2538 = vset.pattern.permute.xlu0 0
    %2539 = vperm.xlu0 %2538, %v2536
    %v2540 = vpop.permute.xlu0 %2539
    %v2542 = vlaneseq
    %v2543 = vshrl.u32 %v2542, 7
    %v2544 = vsub.s32 0, %v2543
    %v2545 = vrot.slane %v2540, %v2544
    %v2547 = vsel %vm1851, %v2535, 0
    %2549 = vmatprep.subr.mxu0 %v2484
    %2550 = vmatpush1.msra.mxu0 %v2483
    %2551 = vmatprep.subr.mxu0 %v2497
    %2552 = vmatpush1.msra.mxu0 %v2496
    %2553 = vmatprep.subr.mxu0 %v2510
    %2554 = vmatpush1.msra.mxu0 %v2509
    %2555 = vmatprep.subr.mxu0 %v2523
    %2556 = vmatpush1.msra.mxu0 %v2522
    %2557 = vmatprep.subr.mxu0 0.0
    %2558 = vmatpush1.msra.mxu0 0.0
    %2559 = vmatprep.subr.mxu0 0.0
    %2560 = vmatpush1.msra.mxu0 0.0
    %2561 = vmatprep.subr.mxu0 0.0
    %2562 = vmatpush1.msra.mxu0 0.0
    %2563 = vmatprep.subr.mxu0 0.0
    %2564 = vmatpush1.msra.mxu0 0.0
    %2565 = vmatprep.subr.mxu0 0.0
    %2566 = vmatpush1.msra.mxu0 0.0
    %2567 = vmatprep.subr.mxu0 0.0
    %2568 = vmatpush1.msra.mxu0 0.0
    %2569 = vmatprep.subr.mxu0 0.0
    %2570 = vmatpush1.msra.mxu0 0.0
    %2571 = vmatprep.subr.mxu0 0.0
    %2572 = vmatpush1.msra.mxu0 0.0
    %2573 = vmatprep.subr.mxu0 0.0
    %2574 = vmatpush1.msra.mxu0 0.0
    %2575 = vmatprep.subr.mxu0 0.0
    %2576 = vmatpush1.msra.mxu0 0.0
    %2577 = vmatprep.subr.mxu0 0.0
    %2578 = vmatpush1.msra.mxu0 0.0
    %2579 = vmatprep.subr.mxu0 0.0
    %2580 = vmatpush1.msra.mxu0 0.0
    %2581 = vmatprep.subr.mxu0 0.0
    %2582 = vmatpush1.msra.mxu0 0.0
    %2583 = vmatprep.subr.mxu0 0.0
    %2584 = vmatpush1.msra.mxu0 0.0
    %2585 = vmatprep.subr.mxu0 0.0
    %2586 = vmatpush1.msra.mxu0 0.0
    %2587 = vmatprep.subr.mxu0 0.0
    %2588 = vmatpush1.msra.mxu0 0.0
    %2589 = vmatprep.subr.mxu0 0.0
    %2590 = vmatpush1.msra.mxu0 0.0
    %2591 = vmatprep.subr.mxu0 0.0
    %2592 = vmatpush1.msra.mxu0 0.0
    %2593 = vmatprep.subr.mxu0 0.0
    %2594 = vmatpush1.msra.mxu0 0.0
    %2595 = vmatprep.subr.mxu0 0.0
    %2596 = vmatpush1.msra.mxu0 0.0
    %2597 = vmatprep.subr.mxu0 0.0
    %2598 = vmatpush1.msra.mxu0 0.0
    %2599 = vmatprep.subr.mxu0 0.0
    %2600 = vmatpush1.msra.mxu0 0.0
    %2601 = vmatprep.subr.mxu0 0.0
    %2602 = vmatpush1.msra.mxu0 0.0
    %2603 = vmatprep.subr.mxu0 0.0
    %2604 = vmatpush1.msra.mxu0 0.0
    %2605 = vmatprep.subr.mxu0 0.0
    %2606 = vmatpush1.msra.mxu0 0.0
    %2607 = vmatprep.subr.mxu0 0.0
    %2608 = vmatpush1.msra.mxu0 0.0
    %2609 = vmatprep.subr.mxu0 0.0
    %2610 = vmatpush1.msra.mxu0 0.0
    %2611 = vmatprep.subr.mxu0 0.0
    %2612 = vmatpush1.msra.mxu0 0.0
    %2613 = vmatprep.mubr.f32.mxu0 0.0
    %2614 = vmatmul.mubr.f32.gmra.mrb[0].mxu0 %v2547
    %v2615 = vpop.f32.mrb[0].mxu0
    %v2616 = vadd.f32 %v2545, %v2615
    %v2617 = vpop.f32.mrb[0].mxu0
    %v2618 = vadd.f32 %v2545, %v2617
    %2619 = vdwg.mxu0
    %2620 = vmatprep.subr.mxu0 %v2486
    %2621 = vmatpush1.msra.mxu0 %v2485
    %2622 = vmatprep.subr.mxu0 %v2499
    %2623 = vmatpush1.msra.mxu0 %v2498
    %2624 = vmatprep.subr.mxu0 %v2512
    %2625 = vmatpush1.msra.mxu0 %v2511
    %2626 = vmatprep.subr.mxu0 %v2525
    %2627 = vmatpush1.msra.mxu0 %v2524
    %2628 = vmatprep.subr.mxu0 0.0
    %2629 = vmatpush1.msra.mxu0 0.0
    %2630 = vmatprep.subr.mxu0 0.0
    %2631 = vmatpush1.msra.mxu0 0.0
    %2632 = vmatprep.subr.mxu0 0.0
    %2633 = vmatpush1.msra.mxu0 0.0
    %2634 = vmatprep.subr.mxu0 0.0
    %2635 = vmatpush1.msra.mxu0 0.0
    %2636 = vmatprep.subr.mxu0 0.0
    %2637 = vmatpush1.msra.mxu0 0.0
    %2638 = vmatprep.subr.mxu0 0.0
    %2639 = vmatpush1.msra.mxu0 0.0
    %2640 = vmatprep.subr.mxu0 0.0
    %2641 = vmatpush1.msra.mxu0 0.0
    %2642 = vmatprep.subr.mxu0 0.0
    %2643 = vmatpush1.msra.mxu0 0.0
    %2644 = vmatprep.subr.mxu0 0.0
    %2645 = vmatpush1.msra.mxu0 0.0
    %2646 = vmatprep.subr.mxu0 0.0
    %2647 = vmatpush1.msra.mxu0 0.0
    %2648 = vmatprep.subr.mxu0 0.0
    %2649 = vmatpush1.msra.mxu0 0.0
    %2650 = vmatprep.subr.mxu0 0.0
    %2651 = vmatpush1.msra.mxu0 0.0
    %2652 = vmatprep.subr.mxu0 0.0
    %2653 = vmatpush1.msra.mxu0 0.0
    %2654 = vmatprep.subr.mxu0 0.0
    %2655 = vmatpush1.msra.mxu0 0.0
    %2656 = vmatprep.subr.mxu0 0.0
    %2657 = vmatpush1.msra.mxu0 0.0
    %2658 = vmatprep.subr.mxu0 0.0
    %2659 = vmatpush1.msra.mxu0 0.0
    %2660 = vmatprep.subr.mxu0 0.0
    %2661 = vmatpush1.msra.mxu0 0.0
    %2662 = vmatprep.subr.mxu0 0.0
    %2663 = vmatpush1.msra.mxu0 0.0
    %2664 = vmatprep.subr.mxu0 0.0
    %2665 = vmatpush1.msra.mxu0 0.0
    %2666 = vmatprep.subr.mxu0 0.0
    %2667 = vmatpush1.msra.mxu0 0.0
    %2668 = vmatprep.subr.mxu0 0.0
    %2669 = vmatpush1.msra.mxu0 0.0
    %2670 = vmatprep.subr.mxu0 0.0
    %2671 = vmatpush1.msra.mxu0 0.0
    %2672 = vmatprep.subr.mxu0 0.0
    %2673 = vmatpush1.msra.mxu0 0.0
    %2674 = vmatprep.subr.mxu0 0.0
    %2675 = vmatpush1.msra.mxu0 0.0
    %2676 = vmatprep.subr.mxu0 0.0
    %2677 = vmatpush1.msra.mxu0 0.0
    %2678 = vmatprep.subr.mxu0 0.0
    %2679 = vmatpush1.msra.mxu0 0.0
    %2680 = vmatprep.subr.mxu0 0.0
    %2681 = vmatpush1.msra.mxu0 0.0
    %2682 = vmatprep.subr.mxu0 0.0
    %2683 = vmatpush1.msra.mxu0 0.0
    %2684 = vmatprep.mubr.f32.mxu0 0.0
    %2685 = vmatmul.mubr.f32.gmra.mrb[0].mxu0 %v2547
    %v2686 = vpop.f32.mrb[0].mxu0
    %v2687 = vadd.f32 %v2545, %v2686
    %v2688 = vpop.f32.mrb[0].mxu0
    %v2689 = vadd.f32 %v2545, %v2688
    %2690 = vdwg.mxu0
    %2691 = vmatprep.subr.mxu0 %v2488
    %2692 = vmatpush1.msra.mxu0 %v2487
    %2693 = vmatprep.subr.mxu0 %v2501
    %2694 = vmatpush1.msra.mxu0 %v2500
    %2695 = vmatprep.subr.mxu0 %v2514
    %2696 = vmatpush1.msra.mxu0 %v2513
    %2697 = vmatprep.subr.mxu0 %v2527
    %2698 = vmatpush1.msra.mxu0 %v2526
    %2699 = vmatprep.subr.mxu0 0.0
    %2700 = vmatpush1.msra.mxu0 0.0
    %2701 = vmatprep.subr.mxu0 0.0
    %2702 = vmatpush1.msra.mxu0 0.0
    %2703 = vmatprep.subr.mxu0 0.0
    %2704 = vmatpush1.msra.mxu0 0.0
    %2705 = vmatprep.subr.mxu0 0.0
    %2706 = vmatpush1.msra.mxu0 0.0
    %2707 = vmatprep.subr.mxu0 0.0
    %2708 = vmatpush1.msra.mxu0 0.0
    %2709 = vmatprep.subr.mxu0 0.0
    %2710 = vmatpush1.msra.mxu0 0.0
    %2711 = vmatprep.subr.mxu0 0.0
    %2712 = vmatpush1.msra.mxu0 0.0
    %2713 = vmatprep.subr.mxu0 0.0
    %2714 = vmatpush1.msra.mxu0 0.0
    %2715 = vmatprep.subr.mxu0 0.0
    %2716 = vmatpush1.msra.mxu0 0.0
    %2717 = vmatprep.subr.mxu0 0.0
    %2718 = vmatpush1.msra.mxu0 0.0
    %2719 = vmatprep.subr.mxu0 0.0
    %2720 = vmatpush1.msra.mxu0 0.0
    %2721 = vmatprep.subr.mxu0 0.0
    %2722 = vmatpush1.msra.mxu0 0.0
    %2723 = vmatprep.subr.mxu0 0.0
    %2724 = vmatpush1.msra.mxu0 0.0
    %2725 = vmatprep.subr.mxu0 0.0
    %2726 = vmatpush1.msra.mxu0 0.0
    %2727 = vmatprep.subr.mxu0 0.0
    %2728 = vmatpush1.msra.mxu0 0.0
    %2729 = vmatprep.subr.mxu0 0.0
    %2730 = vmatpush1.msra.mxu0 0.0
    %2731 = vmatprep.subr.mxu0 0.0
    %2732 = vmatpush1.msra.mxu0 0.0
    %2733 = vmatprep.subr.mxu0 0.0
    %2734 = vmatpush1.msra.mxu0 0.0
    %2735 = vmatprep.subr.mxu0 0.0
    %2736 = vmatpush1.msra.mxu0 0.0
    %2737 = vmatprep.subr.mxu0 0.0
    %2738 = vmatpush1.msra.mxu0 0.0
    %2739 = vmatprep.subr.mxu0 0.0
    %2740 = vmatpush1.msra.mxu0 0.0
    %2741 = vmatprep.subr.mxu0 0.0
    %2742 = vmatpush1.msra.mxu0 0.0
    %2743 = vmatprep.subr.mxu0 0.0
    %2744 = vmatpush1.msra.mxu0 0.0
    %2745 = vmatprep.subr.mxu0 0.0
    %2746 = vmatpush1.msra.mxu0 0.0
    %2747 = vmatprep.subr.mxu0 0.0
    %2748 = vmatpush1.msra.mxu0 0.0
    %2749 = vmatprep.subr.mxu0 0.0
    %2750 = vmatpush1.msra.mxu0 0.0
    %2751 = vmatprep.subr.mxu0 0.0
    %2752 = vmatpush1.msra.mxu0 0.0
    %2753 = vmatprep.subr.mxu0 0.0
    %2754 = vmatpush1.msra.mxu0 0.0
    %2755 = vmatprep.mubr.f32.mxu0 0.0
    %2756 = vmatmul.mubr.f32.gmra.mrb[0].mxu0 %v2547
    %v2757 = vpop.f32.mrb[0].mxu0
    %v2758 = vadd.f32 %v2545, %v2757
    %v2759 = vpop.f32.mrb[0].mxu0
    %v2760 = vadd.f32 %v2545, %v2759
    %2761 = vdwg.mxu0
    %2762 = vmatprep.subr.mxu0 %v2490
    %2763 = vmatpush1.msra.mxu0 %v2489
    %2764 = vmatprep.subr.mxu0 %v2503
    %2765 = vmatpush1.msra.mxu0 %v2502
    %2766 = vmatprep.subr.mxu0 %v2516
    %2767 = vmatpush1.msra.mxu0 %v2515
    %2768 = vmatprep.subr.mxu0 %v2529
    %2769 = vmatpush1.msra.mxu0 %v2528
    %2770 = vmatprep.subr.mxu0 0.0
    %2771 = vmatpush1.msra.mxu0 0.0
    %2772 = vmatprep.subr.mxu0 0.0
    %2773 = vmatpush1.msra.mxu0 0.0
    %2774 = vmatprep.subr.mxu0 0.0
    %2775 = vmatpush1.msra.mxu0 0.0
    %2776 = vmatprep.subr.mxu0 0.0
    %2777 = vmatpush1.msra.mxu0 0.0
    %2778 = vmatprep.subr.mxu0 0.0
    %2779 = vmatpush1.msra.mxu0 0.0
    %2780 = vmatprep.subr.mxu0 0.0
    %2781 = vmatpush1.msra.mxu0 0.0
    %2782 = vmatprep.subr.mxu0 0.0
    %2783 = vmatpush1.msra.mxu0 0.0
    %2784 = vmatprep.subr.mxu0 0.0
    %2785 = vmatpush1.msra.mxu0 0.0
    %2786 = vmatprep.subr.mxu0 0.0
    %2787 = vmatpush1.msra.mxu0 0.0
    %2788 = vmatprep.subr.mxu0 0.0
    %2789 = vmatpush1.msra.mxu0 0.0
    %2790 = vmatprep.subr.mxu0 0.0
    %2791 = vmatpush1.msra.mxu0 0.0
    %2792 = vmatprep.subr.mxu0 0.0
    %2793 = vmatpush1.msra.mxu0 0.0
    %2794 = vmatprep.subr.mxu0 0.0
    %2795 = vmatpush1.msra.mxu0 0.0
    %2796 = vmatprep.subr.mxu0 0.0
    %2797 = vmatpush1.msra.mxu0 0.0
    %2798 = vmatprep.subr.mxu0 0.0
    %2799 = vmatpush1.msra.mxu0 0.0
    %2800 = vmatprep.subr.mxu0 0.0
    %2801 = vmatpush1.msra.mxu0 0.0
    %2802 = vmatprep.subr.mxu0 0.0
    %2803 = vmatpush1.msra.mxu0 0.0
    %2804 = vmatprep.subr.mxu0 0.0
    %2805 = vmatpush1.msra.mxu0 0.0
    %2806 = vmatprep.subr.mxu0 0.0
    %2807 = vmatpush1.msra.mxu0 0.0
    %2808 = vmatprep.subr.mxu0 0.0
    %2809 = vmatpush1.msra.mxu0 0.0
    %2810 = vmatprep.subr.mxu0 0.0
    %2811 = vmatpush1.msra.mxu0 0.0
    %2812 = vmatprep.subr.mxu0 0.0
    %2813 = vmatpush1.msra.mxu0 0.0
    %2814 = vmatprep.subr.mxu0 0.0
    %2815 = vmatpush1.msra.mxu0 0.0
    %2816 = vmatprep.subr.mxu0 0.0
    %2817 = vmatpush1.msra.mxu0 0.0
    %2818 = vmatprep.subr.mxu0 0.0
    %2819 = vmatpush1.msra.mxu0 0.0
    %2820 = vmatprep.subr.mxu0 0.0
    %2821 = vmatpush1.msra.mxu0 0.0
    %2822 = vmatprep.subr.mxu0 0.0
    %2823 = vmatpush1.msra.mxu0 0.0
    %2824 = vmatprep.subr.mxu0 0.0
    %2825 = vmatpush1.msra.mxu0 0.0
    %2826 = vmatprep.mubr.f32.mxu0 0.0
    %2827 = vmatmul.mubr.f32.gmra.mrb[0].mxu0 %v2547
    %v2828 = vpop.f32.mrb[0].mxu0
    %v2829 = vadd.f32 %v2545, %v2828
    %v2830 = vpop.f32.mrb[0].mxu0
    %v2831 = vadd.f32 %v2545, %v2830
    %2832 = vdwg.mxu0
    %2833 = vmatprep.subr.mxu0 %v2492
    %2834 = vmatpush1.msra.mxu0 %v2491
    %2835 = vmatprep.subr.mxu0 %v2505
    %2836 = vmatpush1.msra.mxu0 %v2504
    %2837 = vmatprep.subr.mxu0 %v2518
    %2838 = vmatpush1.msra.mxu0 %v2517
    %2839 = vmatprep.subr.mxu0 %v2531
    %2840 = vmatpush1.msra.mxu0 %v2530
    %2841 = vmatprep.subr.mxu0 0.0
    %2842 = vmatpush1.msra.mxu0 0.0
    %2843 = vmatprep.subr.mxu0 0.0
    %2844 = vmatpush1.msra.mxu0 0.0
    %2845 = vmatprep.subr.mxu0 0.0
    %2846 = vmatpush1.msra.mxu0 0.0
    %2847 = vmatprep.subr.mxu0 0.0
    %2848 = vmatpush1.msra.mxu0 0.0
    %2849 = vmatprep.subr.mxu0 0.0
    %2850 = vmatpush1.msra.mxu0 0.0
    %2851 = vmatprep.subr.mxu0 0.0
    %2852 = vmatpush1.msra.mxu0 0.0
    %2853 = vmatprep.subr.mxu0 0.0
    %2854 = vmatpush1.msra.mxu0 0.0
    %2855 = vmatprep.subr.mxu0 0.0
    %2856 = vmatpush1.msra.mxu0 0.0
    %2857 = vmatprep.subr.mxu0 0.0
    %2858 = vmatpush1.msra.mxu0 0.0
    %2859 = vmatprep.subr.mxu0 0.0
    %2860 = vmatpush1.msra.mxu0 0.0
    %2861 = vmatprep.subr.mxu0 0.0
    %2862 = vmatpush1.msra.mxu0 0.0
    %2863 = vmatprep.subr.mxu0 0.0
    %2864 = vmatpush1.msra.mxu0 0.0
    %2865 = vmatprep.subr.mxu0 0.0
    %2866 = vmatpush1.msra.mxu0 0.0
    %2867 = vmatprep.subr.mxu0 0.0
    %2868 = vmatpush1.msra.mxu0 0.0
    %2869 = vmatprep.subr.mxu0 0.0
    %2870 = vmatpush1.msra.mxu0 0.0
    %2871 = vmatprep.subr.mxu0 0.0
    %2872 = vmatpush1.msra.mxu0 0.0
    %2873 = vmatprep.subr.mxu0 0.0
    %2874 = vmatpush1.msra.mxu0 0.0
    %2875 = vmatprep.subr.mxu0 0.0
    %2876 = vmatpush1.msra.mxu0 0.0
    %2877 = vmatprep.subr.mxu0 0.0
    %2878 = vmatpush1.msra.mxu0 0.0
    %2879 = vmatprep.subr.mxu0 0.0
    %2880 = vmatpush1.msra.mxu0 0.0
    %2881 = vmatprep.subr.mxu0 0.0
    %2882 = vmatpush1.msra.mxu0 0.0
    %2883 = vmatprep.subr.mxu0 0.0
    %2884 = vmatpush1.msra.mxu0 0.0
    %2885 = vmatprep.subr.mxu0 0.0
    %2886 = vmatpush1.msra.mxu0 0.0
    %2887 = vmatprep.subr.mxu0 0.0
    %2888 = vmatpush1.msra.mxu0 0.0
    %2889 = vmatprep.subr.mxu0 0.0
    %2890 = vmatpush1.msra.mxu0 0.0
    %2891 = vmatprep.subr.mxu0 0.0
    %2892 = vmatpush1.msra.mxu0 0.0
    %2893 = vmatprep.subr.mxu0 0.0
    %2894 = vmatpush1.msra.mxu0 0.0
    %2895 = vmatprep.subr.mxu0 0.0
    %2896 = vmatpush1.msra.mxu0 0.0
    %2897 = vmatprep.mubr.f32.mxu0 0.0
    %2898 = vmatmul.mubr.f32.gmra.mrb[0].mxu0 %v2547
    %v2899 = vpop.f32.mrb[0].mxu0
    %v2900 = vadd.f32 %v2545, %v2899
    %v2901 = vpop.f32.mrb[0].mxu0
    %v2902 = vadd.f32 %v2545, %v2901
    %2903 = vdwg.mxu0
    %2904 = vmatprep.subr.mxu0 %v2494
    %2905 = vmatpush1.msra.mxu0 %v2493
    %2906 = vmatprep.subr.mxu0 %v2507
    %2907 = vmatpush1.msra.mxu0 %v2506
    %2908 = vmatprep.subr.mxu0 %v2520
    %2909 = vmatpush1.msra.mxu0 %v2519
    %2910 = vmatprep.subr.mxu0 %v2533
    %2911 = vmatpush1.msra.mxu0 %v2532
    %2912 = vmatprep.subr.mxu0 0.0
    %2913 = vmatpush1.msra.mxu0 0.0
    %2914 = vmatprep.subr.mxu0 0.0
    %2915 = vmatpush1.msra.mxu0 0.0
    %2916 = vmatprep.subr.mxu0 0.0
    %2917 = vmatpush1.msra.mxu0 0.0
    %2918 = vmatprep.subr.mxu0 0.0
    %2919 = vmatpush1.msra.mxu0 0.0
    %2920 = vmatprep.subr.mxu0 0.0
    %2921 = vmatpush1.msra.mxu0 0.0
    %2922 = vmatprep.subr.mxu0 0.0
    %2923 = vmatpush1.msra.mxu0 0.0
    %2924 = vmatprep.subr.mxu0 0.0
    %2925 = vmatpush1.msra.mxu0 0.0
    %2926 = vmatprep.subr.mxu0 0.0
    %2927 = vmatpush1.msra.mxu0 0.0
    %2928 = vmatprep.subr.mxu0 0.0
    %2929 = vmatpush1.msra.mxu0 0.0
    %2930 = vmatprep.subr.mxu0 0.0
    %2931 = vmatpush1.msra.mxu0 0.0
    %2932 = vmatprep.subr.mxu0 0.0
    %2933 = vmatpush1.msra.mxu0 0.0
    %2934 = vmatprep.subr.mxu0 0.0
    %2935 = vmatpush1.msra.mxu0 0.0
    %2936 = vmatprep.subr.mxu0 0.0
    %2937 = vmatpush1.msra.mxu0 0.0
    %2938 = vmatprep.subr.mxu0 0.0
    %2939 = vmatpush1.msra.mxu0 0.0
    %2940 = vmatprep.subr.mxu0 0.0
    %2941 = vmatpush1.msra.mxu0 0.0
    %2942 = vmatprep.subr.mxu0 0.0
    %2943 = vmatpush1.msra.mxu0 0.0
    %2944 = vmatprep.subr.mxu0 0.0
    %2945 = vmatpush1.msra.mxu0 0.0
    %2946 = vmatprep.subr.mxu0 0.0
    %2947 = vmatpush1.msra.mxu0 0.0
    %2948 = vmatprep.subr.mxu0 0.0
    %2949 = vmatpush1.msra.mxu0 0.0
    %2950 = vmatprep.subr.mxu0 0.0
    %2951 = vmatpush1.msra.mxu0 0.0
    %2952 = vmatprep.subr.mxu0 0.0
    %2953 = vmatpush1.msra.mxu0 0.0
    %2954 = vmatprep.subr.mxu0 0.0
    %2955 = vmatpush1.msra.mxu0 0.0
    %2956 = vmatprep.subr.mxu0 0.0
    %2957 = vmatpush1.msra.mxu0 0.0
    %2958 = vmatprep.subr.mxu0 0.0
    %2959 = vmatpush1.msra.mxu0 0.0
    %2960 = vmatprep.subr.mxu0 0.0
    %2961 = vmatpush1.msra.mxu0 0.0
    %2962 = vmatprep.subr.mxu0 0.0
    %2963 = vmatpush1.msra.mxu0 0.0
    %2964 = vmatprep.subr.mxu0 0.0
    %2965 = vmatpush1.msra.mxu0 0.0
    %2966 = vmatprep.subr.mxu0 0.0
    %2967 = vmatpush1.msra.mxu0 0.0
    %2968 = vmatprep.mubr.f32.mxu0 0.0
    %2969 = vmatmul.mubr.f32.gmra.mrb[0].mxu0 %v2547
    %v2970 = vpop.f32.mrb[0].mxu0
    %v2971 = vadd.f32 %v2545, %v2970
    %v2972 = vpop.f32.mrb[0].mxu0
    %v2973 = vadd.f32 %v2545, %v2972
    %2974 = vdwg.mxu0
    %2975 = vmatprep.subr.mxu0 0.0
    %2976 = vmatpush1.msra.mxu0 %v2495
    %2977 = vmatprep.subr.mxu0 0.0
    %2978 = vmatpush1.msra.mxu0 %v2508
    %2979 = vmatprep.subr.mxu0 0.0
    %2980 = vmatpush1.msra.mxu0 %v2521
    %2981 = vmatprep.subr.mxu0 0.0
    %2982 = vmatpush1.msra.mxu0 %v2534
    %2983 = vmatprep.subr.mxu0 0.0
    %2984 = vmatpush1.msra.mxu0 0.0
    %2985 = vmatprep.subr.mxu0 0.0
    %2986 = vmatpush1.msra.mxu0 0.0
    %2987 = vmatprep.subr.mxu0 0.0
    %2988 = vmatpush1.msra.mxu0 0.0
    %2989 = vmatprep.subr.mxu0 0.0
    %2990 = vmatpush1.msra.mxu0 0.0
    %2991 = vmatprep.subr.mxu0 0.0
    %2992 = vmatpush1.msra.mxu0 0.0
    %2993 = vmatprep.subr.mxu0 0.0
    %2994 = vmatpush1.msra.mxu0 0.0
    %2995 = vmatprep.subr.mxu0 0.0
    %2996 = vmatpush1.msra.mxu0 0.0
    %2997 = vmatprep.subr.mxu0 0.0
    %2998 = vmatpush1.msra.mxu0 0.0
    %2999 = vmatprep.subr.mxu0 0.0
    %3000 = vmatpush1.msra.mxu0 0.0
    %3001 = vmatprep.subr.mxu0 0.0
    %3002 = vmatpush1.msra.mxu0 0.0
    %3003 = vmatprep.subr.mxu0 0.0
    %3004 = vmatpush1.msra.mxu0 0.0
    %3005 = vmatprep.subr.mxu0 0.0
    %3006 = vmatpush1.msra.mxu0 0.0
    %3007 = vmatprep.subr.mxu0 0.0
    %3008 = vmatpush1.msra.mxu0 0.0
    %3009 = vmatprep.subr.mxu0 0.0
    %3010 = vmatpush1.msra.mxu0 0.0
    %3011 = vmatprep.subr.mxu0 0.0
    %3012 = vmatpush1.msra.mxu0 0.0
    %3013 = vmatprep.subr.mxu0 0.0
    %3014 = vmatpush1.msra.mxu0 0.0
    %3015 = vmatprep.subr.mxu0 0.0
    %3016 = vmatpush1.msra.mxu0 0.0
    %3017 = vmatprep.subr.mxu0 0.0
    %3018 = vmatpush1.msra.mxu0 0.0
    %3019 = vmatprep.subr.mxu0 0.0
    %3020 = vmatpush1.msra.mxu0 0.0
    %3021 = vmatprep.subr.mxu0 0.0
    %3022 = vmatpush1.msra.mxu0 0.0
    %3023 = vmatprep.subr.mxu0 0.0
    %3024 = vmatpush1.msra.mxu0 0.0
    %3025 = vmatprep.subr.mxu0 0.0
    %3026 = vmatpush1.msra.mxu0 0.0
    %3027 = vmatprep.subr.mxu0 0.0
    %3028 = vmatpush1.msra.mxu0 0.0
    %3029 = vmatprep.subr.mxu0 0.0
    %3030 = vmatpush1.msra.mxu0 0.0
    %3031 = vmatprep.subr.mxu0 0.0
    %3032 = vmatpush1.msra.mxu0 0.0
    %3033 = vmatprep.subr.mxu0 0.0
    %3034 = vmatpush1.msra.mxu0 0.0
    %3035 = vmatprep.subr.mxu0 0.0
    %3036 = vmatpush1.msra.mxu0 0.0
    %3037 = vmatprep.subr.mxu0 0.0
    %3038 = vmatpush1.msra.mxu0 0.0
    %3039 = vmatprep.mubr.f32.mxu0 0.0
    %3040 = vmatmul.mubr.f32.gmra.mrb[0].mxu0 %v2547
    %v3041 = vpop.f32.mrb[0].mxu0
    %v3042 = vadd.f32 %v2545, %v3041
    %v3043 = vpop.f32.mrb[0].mxu0
    %3044 = vdwg.mxu0
    %v3045 = vld [vmem:[#allocation3] sm:$0xff]
    %v3046 = vld [vmem:[#allocation3 + $0x8] sm:$0x1f]
    %v3049 = vlaneseq
    %v3050 = vshrl.u32 %v3049, 7
    %v3051 = vsub.s32 0, %v3050
    %v3052 = vrot.slane %v3045, %v3051
    %v3053 = vlaneseq
    %v3054 = vshrl.u32 %v3053, 7
    %v3055 = vsub.s32 1, %v3054
    %v3056 = vrot.slane %v3045, %v3055
    %v3057 = vlaneseq
    %v3058 = vshrl.u32 %v3057, 7
    %v3059 = vsub.s32 2, %v3058
    %v3060 = vrot.slane %v3045, %v3059
    %v3061 = vlaneseq
    %v3062 = vshrl.u32 %v3061, 7
    %v3063 = vsub.s32 3, %v3062
    %v3064 = vrot.slane %v3045, %v3063
    %v3065 = vlaneseq
    %v3066 = vshrl.u32 %v3065, 7
    %v3067 = vsub.s32 4, %v3066
    %v3068 = vrot.slane %v3045, %v3067
    %v3069 = vlaneseq
    %v3070 = vshrl.u32 %v3069, 7
    %v3071 = vsub.s32 5, %v3070
    %v3072 = vrot.slane %v3045, %v3071
    %v3073 = vlaneseq
    %v3074 = vshrl.u32 %v3073, 7
    %v3075 = vsub.s32 6, %v3074
    %v3076 = vrot.slane %v3045, %v3075
    %v3077 = vlaneseq
    %v3078 = vshrl.u32 %v3077, 7
    %v3079 = vsub.s32 7, %v3078
    %v3080 = vrot.slane %v3045, %v3079
    %v3081 = vlaneseq
    %v3082 = vshrl.u32 %v3081, 7
    %v3083 = vsub.s32 0, %v3082
    %v3084 = vrot.slane %v3046, %v3083
    %v3085 = vlaneseq
    %v3086 = vshrl.u32 %v3085, 7
    %v3087 = vsub.s32 1, %v3086
    %v3088 = vrot.slane %v3046, %v3087
    %v3089 = vlaneseq
    %v3090 = vshrl.u32 %v3089, 7
    %v3091 = vsub.s32 2, %v3090
    %v3092 = vrot.slane %v3046, %v3091
    %v3093 = vlaneseq
    %v3094 = vshrl.u32 %v3093, 7
    %v3095 = vsub.s32 3, %v3094
    %v3096 = vrot.slane %v3046, %v3095
    %v3097 = vlaneseq
    %v3098 = vshrl.u32 %v3097, 7
    %v3099 = vsub.s32 4, %v3098
    %v3100 = vrot.slane %v3046, %v3099
    %v3114 = vmul.f32 %v2616, %v3052
    %v3115 = vmul.f32 %v2618, %v3056
    %v3116 = vmul.f32 %v2687, %v3060
    %v3117 = vmul.f32 %v2689, %v3064
    %v3118 = vmul.f32 %v2758, %v3068
    %v3119 = vmul.f32 %v2760, %v3072
    %v3120 = vmul.f32 %v2829, %v3076
    %v3121 = vmul.f32 %v2831, %v3080
    %v3122 = vmul.f32 %v2900, %v3084
    %v3123 = vmul.f32 %v2902, %v3088
    %v3124 = vmul.f32 %v2971, %v3092
    %v3125 = vmul.f32 %v2973, %v3096
    %v3126 = vmul.f32 %v3042, %v3100
    %v3127 = vadd.f32 %v3114, %v3115
    %v3128 = vadd.f32 %v3127, %v3116
    %v3129 = vadd.f32 %v3128, %v3117
    %v3130 = vadd.f32 %v3129, %v3118
    %v3131 = vadd.f32 %v3130, %v3119
    %v3132 = vadd.f32 %v3131, %v3120
    %v3133 = vadd.f32 %v3132, %v3121
    %v3134 = vadd.f32 %v3133, %v3122
    %v3135 = vadd.f32 %v3134, %v3123
    %v3136 = vadd.f32 %v3135, %v3124
    %v3137 = vadd.f32 %v3136, %v3125
    %v3138 = vadd.f32 %v3137, %v3126
    %v3139 = vmul.f32 %v3138, 0.07692308
    %3140 = vst [vmem:[#allocation9] sm:$0x1] %v3139
    // Predicated region
    $region54: #{tpu_custom_call.1} parent=1 // pred_check
      _
    $region55: #{tpu_custom_call.1} parent=1 // pred_check_branch
      %3142 = sbr.rel (0) target = $region57
    $region56: #{tpu_custom_call.1} parent=1 // pred_region
      %s3144 = ssub.s32 16, 16
      %3145 = vsyncadd [#allocation5], %s3144
      %s3147 = sshll.u32 [#allocation9], 4
      %s3148 = int_to_ptr.vmem [resolvable:$true] %s3147
      %3150 = dma.vmem_to_hbm [thread:$0]  %s3148, 16, %s10, [#allocation5]
    $region57: #{tpu_custom_call.1} parent=1 // pred_fallthru
      _
    // Predicated region
    $region58: #{tpu_custom_call.1} parent=1 // pred_check
      _
    $region59: #{tpu_custom_call.1} parent=1 // pred_check_branch
      %3152 = sbr.rel (0) target = $region61
    $region60: #{tpu_custom_call.1} parent=1 // pred_region
      %3153 = dma.done [#allocation5], 16
    $region61: #{tpu_custom_call.1} parent=1 // pred_fallthru
      _
    %3154 = vsyncpa [#allocation4], 1
    %3155 = vsyncpa [#allocation7], 1
    %3156 = vsyncpa [#allocation5], 1

</llo_original>
